<compile_context>
chip_gen: v7x
topology: tpu7x:2x2x1
jax: 0.10.0
libtpu: 0.0.40
codegen_flags: <defaults>
</compile_context>

<pallas_src>
import functools

import jax
import jax.numpy as jnp
from jax import lax
from jax.experimental import pallas as pl
from jax.experimental.pallas import tpu as pltpu

EPS = 1e-3
KH = 3          # kernel height (kernel width is 1)


def conv_bn_kernel(x_ref, w_ref, gamma_ref, beta_ref, out_ref, *, W):
    # x_ref:     (Cin, HW)        input, channel-major (== NCHW memory order, N=1)
    # w_ref:     (KH*Cout, Cin)   tap-stacked weights: row kh*Cout+co = weight[co,:,kh,0]
    # gamma_ref: (Cout, 1)
    # beta_ref:  (Cout, 1)
    # out_ref:   (Cout, HW)       channel-major output (== NCHW memory order)
    Cin, HW = x_ref.shape
    Cout = out_ref.shape[0]

    # All three kernel-height taps as ONE channel-mixing MXU matmul:
    #   p[kh*Cout + co, hw] = sum_ci weight[co, ci, kh] * x[ci, hw]
    p = jnp.dot(w_ref[...], x_ref[...], preferred_element_type=jnp.float32)  # (KH*Cout, HW)

    # Spatial row shift (+ zero H-padding) for taps 0 and 2, done on the MXU
    # with tiny constant 0/1 shift matrices — no unaligned lane shifts, no
    # padded scratch, no transposes.  Shift by exactly W flat positions == one
    # image row, so rows never mix across the W axis.
    row = lax.broadcasted_iota(jnp.int32, (HW, HW), 0)
    col = lax.broadcasted_iota(jnp.int32, (HW, HW), 1)
    shift_up = (row == col - W).astype(jnp.float32)   # tap kh=0 reads input row h-1
    shift_dn = (row == col + W).astype(jnp.float32)   # tap kh=2 reads input row h+1

    acc = p[Cout:2 * Cout, :]                                               # middle tap
    acc = acc + jnp.dot(p[0:Cout, :], shift_up, preferred_element_type=jnp.float32)
    acc = acc + jnp.dot(p[2 * Cout:3 * Cout, :], shift_dn, preferred_element_type=jnp.float32)

    # BatchNorm, training mode: biased batch stats per channel over N*H*W
    # (N = 1).  Single pass: sum + sum of squares, folded scale/bias, all f32.
    inv_n = 1.0 / HW
    s1 = jnp.sum(acc, axis=1, keepdims=True)                                # (Cout, 1)
    s2 = jnp.sum(acc * acc, axis=1, keepdims=True)                          # (Cout, 1)
    mean = s1 * inv_n
    var = s2 * inv_n - mean * mean
    scale = gamma_ref[...] * lax.rsqrt(var + EPS)
    bias = beta_ref[...] - mean * scale
    out_ref[...] = (acc * scale + bias).astype(out_ref.dtype)


def prepare_weight(weight):
    """One-time parameter reformat (NOT on the hot path).

    (Cout, Cin, KH, 1) -> (KH*Cout, Cin), kh-major stacking of the taps.
    """
    Cout, Cin, kh, kw = weight.shape
    assert kh == KH and kw == 1
    return jnp.transpose(weight[:, :, :, 0], (2, 0, 1)).reshape(KH * Cout, Cin)


@jax.jit
def conv2d_batchnorm(x_nchw, w_stack, gamma, beta):
    """x_nchw: (1, Cin, H, W); w_stack: prepare_weight(weight); gamma/beta: (Cout,)."""
    N, Cin, H, W = x_nchw.shape
    HW = H * W
    Cout = gamma.shape[0]
    assert N == 1, "flattened (h*W+w) row-shift trick assumes N == 1 (module uses N=1)"
    assert w_stack.shape == (KH * Cout, Cin)

    # All wrapper reshapes below are layout-preserving (free) — no extra HLO work.
    x2 = x_nchw.reshape(Cin, HW)
    g2 = gamma.reshape(Cout, 1)
    b2 = beta.reshape(Cout, 1)

    kernel = functools.partial(conv_bn_kernel, W=W)

    out2 = pl.pallas_call(
        kernel,
        out_shape=jax.ShapeDtypeStruct((Cout, HW), x_nchw.dtype),
        grid=(1,),
        in_specs=[
            pl.BlockSpec((Cin, HW), lambda i: (0, 0)),          # x, resident in VMEM
            pl.BlockSpec((KH * Cout, Cin), lambda i: (0, 0)),   # full weight (dominant DMA)
            pl.BlockSpec((Cout, 1), lambda i: (0, 0)),          # gamma
            pl.BlockSpec((Cout, 1), lambda i: (0, 0)),          # beta
        ],
        out_specs=pl.BlockSpec((Cout, HW), lambda i: (0, 0)),
        compiler_params=pltpu.CompilerParams(
            dimension_semantics=("arbitrary",),
        ),
    )(x2, w_stack, g2, b2)

    # (Cout, HW) is already NCHW memory order for N == 1: free reshape.
    return out2.reshape(N, Cout, H, W)


def _reference(x_nchw, weight, gamma, beta):
    """Pure-JAX reference: conv2d (3,1), pad (1,0), no bias; BN with batch stats."""
    conv = lax.conv_general_dilated(
        x_nchw, weight, window_strides=(1, 1), padding=((1, 1), (0, 0)),
        dimension_numbers=("NCHW", "OIHW", "NCHW"))
    mean = jnp.mean(conv, axis=(0, 2, 3), keepdims=True)
    var = jnp.mean((conv - mean) ** 2, axis=(0, 2, 3), keepdims=True)
    g = gamma.reshape(1, -1, 1, 1)
    b = beta.reshape(1, -1, 1, 1)
    return (conv - mean) * lax.rsqrt(var + EPS) * g + b


if __name__ == "__main__":
    key = jax.random.PRNGKey(0)
    k_x, k_w, k_g, k_b = jax.random.split(key, 4)

    # Shapes implied by the module's forward: x311 is (1, 384, 5, 5).
    N, C, H, W = 1, 384, 5, 5
    x = jax.random.normal(k_x, (N, C, H, W), jnp.float32)
    weight = jax.random.normal(k_w, (C, C, KH, 1), jnp.float32) * 0.05
    gamma = 1.0 + 0.1 * jax.random.normal(k_g, (C,), jnp.float32)
    beta = 0.1 * jax.random.normal(k_b, (C,), jnp.float32)

    # One-time weight reformat, off the hot path.
    w_stack = jax.block_until_ready(prepare_weight(weight))

    out = jax.block_until_ready(conv2d_batchnorm(x, w_stack, gamma, beta))
    ref = jax.block_until_ready(_reference(x, weight, gamma, beta))

    assert out.shape == (N, C, H, W)
    assert jnp.allclose(out, ref, atol=1e-3, rtol=1e-3), "mismatch vs reference"

    print("KERNEL_OK")
</pallas_src>

<mosaic_0001>
module attributes {stable_mosaic.version = 11 : i64} {
  func.func @conv_bn_kernel(%arg0: i32, %arg1: memref<384x25xf32, #tpu.memory_space<vmem>>, %arg2: memref<1152x384xf32, #tpu.memory_space<vmem>>, %arg3: memref<384x1xf32, #tpu.memory_space<vmem>>, %arg4: memref<384x1xf32, #tpu.memory_space<vmem>>, %arg5: memref<384x25xf32, #tpu.memory_space<vmem>>) attributes {dimension_semantics = [#tpu.dimension_semantics<arbitrary>], iteration_bounds = array<i64: 1>, scalar_prefetch = 0 : i64, scratch_operands = 0 : i64, tpu.core_type = #tpu.core_type<tc>, window_params = [{pipeline_mode = #tpu.pipeline_mode<synchronous>, transform_indices = @transform_0, window_bounds = array<i64: 384, 25>}, {pipeline_mode = #tpu.pipeline_mode<synchronous>, transform_indices = @transform_1, window_bounds = array<i64: 1152, 384>}, {pipeline_mode = #tpu.pipeline_mode<synchronous>, transform_indices = @transform_2, window_bounds = array<i64: 384, 1>}, {pipeline_mode = #tpu.pipeline_mode<synchronous>, transform_indices = @transform_3, window_bounds = array<i64: 384, 1>}, {pipeline_mode = #tpu.pipeline_mode<synchronous>, transform_indices = @transform_4, window_bounds = array<i64: 384, 25>}]} {
    %c0 = arith.constant 0 : index
    %c0_0 = arith.constant 0 : index
    %0 = vector.load %arg2[%c0, %c0_0] : memref<1152x384xf32, #tpu.memory_space<vmem>>, vector<1152x384xf32>
    %c0_1 = arith.constant 0 : index
    %c0_2 = arith.constant 0 : index
    %1 = vector.load %arg1[%c0_1, %c0_2] : memref<384x25xf32, #tpu.memory_space<vmem>>, vector<384x25xf32>
    %cst = arith.constant dense<0.000000e+00> : vector<1152x25xf32>
    %2 = tpu.matmul %0, %1, %cst {dimension_numbers = #tpu.dot_dimension_numbers<[1], [0], [0], [1], [0, 0, 1, 1], [], []>} : vector<1152x384xf32>, vector<384x25xf32>, vector<1152x25xf32> -> vector<1152x25xf32>
    %3 = tpu.iota {dimensions = array<i32: 0>} : vector<25x25xi32>
    %4 = tpu.iota {dimensions = array<i32: 1>} : vector<25x25xi32>
    %c5_i32 = arith.constant 5 : i32
    %5 = vector.broadcast %c5_i32 : i32 to vector<25x25xi32>
    %6 = arith.subi %4, %5 : vector<25x25xi32>
    %7 = arith.cmpi eq, %3, %6 : vector<25x25xi32>
    %8 = arith.extui %7 : vector<25x25xi1> to vector<25x25xi32>
    %9 = arith.sitofp %8 : vector<25x25xi32> to vector<25x25xf32>
    %c5_i32_3 = arith.constant 5 : i32
    %10 = vector.broadcast %c5_i32_3 : i32 to vector<25x25xi32>
    %11 = arith.addi %4, %10 : vector<25x25xi32>
    %12 = arith.cmpi eq, %3, %11 : vector<25x25xi32>
    %13 = arith.extui %12 : vector<25x25xi1> to vector<25x25xi32>
    %14 = arith.sitofp %13 : vector<25x25xi32> to vector<25x25xf32>
    %15 = vector.extract_strided_slice %2 {offsets = [384, 0], sizes = [384, 25], strides = [1, 1]} : vector<1152x25xf32> to vector<384x25xf32>
    %16 = vector.extract_strided_slice %2 {offsets = [0, 0], sizes = [384, 25], strides = [1, 1]} : vector<1152x25xf32> to vector<384x25xf32>
    %cst_4 = arith.constant dense<0.000000e+00> : vector<384x25xf32>
    %17 = tpu.matmul %16, %9, %cst_4 {dimension_numbers = #tpu.dot_dimension_numbers<[1], [0], [0], [1], [0, 0, 1, 1], [], []>} : vector<384x25xf32>, vector<25x25xf32>, vector<384x25xf32> -> vector<384x25xf32>
    %18 = arith.addf %15, %17 : vector<384x25xf32>
    %19 = vector.extract_strided_slice %2 {offsets = [768, 0], sizes = [384, 25], strides = [1, 1]} : vector<1152x25xf32> to vector<384x25xf32>
    %cst_5 = arith.constant dense<0.000000e+00> : vector<384x25xf32>
    %20 = tpu.matmul %19, %14, %cst_5 {dimension_numbers = #tpu.dot_dimension_numbers<[1], [0], [0], [1], [0, 0, 1, 1], [], []>} : vector<384x25xf32>, vector<25x25xf32>, vector<384x25xf32> -> vector<384x25xf32>
    %21 = arith.addf %18, %20 : vector<384x25xf32>
    %cst_6 = arith.constant dense<0.000000e+00> : vector<384xf32>
    %22 = vector.multi_reduction <add>, %21, %cst_6 [1] : vector<384x25xf32> to vector<384xf32>
    %23 = vector.shape_cast %22 : vector<384xf32> to vector<384x1xf32>
    %24 = arith.mulf %21, %21 : vector<384x25xf32>
    %cst_7 = arith.constant dense<0.000000e+00> : vector<384xf32>
    %25 = vector.multi_reduction <add>, %24, %cst_7 [1] : vector<384x25xf32> to vector<384xf32>
    %26 = vector.shape_cast %25 : vector<384xf32> to vector<384x1xf32>
    %cst_8 = arith.constant 4.000000e-02 : f32
    %27 = vector.broadcast %cst_8 : f32 to vector<384x1xf32>
    %28 = arith.mulf %23, %27 : vector<384x1xf32>
    %cst_9 = arith.constant 4.000000e-02 : f32
    %29 = vector.broadcast %cst_9 : f32 to vector<384x1xf32>
    %30 = arith.mulf %26, %29 : vector<384x1xf32>
    %31 = arith.mulf %28, %28 : vector<384x1xf32>
    %32 = arith.subf %30, %31 : vector<384x1xf32>
    %c0_10 = arith.constant 0 : index
    %c0_11 = arith.constant 0 : index
    %33 = vector.load %arg3[%c0_10, %c0_11] : memref<384x1xf32, #tpu.memory_space<vmem>>, vector<384x1xf32>
    %cst_12 = arith.constant 1.000000e-03 : f32
    %34 = vector.broadcast %cst_12 : f32 to vector<384x1xf32>
    %35 = arith.addf %32, %34 : vector<384x1xf32>
    %36 = math.rsqrt %35 : vector<384x1xf32>
    %37 = arith.mulf %33, %36 : vector<384x1xf32>
    %c0_13 = arith.constant 0 : index
    %c0_14 = arith.constant 0 : index
    %38 = vector.load %arg4[%c0_13, %c0_14] : memref<384x1xf32, #tpu.memory_space<vmem>>, vector<384x1xf32>
    %39 = arith.mulf %28, %37 : vector<384x1xf32>
    %40 = arith.subf %38, %39 : vector<384x1xf32>
    %41 = vector.broadcast %37 : vector<384x1xf32> to vector<384x25xf32>
    %42 = arith.mulf %21, %41 : vector<384x25xf32>
    %43 = vector.broadcast %40 : vector<384x1xf32> to vector<384x25xf32>
    %44 = arith.addf %42, %43 : vector<384x25xf32>
    %c0_15 = arith.constant 0 : index
    %c0_16 = arith.constant 0 : index
    %45 = vector.load %arg5[%c0_15, %c0_16] : memref<384x25xf32, #tpu.memory_space<vmem>>, vector<384x25xf32>
    tpu.vector_store %arg5[%c0_15, %c0_16], %44 {strides = array<i32>} : memref<384x25xf32, #tpu.memory_space<vmem>>, vector<384x25xf32>,
    return
  }
  func.func @transform_0(%arg0: i32) -> (i32, i32) {
    %c0_i32 = arith.constant 0 : i32
    %c0_i32_0 = arith.constant 0 : i32
    %c0_i32_1 = arith.constant 0 : i32
    return %c0_i32, %c0_i32_0 : i32, i32
  }
  func.func @transform_1(%arg0: i32) -> (i32, i32) {
    %c0_i32 = arith.constant 0 : i32
    %c0_i32_0 = arith.constant 0 : i32
    %c0_i32_1 = arith.constant 0 : i32
    return %c0_i32, %c0_i32_0 : i32, i32
  }
  func.func @transform_2(%arg0: i32) -> (i32, i32) {
    %c0_i32 = arith.constant 0 : i32
    %c0_i32_0 = arith.constant 0 : i32
    %c0_i32_1 = arith.constant 0 : i32
    return %c0_i32, %c0_i32_0 : i32, i32
  }
  func.func @transform_3(%arg0: i32) -> (i32, i32) {
    %c0_i32 = arith.constant 0 : i32
    %c0_i32_0 = arith.constant 0 : i32
    %c0_i32_1 = arith.constant 0 : i32
    return %c0_i32, %c0_i32_0 : i32, i32
  }
  func.func @transform_4(%arg0: i32) -> (i32, i32) {
    %c0_i32 = arith.constant 0 : i32
    %c0_i32_0 = arith.constant 0 : i32
    %c0_i32_1 = arith.constant 0 : i32
    return %c0_i32, %c0_i32_0 : i32, i32
  }
}

</mosaic_0001>

<llo_original>
// kernel: conv2d_batchnorm.1
$region0: #{conv2d_batchnorm.1}
  #allocation0 [shape = 'u32[]', space=smem, size = 0x4, offset = 0x4, fixed_abs, tag = 'smem constant byte address 0x4 - core index']
  #allocation1 [shape = 'u32[144,128]{1,0:T(1,128)}', space=vmem, size = 0x12000, scoped, tag = 'internal scratch']
  %s0 = inlined_call_operand.vmem [shape: f32[384,25], index: 0, kind: input, shape index: {}]
  %s1 = inlined_call_operand.hbm [shape: f32[1152,384], index: 1, kind: input, shape index: {}]
  %s2 = inlined_call_operand.vmem [shape: f32[384,1], index: 2, kind: input, shape index: {}]
  %s3 = inlined_call_operand.vmem [shape: f32[384,1], index: 3, kind: input, shape index: {}]
  %s4 = inlined_call_operand.vmem [shape: f32[384,25], index: 4, kind: output, shape index: {}]
  %s5 = sld [smem:[#allocation0]]
  $region30: #{conv2d_batchnorm.1} parent=0
    _
  %s7 = ssub.s32 1, %s5
  %s8 = scalar_select 0, %s7, %s5
  $region1: #{conv2d_batchnorm.1} parent=0
    #allocation2 [shape = 'u8[1769472]{0}', space=vmem, size = 0x1b0000, scoped, tag = 'input window, operand 1, single buffered']
    #allocation3 [shape = 's32[1]{0}', space=sflag, size = 0x4, scoped, tag = 'scoped memory for conv2d_batchnorm.1']
    %9 = vsyncpa [#allocation3], 0
    // Predicated region
    $region2: #{conv2d_batchnorm.1} parent=1 // pred_check
      _
    $region3: #{conv2d_batchnorm.1} parent=1 // pred_check_branch
      %11 = sbr.rel (0) target = $region5
    $region4: #{conv2d_batchnorm.1} parent=1 // pred_region
      _
    $region5: #{conv2d_batchnorm.1} parent=1 // pred_fallthru
      _
    // Predicated region
    $region6: #{conv2d_batchnorm.1} parent=1 // pred_check
      _
    $region7: #{conv2d_batchnorm.1} parent=1 // pred_check_branch
      %13 = sbr.rel (0) target = $region9
    $region8: #{conv2d_batchnorm.1} parent=1 // pred_region
      %s15 = ssub.s32 55296, 55296
      %16 = vsyncadd [#allocation3], %s15
      %s17 = sshll.u32 [#allocation2], 4
      %s18 = int_to_ptr.vmem [resolvable:$true] %s17
      %23 = dma.hbm_to_vmem [thread:$0]  %s1, 55296, %s18, [#allocation3], 384, 384, 24
    $region9: #{conv2d_batchnorm.1} parent=1 // pred_fallthru
      _
    // Predicated region
    $region10: #{conv2d_batchnorm.1} parent=1 // pred_check
      _
    $region11: #{conv2d_batchnorm.1} parent=1 // pred_check_branch
      %25 = sbr.rel (0) target = $region13
    $region12: #{conv2d_batchnorm.1} parent=1 // pred_region
      _
    $region13: #{conv2d_batchnorm.1} parent=1 // pred_fallthru
      _
    // Predicated region
    $region14: #{conv2d_batchnorm.1} parent=1 // pred_check
      _
    $region15: #{conv2d_batchnorm.1} parent=1 // pred_check_branch
      %27 = sbr.rel (0) target = $region17
    $region16: #{conv2d_batchnorm.1} parent=1 // pred_region
      _
    $region17: #{conv2d_batchnorm.1} parent=1 // pred_fallthru
      _
    // Predicated region
    $region18: #{conv2d_batchnorm.1} parent=1 // pred_check
      _
    $region19: #{conv2d_batchnorm.1} parent=1 // pred_check_branch
      %29 = sbr.rel (0) target = $region21
    $region20: #{conv2d_batchnorm.1} parent=1 // pred_region
      %30 = dma.done [#allocation3], 55296
    $region21: #{conv2d_batchnorm.1} parent=1 // pred_fallthru
      _
    %v31 = vld [vmem:[#allocation2] sm:$0xff]
    %v32 = vld [vmem:[#allocation2 + $0x8] sm:$0xff]
    %v33 = vld [vmem:[#allocation2 + $0x10] sm:$0xff]
    %v34 = vld [vmem:[#allocation2 + $0x18] sm:$0xff]
    %v35 = vld [vmem:[#allocation2 + $0x20] sm:$0xff]
    %v36 = vld [vmem:[#allocation2 + $0x28] sm:$0xff]
    %v37 = vld [vmem:[#allocation2 + $0x30] sm:$0xff]
    %v38 = vld [vmem:[#allocation2 + $0x38] sm:$0xff]
    %v39 = vld [vmem:[#allocation2 + $0x40] sm:$0xff]
    %v40 = vld [vmem:[#allocation2 + $0x48] sm:$0xff]
    %v41 = vld [vmem:[#allocation2 + $0x50] sm:$0xff]
    %v42 = vld [vmem:[#allocation2 + $0x58] sm:$0xff]
    %v43 = vld [vmem:[#allocation2 + $0x60] sm:$0xff]
    %v44 = vld [vmem:[#allocation2 + $0x68] sm:$0xff]
    %v45 = vld [vmem:[#allocation2 + $0x70] sm:$0xff]
    %v46 = vld [vmem:[#allocation2 + $0x78] sm:$0xff]
    %v47 = vld [vmem:[#allocation2 + $0x80] sm:$0xff]
    %v48 = vld [vmem:[#allocation2 + $0x88] sm:$0xff]
    %v49 = vld [vmem:[#allocation2 + $0x90] sm:$0xff]
    %v50 = vld [vmem:[#allocation2 + $0x98] sm:$0xff]
    %v51 = vld [vmem:[#allocation2 + $0xa0] sm:$0xff]
    %v52 = vld [vmem:[#allocation2 + $0xa8] sm:$0xff]
    %v53 = vld [vmem:[#allocation2 + $0xb0] sm:$0xff]
    %v54 = vld [vmem:[#allocation2 + $0xb8] sm:$0xff]
    %v55 = vld [vmem:[#allocation2 + $0xc0] sm:$0xff]
    %v56 = vld [vmem:[#allocation2 + $0xc8] sm:$0xff]
    %v57 = vld [vmem:[#allocation2 + $0xd0] sm:$0xff]
    %v58 = vld [vmem:[#allocation2 + $0xd8] sm:$0xff]
    %v59 = vld [vmem:[#allocation2 + $0xe0] sm:$0xff]
    %v60 = vld [vmem:[#allocation2 + $0xe8] sm:$0xff]
    %v61 = vld [vmem:[#allocation2 + $0xf0] sm:$0xff]
    %v62 = vld [vmem:[#allocation2 + $0xf8] sm:$0xff]
    %v63 = vld [vmem:[#allocation2 + $0x100] sm:$0xff]
    %v64 = vld [vmem:[#allocation2 + $0x108] sm:$0xff]
    %v65 = vld [vmem:[#allocation2 + $0x110] sm:$0xff]
    %v66 = vld [vmem:[#allocation2 + $0x118] sm:$0xff]
    %v67 = vld [vmem:[#allocation2 + $0x120] sm:$0xff]
    %v68 = vld [vmem:[#allocation2 + $0x128] sm:$0xff]
    %v69 = vld [vmem:[#allocation2 + $0x130] sm:$0xff]
    %v70 = vld [vmem:[#allocation2 + $0x138] sm:$0xff]
    %v71 = vld [vmem:[#allocation2 + $0x140] sm:$0xff]
    %v72 = vld [vmem:[#allocation2 + $0x148] sm:$0xff]
    %v73 = vld [vmem:[#allocation2 + $0x150] sm:$0xff]
    %v74 = vld [vmem:[#allocation2 + $0x158] sm:$0xff]
    %v75 = vld [vmem:[#allocation2 + $0x160] sm:$0xff]
    %v76 = vld [vmem:[#allocation2 + $0x168] sm:$0xff]
    %v77 = vld [vmem:[#allocation2 + $0x170] sm:$0xff]
    %v78 = vld [vmem:[#allocation2 + $0x178] sm:$0xff]
    %v79 = vld [vmem:[#allocation2 + $0x180] sm:$0xff]
    %v80 = vld [vmem:[#allocation2 + $0x188] sm:$0xff]
    %v81 = vld [vmem:[#allocation2 + $0x190] sm:$0xff]
    %v82 = vld [vmem:[#allocation2 + $0x198] sm:$0xff]
    %v83 = vld [vmem:[#allocation2 + $0x1a0] sm:$0xff]
    %v84 = vld [vmem:[#allocation2 + $0x1a8] sm:$0xff]
    %v85 = vld [vmem:[#allocation2 + $0x1b0] sm:$0xff]
    %v86 = vld [vmem:[#allocation2 + $0x1b8] sm:$0xff]
    %v87 = vld [vmem:[#allocation2 + $0x1c0] sm:$0xff]
    %v88 = vld [vmem:[#allocation2 + $0x1c8] sm:$0xff]
    %v89 = vld [vmem:[#allocation2 + $0x1d0] sm:$0xff]
    %v90 = vld [vmem:[#allocation2 + $0x1d8] sm:$0xff]
    %v91 = vld [vmem:[#allocation2 + $0x1e0] sm:$0xff]
    %v92 = vld [vmem:[#allocation2 + $0x1e8] sm:$0xff]
    %v93 = vld [vmem:[#allocation2 + $0x1f0] sm:$0xff]
    %v94 = vld [vmem:[#allocation2 + $0x1f8] sm:$0xff]
    %v95 = vld [vmem:[#allocation2 + $0x200] sm:$0xff]
    %v96 = vld [vmem:[#allocation2 + $0x208] sm:$0xff]
    %v97 = vld [vmem:[#allocation2 + $0x210] sm:$0xff]
    %v98 = vld [vmem:[#allocation2 + $0x218] sm:$0xff]
    %v99 = vld [vmem:[#allocation2 + $0x220] sm:$0xff]
    %v100 = vld [vmem:[#allocation2 + $0x228] sm:$0xff]
    %v101 = vld [vmem:[#allocation2 + $0x230] sm:$0xff]
    %v102 = vld [vmem:[#allocation2 + $0x238] sm:$0xff]
    %v103 = vld [vmem:[#allocation2 + $0x240] sm:$0xff]
    %v104 = vld [vmem:[#allocation2 + $0x248] sm:$0xff]
    %v105 = vld [vmem:[#allocation2 + $0x250] sm:$0xff]
    %v106 = vld [vmem:[#allocation2 + $0x258] sm:$0xff]
    %v107 = vld [vmem:[#allocation2 + $0x260] sm:$0xff]
    %v108 = vld [vmem:[#allocation2 + $0x268] sm:$0xff]
    %v109 = vld [vmem:[#allocation2 + $0x270] sm:$0xff]
    %v110 = vld [vmem:[#allocation2 + $0x278] sm:$0xff]
    %v111 = vld [vmem:[#allocation2 + $0x280] sm:$0xff]
    %v112 = vld [vmem:[#allocation2 + $0x288] sm:$0xff]
    %v113 = vld [vmem:[#allocation2 + $0x290] sm:$0xff]
    %v114 = vld [vmem:[#allocation2 + $0x298] sm:$0xff]
    %v115 = vld [vmem:[#allocation2 + $0x2a0] sm:$0xff]
    %v116 = vld [vmem:[#allocation2 + $0x2a8] sm:$0xff]
    %v117 = vld [vmem:[#allocation2 + $0x2b0] sm:$0xff]
    %v118 = vld [vmem:[#allocation2 + $0x2b8] sm:$0xff]
    %v119 = vld [vmem:[#allocation2 + $0x2c0] sm:$0xff]
    %v120 = vld [vmem:[#allocation2 + $0x2c8] sm:$0xff]
    %v121 = vld [vmem:[#allocation2 + $0x2d0] sm:$0xff]
    %v122 = vld [vmem:[#allocation2 + $0x2d8] sm:$0xff]
    %v123 = vld [vmem:[#allocation2 + $0x2e0] sm:$0xff]
    %v124 = vld [vmem:[#allocation2 + $0x2e8] sm:$0xff]
    %v125 = vld [vmem:[#allocation2 + $0x2f0] sm:$0xff]
    %v126 = vld [vmem:[#allocation2 + $0x2f8] sm:$0xff]
    %v127 = vld [vmem:[#allocation2 + $0x300] sm:$0xff]
    %v128 = vld [vmem:[#allocation2 + $0x308] sm:$0xff]
    %v129 = vld [vmem:[#allocation2 + $0x310] sm:$0xff]
    %v130 = vld [vmem:[#allocation2 + $0x318] sm:$0xff]
    %v131 = vld [vmem:[#allocation2 + $0x320] sm:$0xff]
    %v132 = vld [vmem:[#allocation2 + $0x328] sm:$0xff]
    %v133 = vld [vmem:[#allocation2 + $0x330] sm:$0xff]
    %v134 = vld [vmem:[#allocation2 + $0x338] sm:$0xff]
    %v135 = vld [vmem:[#allocation2 + $0x340] sm:$0xff]
    %v136 = vld [vmem:[#allocation2 + $0x348] sm:$0xff]
    %v137 = vld [vmem:[#allocation2 + $0x350] sm:$0xff]
    %v138 = vld [vmem:[#allocation2 + $0x358] sm:$0xff]
    %v139 = vld [vmem:[#allocation2 + $0x360] sm:$0xff]
    %v140 = vld [vmem:[#allocation2 + $0x368] sm:$0xff]
    %v141 = vld [vmem:[#allocation2 + $0x370] sm:$0xff]
    %v142 = vld [vmem:[#allocation2 + $0x378] sm:$0xff]
    %v143 = vld [vmem:[#allocation2 + $0x380] sm:$0xff]
    %v144 = vld [vmem:[#allocation2 + $0x388] sm:$0xff]
    %v145 = vld [vmem:[#allocation2 + $0x390] sm:$0xff]
    %v146 = vld [vmem:[#allocation2 + $0x398] sm:$0xff]
    %v147 = vld [vmem:[#allocation2 + $0x3a0] sm:$0xff]
    %v148 = vld [vmem:[#allocation2 + $0x3a8] sm:$0xff]
    %v149 = vld [vmem:[#allocation2 + $0x3b0] sm:$0xff]
    %v150 = vld [vmem:[#allocation2 + $0x3b8] sm:$0xff]
    %v151 = vld [vmem:[#allocation2 + $0x3c0] sm:$0xff]
    %v152 = vld [vmem:[#allocation2 + $0x3c8] sm:$0xff]
    %v153 = vld [vmem:[#allocation2 + $0x3d0] sm:$0xff]
    %v154 = vld [vmem:[#allocation2 + $0x3d8] sm:$0xff]
    %v155 = vld [vmem:[#allocation2 + $0x3e0] sm:$0xff]
    %v156 = vld [vmem:[#allocation2 + $0x3e8] sm:$0xff]
    %v157 = vld [vmem:[#allocation2 + $0x3f0] sm:$0xff]
    %v158 = vld [vmem:[#allocation2 + $0x3f8] sm:$0xff]
    %v159 = vld [vmem:[#allocation2 + $0x400] sm:$0xff]
    %v160 = vld [vmem:[#allocation2 + $0x408] sm:$0xff]
    %v161 = vld [vmem:[#allocation2 + $0x410] sm:$0xff]
    %v162 = vld [vmem:[#allocation2 + $0x418] sm:$0xff]
    %v163 = vld [vmem:[#allocation2 + $0x420] sm:$0xff]
    %v164 = vld [vmem:[#allocation2 + $0x428] sm:$0xff]
    %v165 = vld [vmem:[#allocation2 + $0x430] sm:$0xff]
    %v166 = vld [vmem:[#allocation2 + $0x438] sm:$0xff]
    %v167 = vld [vmem:[#allocation2 + $0x440] sm:$0xff]
    %v168 = vld [vmem:[#allocation2 + $0x448] sm:$0xff]
    %v169 = vld [vmem:[#allocation2 + $0x450] sm:$0xff]
    %v170 = vld [vmem:[#allocation2 + $0x458] sm:$0xff]
    %v171 = vld [vmem:[#allocation2 + $0x460] sm:$0xff]
    %v172 = vld [vmem:[#allocation2 + $0x468] sm:$0xff]
    %v173 = vld [vmem:[#allocation2 + $0x470] sm:$0xff]
    %v174 = vld [vmem:[#allocation2 + $0x478] sm:$0xff]
    %v175 = vld [vmem:[#allocation2 + $0x480] sm:$0xff]
    %v176 = vld [vmem:[#allocation2 + $0x488] sm:$0xff]
    %v177 = vld [vmem:[#allocation2 + $0x490] sm:$0xff]
    %v178 = vld [vmem:[#allocation2 + $0x498] sm:$0xff]
    %v179 = vld [vmem:[#allocation2 + $0x4a0] sm:$0xff]
    %v180 = vld [vmem:[#allocation2 + $0x4a8] sm:$0xff]
    %v181 = vld [vmem:[#allocation2 + $0x4b0] sm:$0xff]
    %v182 = vld [vmem:[#allocation2 + $0x4b8] sm:$0xff]
    %v183 = vld [vmem:[#allocation2 + $0x4c0] sm:$0xff]
    %v184 = vld [vmem:[#allocation2 + $0x4c8] sm:$0xff]
    %v185 = vld [vmem:[#allocation2 + $0x4d0] sm:$0xff]
    %v186 = vld [vmem:[#allocation2 + $0x4d8] sm:$0xff]
    %v187 = vld [vmem:[#allocation2 + $0x4e0] sm:$0xff]
    %v188 = vld [vmem:[#allocation2 + $0x4e8] sm:$0xff]
    %v189 = vld [vmem:[#allocation2 + $0x4f0] sm:$0xff]
    %v190 = vld [vmem:[#allocation2 + $0x4f8] sm:$0xff]
    %v191 = vld [vmem:[#allocation2 + $0x500] sm:$0xff]
    %v192 = vld [vmem:[#allocation2 + $0x508] sm:$0xff]
    %v193 = vld [vmem:[#allocation2 + $0x510] sm:$0xff]
    %v194 = vld [vmem:[#allocation2 + $0x518] sm:$0xff]
    %v195 = vld [vmem:[#allocation2 + $0x520] sm:$0xff]
    %v196 = vld [vmem:[#allocation2 + $0x528] sm:$0xff]
    %v197 = vld [vmem:[#allocation2 + $0x530] sm:$0xff]
    %v198 = vld [vmem:[#allocation2 + $0x538] sm:$0xff]
    %v199 = vld [vmem:[#allocation2 + $0x540] sm:$0xff]
    %v200 = vld [vmem:[#allocation2 + $0x548] sm:$0xff]
    %v201 = vld [vmem:[#allocation2 + $0x550] sm:$0xff]
    %v202 = vld [vmem:[#allocation2 + $0x558] sm:$0xff]
    %v203 = vld [vmem:[#allocation2 + $0x560] sm:$0xff]
    %v204 = vld [vmem:[#allocation2 + $0x568] sm:$0xff]
    %v205 = vld [vmem:[#allocation2 + $0x570] sm:$0xff]
    %v206 = vld [vmem:[#allocation2 + $0x578] sm:$0xff]
    %v207 = vld [vmem:[#allocation2 + $0x580] sm:$0xff]
    %v208 = vld [vmem:[#allocation2 + $0x588] sm:$0xff]
    %v209 = vld [vmem:[#allocation2 + $0x590] sm:$0xff]
    %v210 = vld [vmem:[#allocation2 + $0x598] sm:$0xff]
    %v211 = vld [vmem:[#allocation2 + $0x5a0] sm:$0xff]
    %v212 = vld [vmem:[#allocation2 + $0x5a8] sm:$0xff]
    %v213 = vld [vmem:[#allocation2 + $0x5b0] sm:$0xff]
    %v214 = vld [vmem:[#allocation2 + $0x5b8] sm:$0xff]
    %v215 = vld [vmem:[#allocation2 + $0x5c0] sm:$0xff]
    %v216 = vld [vmem:[#allocation2 + $0x5c8] sm:$0xff]
    %v217 = vld [vmem:[#allocation2 + $0x5d0] sm:$0xff]
    %v218 = vld [vmem:[#allocation2 + $0x5d8] sm:$0xff]
    %v219 = vld [vmem:[#allocation2 + $0x5e0] sm:$0xff]
    %v220 = vld [vmem:[#allocation2 + $0x5e8] sm:$0xff]
    %v221 = vld [vmem:[#allocation2 + $0x5f0] sm:$0xff]
    %v222 = vld [vmem:[#allocation2 + $0x5f8] sm:$0xff]
    %v223 = vld [vmem:[#allocation2 + $0x600] sm:$0xff]
    %v224 = vld [vmem:[#allocation2 + $0x608] sm:$0xff]
    %v225 = vld [vmem:[#allocation2 + $0x610] sm:$0xff]
    %v226 = vld [vmem:[#allocation2 + $0x618] sm:$0xff]
    %v227 = vld [vmem:[#allocation2 + $0x620] sm:$0xff]
    %v228 = vld [vmem:[#allocation2 + $0x628] sm:$0xff]
    %v229 = vld [vmem:[#allocation2 + $0x630] sm:$0xff]
    %v230 = vld [vmem:[#allocation2 + $0x638] sm:$0xff]
    %v231 = vld [vmem:[#allocation2 + $0x640] sm:$0xff]
    %v232 = vld [vmem:[#allocation2 + $0x648] sm:$0xff]
    %v233 = vld [vmem:[#allocation2 + $0x650] sm:$0xff]
    %v234 = vld [vmem:[#allocation2 + $0x658] sm:$0xff]
    %v235 = vld [vmem:[#allocation2 + $0x660] sm:$0xff]
    %v236 = vld [vmem:[#allocation2 + $0x668] sm:$0xff]
    %v237 = vld [vmem:[#allocation2 + $0x670] sm:$0xff]
    %v238 = vld [vmem:[#allocation2 + $0x678] sm:$0xff]
    %v239 = vld [vmem:[#allocation2 + $0x680] sm:$0xff]
    %v240 = vld [vmem:[#allocation2 + $0x688] sm:$0xff]
    %v241 = vld [vmem:[#allocation2 + $0x690] sm:$0xff]
    %v242 = vld [vmem:[#allocation2 + $0x698] sm:$0xff]
    %v243 = vld [vmem:[#allocation2 + $0x6a0] sm:$0xff]
    %v244 = vld [vmem:[#allocation2 + $0x6a8] sm:$0xff]
    %v245 = vld [vmem:[#allocation2 + $0x6b0] sm:$0xff]
    %v246 = vld [vmem:[#allocation2 + $0x6b8] sm:$0xff]
    %v247 = vld [vmem:[#allocation2 + $0x6c0] sm:$0xff]
    %v248 = vld [vmem:[#allocation2 + $0x6c8] sm:$0xff]
    %v249 = vld [vmem:[#allocation2 + $0x6d0] sm:$0xff]
    %v250 = vld [vmem:[#allocation2 + $0x6d8] sm:$0xff]
    %v251 = vld [vmem:[#allocation2 + $0x6e0] sm:$0xff]
    %v252 = vld [vmem:[#allocation2 + $0x6e8] sm:$0xff]
    %v253 = vld [vmem:[#allocation2 + $0x6f0] sm:$0xff]
    %v254 = vld [vmem:[#allocation2 + $0x6f8] sm:$0xff]
    %v255 = vld [vmem:[#allocation2 + $0x700] sm:$0xff]
    %v256 = vld [vmem:[#allocation2 + $0x708] sm:$0xff]
    %v257 = vld [vmem:[#allocation2 + $0x710] sm:$0xff]
    %v258 = vld [vmem:[#allocation2 + $0x718] sm:$0xff]
    %v259 = vld [vmem:[#allocation2 + $0x720] sm:$0xff]
    %v260 = vld [vmem:[#allocation2 + $0x728] sm:$0xff]
    %v261 = vld [vmem:[#allocation2 + $0x730] sm:$0xff]
    %v262 = vld [vmem:[#allocation2 + $0x738] sm:$0xff]
    %v263 = vld [vmem:[#allocation2 + $0x740] sm:$0xff]
    %v264 = vld [vmem:[#allocation2 + $0x748] sm:$0xff]
    %v265 = vld [vmem:[#allocation2 + $0x750] sm:$0xff]
    %v266 = vld [vmem:[#allocation2 + $0x758] sm:$0xff]
    %v267 = vld [vmem:[#allocation2 + $0x760] sm:$0xff]
    %v268 = vld [vmem:[#allocation2 + $0x768] sm:$0xff]
    %v269 = vld [vmem:[#allocation2 + $0x770] sm:$0xff]
    %v270 = vld [vmem:[#allocation2 + $0x778] sm:$0xff]
    %v271 = vld [vmem:[#allocation2 + $0x780] sm:$0xff]
    %v272 = vld [vmem:[#allocation2 + $0x788] sm:$0xff]
    %v273 = vld [vmem:[#allocation2 + $0x790] sm:$0xff]
    %v274 = vld [vmem:[#allocation2 + $0x798] sm:$0xff]
    %v275 = vld [vmem:[#allocation2 + $0x7a0] sm:$0xff]
    %v276 = vld [vmem:[#allocation2 + $0x7a8] sm:$0xff]
    %v277 = vld [vmem:[#allocation2 + $0x7b0] sm:$0xff]
    %v278 = vld [vmem:[#allocation2 + $0x7b8] sm:$0xff]
    %v279 = vld [vmem:[#allocation2 + $0x7c0] sm:$0xff]
    %v280 = vld [vmem:[#allocation2 + $0x7c8] sm:$0xff]
    %v281 = vld [vmem:[#allocation2 + $0x7d0] sm:$0xff]
    %v282 = vld [vmem:[#allocation2 + $0x7d8] sm:$0xff]
    %v283 = vld [vmem:[#allocation2 + $0x7e0] sm:$0xff]
    %v284 = vld [vmem:[#allocation2 + $0x7e8] sm:$0xff]
    %v285 = vld [vmem:[#allocation2 + $0x7f0] sm:$0xff]
    %v286 = vld [vmem:[#allocation2 + $0x7f8] sm:$0xff]
    %v287 = vld [vmem:[#allocation2 + $0x800] sm:$0xff]
    %v288 = vld [vmem:[#allocation2 + $0x808] sm:$0xff]
    %v289 = vld [vmem:[#allocation2 + $0x810] sm:$0xff]
    %v290 = vld [vmem:[#allocation2 + $0x818] sm:$0xff]
    %v291 = vld [vmem:[#allocation2 + $0x820] sm:$0xff]
    %v292 = vld [vmem:[#allocation2 + $0x828] sm:$0xff]
    %v293 = vld [vmem:[#allocation2 + $0x830] sm:$0xff]
    %v294 = vld [vmem:[#allocation2 + $0x838] sm:$0xff]
    %v295 = vld [vmem:[#allocation2 + $0x840] sm:$0xff]
    %v296 = vld [vmem:[#allocation2 + $0x848] sm:$0xff]
    %v297 = vld [vmem:[#allocation2 + $0x850] sm:$0xff]
    %v298 = vld [vmem:[#allocation2 + $0x858] sm:$0xff]
    %v299 = vld [vmem:[#allocation2 + $0x860] sm:$0xff]
    %v300 = vld [vmem:[#allocation2 + $0x868] sm:$0xff]
    %v301 = vld [vmem:[#allocation2 + $0x870] sm:$0xff]
    %v302 = vld [vmem:[#allocation2 + $0x878] sm:$0xff]
    %v303 = vld [vmem:[#allocation2 + $0x880] sm:$0xff]
    %v304 = vld [vmem:[#allocation2 + $0x888] sm:$0xff]
    %v305 = vld [vmem:[#allocation2 + $0x890] sm:$0xff]
    %v306 = vld [vmem:[#allocation2 + $0x898] sm:$0xff]
    %v307 = vld [vmem:[#allocation2 + $0x8a0] sm:$0xff]
    %v308 = vld [vmem:[#allocation2 + $0x8a8] sm:$0xff]
    %v309 = vld [vmem:[#allocation2 + $0x8b0] sm:$0xff]
    %v310 = vld [vmem:[#allocation2 + $0x8b8] sm:$0xff]
    %v311 = vld [vmem:[#allocation2 + $0x8c0] sm:$0xff]
    %v312 = vld [vmem:[#allocation2 + $0x8c8] sm:$0xff]
    %v313 = vld [vmem:[#allocation2 + $0x8d0] sm:$0xff]
    %v314 = vld [vmem:[#allocation2 + $0x8d8] sm:$0xff]
    %v315 = vld [vmem:[#allocation2 + $0x8e0] sm:$0xff]
    %v316 = vld [vmem:[#allocation2 + $0x8e8] sm:$0xff]
    %v317 = vld [vmem:[#allocation2 + $0x8f0] sm:$0xff]
    %v318 = vld [vmem:[#allocation2 + $0x8f8] sm:$0xff]
    %v319 = vld [vmem:[#allocation2 + $0x900] sm:$0xff]
    %v320 = vld [vmem:[#allocation2 + $0x908] sm:$0xff]
    %v321 = vld [vmem:[#allocation2 + $0x910] sm:$0xff]
    %v322 = vld [vmem:[#allocation2 + $0x918] sm:$0xff]
    %v323 = vld [vmem:[#allocation2 + $0x920] sm:$0xff]
    %v324 = vld [vmem:[#allocation2 + $0x928] sm:$0xff]
    %v325 = vld [vmem:[#allocation2 + $0x930] sm:$0xff]
    %v326 = vld [vmem:[#allocation2 + $0x938] sm:$0xff]
    %v327 = vld [vmem:[#allocation2 + $0x940] sm:$0xff]
    %v328 = vld [vmem:[#allocation2 + $0x948] sm:$0xff]
    %v329 = vld [vmem:[#allocation2 + $0x950] sm:$0xff]
    %v330 = vld [vmem:[#allocation2 + $0x958] sm:$0xff]
    %v331 = vld [vmem:[#allocation2 + $0x960] sm:$0xff]
    %v332 = vld [vmem:[#allocation2 + $0x968] sm:$0xff]
    %v333 = vld [vmem:[#allocation2 + $0x970] sm:$0xff]
    %v334 = vld [vmem:[#allocation2 + $0x978] sm:$0xff]
    %v335 = vld [vmem:[#allocation2 + $0x980] sm:$0xff]
    %v336 = vld [vmem:[#allocation2 + $0x988] sm:$0xff]
    %v337 = vld [vmem:[#allocation2 + $0x990] sm:$0xff]
    %v338 = vld [vmem:[#allocation2 + $0x998] sm:$0xff]
    %v339 = vld [vmem:[#allocation2 + $0x9a0] sm:$0xff]
    %v340 = vld [vmem:[#allocation2 + $0x9a8] sm:$0xff]
    %v341 = vld [vmem:[#allocation2 + $0x9b0] sm:$0xff]
    %v342 = vld [vmem:[#allocation2 + $0x9b8] sm:$0xff]
    %v343 = vld [vmem:[#allocation2 + $0x9c0] sm:$0xff]
    %v344 = vld [vmem:[#allocation2 + $0x9c8] sm:$0xff]
    %v345 = vld [vmem:[#allocation2 + $0x9d0] sm:$0xff]
    %v346 = vld [vmem:[#allocation2 + $0x9d8] sm:$0xff]
    %v347 = vld [vmem:[#allocation2 + $0x9e0] sm:$0xff]
    %v348 = vld [vmem:[#allocation2 + $0x9e8] sm:$0xff]
    %v349 = vld [vmem:[#allocation2 + $0x9f0] sm:$0xff]
    %v350 = vld [vmem:[#allocation2 + $0x9f8] sm:$0xff]
    %v351 = vld [vmem:[#allocation2 + $0xa00] sm:$0xff]
    %v352 = vld [vmem:[#allocation2 + $0xa08] sm:$0xff]
    %v353 = vld [vmem:[#allocation2 + $0xa10] sm:$0xff]
    %v354 = vld [vmem:[#allocation2 + $0xa18] sm:$0xff]
    %v355 = vld [vmem:[#allocation2 + $0xa20] sm:$0xff]
    %v356 = vld [vmem:[#allocation2 + $0xa28] sm:$0xff]
    %v357 = vld [vmem:[#allocation2 + $0xa30] sm:$0xff]
    %v358 = vld [vmem:[#allocation2 + $0xa38] sm:$0xff]
    %v359 = vld [vmem:[#allocation2 + $0xa40] sm:$0xff]
    %v360 = vld [vmem:[#allocation2 + $0xa48] sm:$0xff]
    %v361 = vld [vmem:[#allocation2 + $0xa50] sm:$0xff]
    %v362 = vld [vmem:[#allocation2 + $0xa58] sm:$0xff]
    %v363 = vld [vmem:[#allocation2 + $0xa60] sm:$0xff]
    %v364 = vld [vmem:[#allocation2 + $0xa68] sm:$0xff]
    %v365 = vld [vmem:[#allocation2 + $0xa70] sm:$0xff]
    %v366 = vld [vmem:[#allocation2 + $0xa78] sm:$0xff]
    %v367 = vld [vmem:[#allocation2 + $0xa80] sm:$0xff]
    %v368 = vld [vmem:[#allocation2 + $0xa88] sm:$0xff]
    %v369 = vld [vmem:[#allocation2 + $0xa90] sm:$0xff]
    %v370 = vld [vmem:[#allocation2 + $0xa98] sm:$0xff]
    %v371 = vld [vmem:[#allocation2 + $0xaa0] sm:$0xff]
    %v372 = vld [vmem:[#allocation2 + $0xaa8] sm:$0xff]
    %v373 = vld [vmem:[#allocation2 + $0xab0] sm:$0xff]
    %v374 = vld [vmem:[#allocation2 + $0xab8] sm:$0xff]
    %v375 = vld [vmem:[#allocation2 + $0xac0] sm:$0xff]
    %v376 = vld [vmem:[#allocation2 + $0xac8] sm:$0xff]
    %v377 = vld [vmem:[#allocation2 + $0xad0] sm:$0xff]
    %v378 = vld [vmem:[#allocation2 + $0xad8] sm:$0xff]
    %v379 = vld [vmem:[#allocation2 + $0xae0] sm:$0xff]
    %v380 = vld [vmem:[#allocation2 + $0xae8] sm:$0xff]
    %v381 = vld [vmem:[#allocation2 + $0xaf0] sm:$0xff]
    %v382 = vld [vmem:[#allocation2 + $0xaf8] sm:$0xff]
    %v383 = vld [vmem:[#allocation2 + $0xb00] sm:$0xff]
    %v384 = vld [vmem:[#allocation2 + $0xb08] sm:$0xff]
    %v385 = vld [vmem:[#allocation2 + $0xb10] sm:$0xff]
    %v386 = vld [vmem:[#allocation2 + $0xb18] sm:$0xff]
    %v387 = vld [vmem:[#allocation2 + $0xb20] sm:$0xff]
    %v388 = vld [vmem:[#allocation2 + $0xb28] sm:$0xff]
    %v389 = vld [vmem:[#allocation2 + $0xb30] sm:$0xff]
    %v390 = vld [vmem:[#allocation2 + $0xb38] sm:$0xff]
    %v391 = vld [vmem:[#allocation2 + $0xb40] sm:$0xff]
    %v392 = vld [vmem:[#allocation2 + $0xb48] sm:$0xff]
    %v393 = vld [vmem:[#allocation2 + $0xb50] sm:$0xff]
    %v394 = vld [vmem:[#allocation2 + $0xb58] sm:$0xff]
    %v395 = vld [vmem:[#allocation2 + $0xb60] sm:$0xff]
    %v396 = vld [vmem:[#allocation2 + $0xb68] sm:$0xff]
    %v397 = vld [vmem:[#allocation2 + $0xb70] sm:$0xff]
    %v398 = vld [vmem:[#allocation2 + $0xb78] sm:$0xff]
    %v399 = vld [vmem:[#allocation2 + $0xb80] sm:$0xff]
    %v400 = vld [vmem:[#allocation2 + $0xb88] sm:$0xff]
    %v401 = vld [vmem:[#allocation2 + $0xb90] sm:$0xff]
    %v402 = vld [vmem:[#allocation2 + $0xb98] sm:$0xff]
    %v403 = vld [vmem:[#allocation2 + $0xba0] sm:$0xff]
    %v404 = vld [vmem:[#allocation2 + $0xba8] sm:$0xff]
    %v405 = vld [vmem:[#allocation2 + $0xbb0] sm:$0xff]
    %v406 = vld [vmem:[#allocation2 + $0xbb8] sm:$0xff]
    %v407 = vld [vmem:[#allocation2 + $0xbc0] sm:$0xff]
    %v408 = vld [vmem:[#allocation2 + $0xbc8] sm:$0xff]
    %v409 = vld [vmem:[#allocation2 + $0xbd0] sm:$0xff]
    %v410 = vld [vmem:[#allocation2 + $0xbd8] sm:$0xff]
    %v411 = vld [vmem:[#allocation2 + $0xbe0] sm:$0xff]
    %v412 = vld [vmem:[#allocation2 + $0xbe8] sm:$0xff]
    %v413 = vld [vmem:[#allocation2 + $0xbf0] sm:$0xff]
    %v414 = vld [vmem:[#allocation2 + $0xbf8] sm:$0xff]
    %v415 = vld [vmem:[#allocation2 + $0xc00] sm:$0xff]
    %v416 = vld [vmem:[#allocation2 + $0xc08] sm:$0xff]
    %v417 = vld [vmem:[#allocation2 + $0xc10] sm:$0xff]
    %v418 = vld [vmem:[#allocation2 + $0xc18] sm:$0xff]
    %v419 = vld [vmem:[#allocation2 + $0xc20] sm:$0xff]
    %v420 = vld [vmem:[#allocation2 + $0xc28] sm:$0xff]
    %v421 = vld [vmem:[#allocation2 + $0xc30] sm:$0xff]
    %v422 = vld [vmem:[#allocation2 + $0xc38] sm:$0xff]
    %v423 = vld [vmem:[#allocation2 + $0xc40] sm:$0xff]
    %v424 = vld [vmem:[#allocation2 + $0xc48] sm:$0xff]
    %v425 = vld [vmem:[#allocation2 + $0xc50] sm:$0xff]
    %v426 = vld [vmem:[#allocation2 + $0xc58] sm:$0xff]
    %v427 = vld [vmem:[#allocation2 + $0xc60] sm:$0xff]
    %v428 = vld [vmem:[#allocation2 + $0xc68] sm:$0xff]
    %v429 = vld [vmem:[#allocation2 + $0xc70] sm:$0xff]
    %v430 = vld [vmem:[#allocation2 + $0xc78] sm:$0xff]
    %v431 = vld [vmem:[#allocation2 + $0xc80] sm:$0xff]
    %v432 = vld [vmem:[#allocation2 + $0xc88] sm:$0xff]
    %v433 = vld [vmem:[#allocation2 + $0xc90] sm:$0xff]
    %v434 = vld [vmem:[#allocation2 + $0xc98] sm:$0xff]
    %v435 = vld [vmem:[#allocation2 + $0xca0] sm:$0xff]
    %v436 = vld [vmem:[#allocation2 + $0xca8] sm:$0xff]
    %v437 = vld [vmem:[#allocation2 + $0xcb0] sm:$0xff]
    %v438 = vld [vmem:[#allocation2 + $0xcb8] sm:$0xff]
    %v439 = vld [vmem:[#allocation2 + $0xcc0] sm:$0xff]
    %v440 = vld [vmem:[#allocation2 + $0xcc8] sm:$0xff]
    %v441 = vld [vmem:[#allocation2 + $0xcd0] sm:$0xff]
    %v442 = vld [vmem:[#allocation2 + $0xcd8] sm:$0xff]
    %v443 = vld [vmem:[#allocation2 + $0xce0] sm:$0xff]
    %v444 = vld [vmem:[#allocation2 + $0xce8] sm:$0xff]
    %v445 = vld [vmem:[#allocation2 + $0xcf0] sm:$0xff]
    %v446 = vld [vmem:[#allocation2 + $0xcf8] sm:$0xff]
    %v447 = vld [vmem:[#allocation2 + $0xd00] sm:$0xff]
    %v448 = vld [vmem:[#allocation2 + $0xd08] sm:$0xff]
    %v449 = vld [vmem:[#allocation2 + $0xd10] sm:$0xff]
    %v450 = vld [vmem:[#allocation2 + $0xd18] sm:$0xff]
    %v451 = vld [vmem:[#allocation2 + $0xd20] sm:$0xff]
    %v452 = vld [vmem:[#allocation2 + $0xd28] sm:$0xff]
    %v453 = vld [vmem:[#allocation2 + $0xd30] sm:$0xff]
    %v454 = vld [vmem:[#allocation2 + $0xd38] sm:$0xff]
    %v455 = vld [vmem:[#allocation2 + $0xd40] sm:$0xff]
    %v456 = vld [vmem:[#allocation2 + $0xd48] sm:$0xff]
    %v457 = vld [vmem:[#allocation2 + $0xd50] sm:$0xff]
    %v458 = vld [vmem:[#allocation2 + $0xd58] sm:$0xff]
    %v459 = vld [vmem:[#allocation2 + $0xd60] sm:$0xff]
    %v460 = vld [vmem:[#allocation2 + $0xd68] sm:$0xff]
    %v461 = vld [vmem:[#allocation2 + $0xd70] sm:$0xff]
    %v462 = vld [vmem:[#allocation2 + $0xd78] sm:$0xff]
    %v463 = vld [vmem:[%s0] sm:$0xff]
    %v464 = vld [vmem:[%s0 + $0x8] sm:$0xff]
    %v465 = vld [vmem:[%s0 + $0x10] sm:$0xff]
    %v466 = vld [vmem:[%s0 + $0x18] sm:$0xff]
    %v467 = vld [vmem:[%s0 + $0x20] sm:$0xff]
    %v468 = vld [vmem:[%s0 + $0x28] sm:$0xff]
    %v469 = vld [vmem:[%s0 + $0x30] sm:$0xff]
    %v470 = vld [vmem:[%s0 + $0x38] sm:$0xff]
    %v471 = vld [vmem:[%s0 + $0x40] sm:$0xff]
    %v472 = vld [vmem:[%s0 + $0x48] sm:$0xff]
    %v473 = vld [vmem:[%s0 + $0x50] sm:$0xff]
    %v474 = vld [vmem:[%s0 + $0x58] sm:$0xff]
    %v475 = vld [vmem:[%s0 + $0x60] sm:$0xff]
    %v476 = vld [vmem:[%s0 + $0x68] sm:$0xff]
    %v477 = vld [vmem:[%s0 + $0x70] sm:$0xff]
    %v478 = vld [vmem:[%s0 + $0x78] sm:$0xff]
    %v479 = vld [vmem:[%s0 + $0x80] sm:$0xff]
    %v480 = vld [vmem:[%s0 + $0x88] sm:$0xff]
    %v481 = vld [vmem:[%s0 + $0x90] sm:$0xff]
    %v482 = vld [vmem:[%s0 + $0x98] sm:$0xff]
    %v483 = vld [vmem:[%s0 + $0xa0] sm:$0xff]
    %v484 = vld [vmem:[%s0 + $0xa8] sm:$0xff]
    %v485 = vld [vmem:[%s0 + $0xb0] sm:$0xff]
    %v486 = vld [vmem:[%s0 + $0xb8] sm:$0xff]
    %v487 = vld [vmem:[%s0 + $0xc0] sm:$0xff]
    %v488 = vld [vmem:[%s0 + $0xc8] sm:$0xff]
    %v489 = vld [vmem:[%s0 + $0xd0] sm:$0xff]
    %v490 = vld [vmem:[%s0 + $0xd8] sm:$0xff]
    %v491 = vld [vmem:[%s0 + $0xe0] sm:$0xff]
    %v492 = vld [vmem:[%s0 + $0xe8] sm:$0xff]
    %v493 = vld [vmem:[%s0 + $0xf0] sm:$0xff]
    %v494 = vld [vmem:[%s0 + $0xf8] sm:$0xff]
    %v495 = vld [vmem:[%s0 + $0x100] sm:$0xff]
    %v496 = vld [vmem:[%s0 + $0x108] sm:$0xff]
    %v497 = vld [vmem:[%s0 + $0x110] sm:$0xff]
    %v498 = vld [vmem:[%s0 + $0x118] sm:$0xff]
    %v499 = vld [vmem:[%s0 + $0x120] sm:$0xff]
    %v500 = vld [vmem:[%s0 + $0x128] sm:$0xff]
    %v501 = vld [vmem:[%s0 + $0x130] sm:$0xff]
    %v502 = vld [vmem:[%s0 + $0x138] sm:$0xff]
    %v503 = vld [vmem:[%s0 + $0x140] sm:$0xff]
    %v504 = vld [vmem:[%s0 + $0x148] sm:$0xff]
    %v505 = vld [vmem:[%s0 + $0x150] sm:$0xff]
    %v506 = vld [vmem:[%s0 + $0x158] sm:$0xff]
    %v507 = vld [vmem:[%s0 + $0x160] sm:$0xff]
    %v508 = vld [vmem:[%s0 + $0x168] sm:$0xff]
    %v509 = vld [vmem:[%s0 + $0x170] sm:$0xff]
    %v510 = vld [vmem:[%s0 + $0x178] sm:$0xff]
    %511 = vmatprep.subr.mxu0 0.0
    %512 = vmatpush1.msra.mxu0 %v463
    %513 = vmatprep.subr.mxu0 0.0
    %514 = vmatpush1.msra.mxu0 %v464
    %515 = vmatprep.subr.mxu0 0.0
    %516 = vmatpush1.msra.mxu0 %v465
    %517 = vmatprep.subr.mxu0 0.0
    %518 = vmatpush1.msra.mxu0 %v466
    %519 = vmatprep.subr.mxu0 0.0
    %520 = vmatpush1.msra.mxu0 %v467
    %521 = vmatprep.subr.mxu0 0.0
    %522 = vmatpush1.msra.mxu0 %v468
    %523 = vmatprep.subr.mxu0 0.0
    %524 = vmatpush1.msra.mxu0 %v469
    %525 = vmatprep.subr.mxu0 0.0
    %526 = vmatpush1.msra.mxu0 %v470
    %527 = vmatprep.subr.mxu0 0.0
    %528 = vmatpush1.msra.mxu0 %v471
    %529 = vmatprep.subr.mxu0 0.0
    %530 = vmatpush1.msra.mxu0 %v472
    %531 = vmatprep.subr.mxu0 0.0
    %532 = vmatpush1.msra.mxu0 %v473
    %533 = vmatprep.subr.mxu0 0.0
    %534 = vmatpush1.msra.mxu0 %v474
    %535 = vmatprep.subr.mxu0 0.0
    %536 = vmatpush1.msra.mxu0 %v475
    %537 = vmatprep.subr.mxu0 0.0
    %538 = vmatpush1.msra.mxu0 %v476
    %539 = vmatprep.subr.mxu0 0.0
    %540 = vmatpush1.msra.mxu0 %v477
    %541 = vmatprep.subr.mxu0 0.0
    %542 = vmatpush1.msra.mxu0 %v478
    %543 = vmatprep.subr.mxu0 0.0
    %544 = vmatpush1.msra.mxu0 %v479
    %545 = vmatprep.subr.mxu0 0.0
    %546 = vmatpush1.msra.mxu0 %v480
    %547 = vmatprep.subr.mxu0 0.0
    %548 = vmatpush1.msra.mxu0 %v481
    %549 = vmatprep.subr.mxu0 0.0
    %550 = vmatpush1.msra.mxu0 %v482
    %551 = vmatprep.subr.mxu0 0.0
    %552 = vmatpush1.msra.mxu0 %v483
    %553 = vmatprep.subr.mxu0 0.0
    %554 = vmatpush1.msra.mxu0 %v484
    %555 = vmatprep.subr.mxu0 0.0
    %556 = vmatpush1.msra.mxu0 %v485
    %557 = vmatprep.subr.mxu0 0.0
    %558 = vmatpush1.msra.mxu0 %v486
    %559 = vmatprep.subr.mxu0 0.0
    %560 = vmatpush1.msra.mxu0 %v487
    %561 = vmatprep.subr.mxu0 0.0
    %562 = vmatpush1.msra.mxu0 %v488
    %563 = vmatprep.subr.mxu0 0.0
    %564 = vmatpush1.msra.mxu0 %v489
    %565 = vmatprep.subr.mxu0 0.0
    %566 = vmatpush1.msra.mxu0 %v490
    %567 = vmatprep.subr.mxu0 0.0
    %568 = vmatpush1.msra.mxu0 %v491
    %569 = vmatprep.subr.mxu0 0.0
    %570 = vmatpush1.msra.mxu0 %v492
    %571 = vmatprep.subr.mxu0 0.0
    %572 = vmatpush1.msra.mxu0 %v493
    %573 = vmatprep.subr.mxu0 0.0
    %574 = vmatpush1.msra.mxu0 %v494
    %575 = vmatprep.mubr.f32.mxu0 %v32
    %576 = vmatmul.mubr.f32.gmra.mrb[0].mxu0 %v31
    %v577 = vpop.f32.mrb[0].mxu0
    %v578 = vadd.f32 0.0, %v577
    %v579 = vpop.f32.mrb[0].mxu0
    %580 = vmatprep.mubr.f32.mxu0 %v35
    %581 = vmatmul.mubr.f32.gmra.mrb[0].mxu0 %v34
    %v582 = vpop.f32.mrb[0].mxu0
    %v583 = vadd.f32 0.0, %v582
    %v584 = vpop.f32.mrb[0].mxu0
    %585 = vmatprep.mubr.f32.mxu0 %v38
    %586 = vmatmul.mubr.f32.gmra.mrb[0].mxu0 %v37
    %v587 = vpop.f32.mrb[0].mxu0
    %v588 = vadd.f32 0.0, %v587
    %v589 = vpop.f32.mrb[0].mxu0
    %590 = vmatprep.mubr.f32.mxu0 %v41
    %591 = vmatmul.mubr.f32.gmra.mrb[0].mxu0 %v40
    %v592 = vpop.f32.mrb[0].mxu0
    %v593 = vadd.f32 0.0, %v592
    %v594 = vpop.f32.mrb[0].mxu0
    %595 = vmatprep.mubr.f32.mxu0 %v44
    %596 = vmatmul.mubr.f32.gmra.mrb[0].mxu0 %v43
    %v597 = vpop.f32.mrb[0].mxu0
    %v598 = vadd.f32 0.0, %v597
    %v599 = vpop.f32.mrb[0].mxu0
    %600 = vmatprep.mubr.f32.mxu0 %v47
    %601 = vmatmul.mubr.f32.gmra.mrb[0].mxu0 %v46
    %v602 = vpop.f32.mrb[0].mxu0
    %v603 = vadd.f32 0.0, %v602
    %v604 = vpop.f32.mrb[0].mxu0
    %605 = vmatprep.mubr.f32.mxu0 %v50
    %606 = vmatmul.mubr.f32.gmra.mrb[0].mxu0 %v49
    %v607 = vpop.f32.mrb[0].mxu0
    %v608 = vadd.f32 0.0, %v607
    %v609 = vpop.f32.mrb[0].mxu0
    %610 = vmatprep.mubr.f32.mxu0 %v53
    %611 = vmatmul.mubr.f32.gmra.mrb[0].mxu0 %v52
    %v612 = vpop.f32.mrb[0].mxu0
    %v613 = vadd.f32 0.0, %v612
    %v614 = vpop.f32.mrb[0].mxu0
    %615 = vmatprep.mubr.f32.mxu0 %v56
    %616 = vmatmul.mubr.f32.gmra.mrb[0].mxu0 %v55
    %v617 = vpop.f32.mrb[0].mxu0
    %v618 = vadd.f32 0.0, %v617
    %v619 = vpop.f32.mrb[0].mxu0
    %620 = vmatprep.mubr.f32.mxu0 %v59
    %621 = vmatmul.mubr.f32.gmra.mrb[0].mxu0 %v58
    %v622 = vpop.f32.mrb[0].mxu0
    %v623 = vadd.f32 0.0, %v622
    %v624 = vpop.f32.mrb[0].mxu0
    %625 = vmatprep.mubr.f32.mxu0 %v62
    %626 = vmatmul.mubr.f32.gmra.mrb[0].mxu0 %v61
    %v627 = vpop.f32.mrb[0].mxu0
    %v628 = vadd.f32 0.0, %v627
    %v629 = vpop.f32.mrb[0].mxu0
    %630 = vmatprep.mubr.f32.mxu0 %v65
    %631 = vmatmul.mubr.f32.gmra.mrb[0].mxu0 %v64
    %v632 = vpop.f32.mrb[0].mxu0
    %v633 = vadd.f32 0.0, %v632
    %v634 = vpop.f32.mrb[0].mxu0
    %635 = vmatprep.mubr.f32.mxu0 %v68
    %636 = vmatmul.mubr.f32.gmra.mrb[0].mxu0 %v67
    %v637 = vpop.f32.mrb[0].mxu0
    %v638 = vadd.f32 0.0, %v637
    %v639 = vpop.f32.mrb[0].mxu0
    %640 = vmatprep.mubr.f32.mxu0 %v71
    %641 = vmatmul.mubr.f32.gmra.mrb[0].mxu0 %v70
    %v642 = vpop.f32.mrb[0].mxu0
    %v643 = vadd.f32 0.0, %v642
    %v644 = vpop.f32.mrb[0].mxu0
    %645 = vmatprep.mubr.f32.mxu0 %v74
    %646 = vmatmul.mubr.f32.gmra.mrb[0].mxu0 %v73
    %v647 = vpop.f32.mrb[0].mxu0
    %v648 = vadd.f32 0.0, %v647
    %v649 = vpop.f32.mrb[0].mxu0
    %650 = vmatprep.mubr.f32.mxu0 %v77
    %651 = vmatmul.mubr.f32.gmra.mrb[0].mxu0 %v76
    %v652 = vpop.f32.mrb[0].mxu0
    %v653 = vadd.f32 0.0, %v652
    %v654 = vpop.f32.mrb[0].mxu0
    %655 = vmatprep.mubr.f32.mxu0 %v80
    %656 = vmatmul.mubr.f32.gmra.mrb[0].mxu0 %v79
    %v657 = vpop.f32.mrb[0].mxu0
    %v658 = vadd.f32 0.0, %v657
    %v659 = vpop.f32.mrb[0].mxu0
    %660 = vmatprep.mubr.f32.mxu0 %v83
    %661 = vmatmul.mubr.f32.gmra.mrb[0].mxu0 %v82
    %v662 = vpop.f32.mrb[0].mxu0
    %v663 = vadd.f32 0.0, %v662
    %v664 = vpop.f32.mrb[0].mxu0
    %665 = vmatprep.mubr.f32.mxu0 %v86
    %666 = vmatmul.mubr.f32.gmra.mrb[0].mxu0 %v85
    %v667 = vpop.f32.mrb[0].mxu0
    %v668 = vadd.f32 0.0, %v667
    %v669 = vpop.f32.mrb[0].mxu0
    %670 = vmatprep.mubr.f32.mxu0 %v89
    %671 = vmatmul.mubr.f32.gmra.mrb[0].mxu0 %v88
    %v672 = vpop.f32.mrb[0].mxu0
    %v673 = vadd.f32 0.0, %v672
    %v674 = vpop.f32.mrb[0].mxu0
    %675 = vmatprep.mubr.f32.mxu0 %v92
    %676 = vmatmul.mubr.f32.gmra.mrb[0].mxu0 %v91
    %v677 = vpop.f32.mrb[0].mxu0
    %v678 = vadd.f32 0.0, %v677
    %v679 = vpop.f32.mrb[0].mxu0
    %680 = vmatprep.mubr.f32.mxu0 %v95
    %681 = vmatmul.mubr.f32.gmra.mrb[0].mxu0 %v94
    %v682 = vpop.f32.mrb[0].mxu0
    %v683 = vadd.f32 0.0, %v682
    %v684 = vpop.f32.mrb[0].mxu0
    %685 = vmatprep.mubr.f32.mxu0 %v98
    %686 = vmatmul.mubr.f32.gmra.mrb[0].mxu0 %v97
    %v687 = vpop.f32.mrb[0].mxu0
    %v688 = vadd.f32 0.0, %v687
    %v689 = vpop.f32.mrb[0].mxu0
    %690 = vmatprep.mubr.f32.mxu0 %v101
    %691 = vmatmul.mubr.f32.gmra.mrb[0].mxu0 %v100
    %v692 = vpop.f32.mrb[0].mxu0
    %v693 = vadd.f32 0.0, %v692
    %v694 = vpop.f32.mrb[0].mxu0
    %695 = vmatprep.mubr.f32.mxu0 %v104
    %696 = vmatmul.mubr.f32.gmra.mrb[0].mxu0 %v103
    %v697 = vpop.f32.mrb[0].mxu0
    %v698 = vadd.f32 0.0, %v697
    %v699 = vpop.f32.mrb[0].mxu0
    %700 = vmatprep.mubr.f32.mxu0 %v107
    %701 = vmatmul.mubr.f32.gmra.mrb[0].mxu0 %v106
    %v702 = vpop.f32.mrb[0].mxu0
    %v703 = vadd.f32 0.0, %v702
    %v704 = vpop.f32.mrb[0].mxu0
    %705 = vmatprep.mubr.f32.mxu0 %v110
    %706 = vmatmul.mubr.f32.gmra.mrb[0].mxu0 %v109
    %v707 = vpop.f32.mrb[0].mxu0
    %v708 = vadd.f32 0.0, %v707
    %v709 = vpop.f32.mrb[0].mxu0
    %710 = vmatprep.mubr.f32.mxu0 %v113
    %711 = vmatmul.mubr.f32.gmra.mrb[0].mxu0 %v112
    %v712 = vpop.f32.mrb[0].mxu0
    %v713 = vadd.f32 0.0, %v712
    %v714 = vpop.f32.mrb[0].mxu0
    %715 = vmatprep.mubr.f32.mxu0 %v116
    %716 = vmatmul.mubr.f32.gmra.mrb[0].mxu0 %v115
    %v717 = vpop.f32.mrb[0].mxu0
    %v718 = vadd.f32 0.0, %v717
    %v719 = vpop.f32.mrb[0].mxu0
    %720 = vmatprep.mubr.f32.mxu0 %v119
    %721 = vmatmul.mubr.f32.gmra.mrb[0].mxu0 %v118
    %v722 = vpop.f32.mrb[0].mxu0
    %v723 = vadd.f32 0.0, %v722
    %v724 = vpop.f32.mrb[0].mxu0
    %725 = vmatprep.mubr.f32.mxu0 %v122
    %726 = vmatmul.mubr.f32.gmra.mrb[0].mxu0 %v121
    %v727 = vpop.f32.mrb[0].mxu0
    %v728 = vadd.f32 0.0, %v727
    %v729 = vpop.f32.mrb[0].mxu0
    %730 = vmatprep.mubr.f32.mxu0 %v125
    %731 = vmatmul.mubr.f32.gmra.mrb[0].mxu0 %v124
    %v732 = vpop.f32.mrb[0].mxu0
    %v733 = vadd.f32 0.0, %v732
    %v734 = vpop.f32.mrb[0].mxu0
    %735 = vmatprep.mubr.f32.mxu0 %v128
    %736 = vmatmul.mubr.f32.gmra.mrb[0].mxu0 %v127
    %v737 = vpop.f32.mrb[0].mxu0
    %v738 = vadd.f32 0.0, %v737
    %v739 = vpop.f32.mrb[0].mxu0
    %740 = vmatprep.mubr.f32.mxu0 %v131
    %741 = vmatmul.mubr.f32.gmra.mrb[0].mxu0 %v130
    %v742 = vpop.f32.mrb[0].mxu0
    %v743 = vadd.f32 0.0, %v742
    %v744 = vpop.f32.mrb[0].mxu0
    %745 = vmatprep.mubr.f32.mxu0 %v134
    %746 = vmatmul.mubr.f32.gmra.mrb[0].mxu0 %v133
    %v747 = vpop.f32.mrb[0].mxu0
    %v748 = vadd.f32 0.0, %v747
    %v749 = vpop.f32.mrb[0].mxu0
    %750 = vmatprep.mubr.f32.mxu0 %v137
    %751 = vmatmul.mubr.f32.gmra.mrb[0].mxu0 %v136
    %v752 = vpop.f32.mrb[0].mxu0
    %v753 = vadd.f32 0.0, %v752
    %v754 = vpop.f32.mrb[0].mxu0
    %755 = vmatprep.mubr.f32.mxu0 %v140
    %756 = vmatmul.mubr.f32.gmra.mrb[0].mxu0 %v139
    %v757 = vpop.f32.mrb[0].mxu0
    %v758 = vadd.f32 0.0, %v757
    %v759 = vpop.f32.mrb[0].mxu0
    %760 = vmatprep.mubr.f32.mxu0 %v143
    %761 = vmatmul.mubr.f32.gmra.mrb[0].mxu0 %v142
    %v762 = vpop.f32.mrb[0].mxu0
    %v763 = vadd.f32 0.0, %v762
    %v764 = vpop.f32.mrb[0].mxu0
    %765 = vmatprep.mubr.f32.mxu0 %v146
    %766 = vmatmul.mubr.f32.gmra.mrb[0].mxu0 %v145
    %v767 = vpop.f32.mrb[0].mxu0
    %v768 = vadd.f32 0.0, %v767
    %v769 = vpop.f32.mrb[0].mxu0
    %770 = vmatprep.mubr.f32.mxu0 %v149
    %771 = vmatmul.mubr.f32.gmra.mrb[0].mxu0 %v148
    %v772 = vpop.f32.mrb[0].mxu0
    %v773 = vadd.f32 0.0, %v772
    %v774 = vpop.f32.mrb[0].mxu0
    %775 = vmatprep.mubr.f32.mxu0 %v152
    %776 = vmatmul.mubr.f32.gmra.mrb[0].mxu0 %v151
    %v777 = vpop.f32.mrb[0].mxu0
    %v778 = vadd.f32 0.0, %v777
    %v779 = vpop.f32.mrb[0].mxu0
    %780 = vmatprep.mubr.f32.mxu0 %v155
    %781 = vmatmul.mubr.f32.gmra.mrb[0].mxu0 %v154
    %v782 = vpop.f32.mrb[0].mxu0
    %v783 = vadd.f32 0.0, %v782
    %v784 = vpop.f32.mrb[0].mxu0
    %785 = vmatprep.mubr.f32.mxu0 %v158
    %786 = vmatmul.mubr.f32.gmra.mrb[0].mxu0 %v157
    %v787 = vpop.f32.mrb[0].mxu0
    %v788 = vadd.f32 0.0, %v787
    %v789 = vpop.f32.mrb[0].mxu0
    %790 = vmatprep.mubr.f32.mxu0 %v161
    %791 = vmatmul.mubr.f32.gmra.mrb[0].mxu0 %v160
    %v792 = vpop.f32.mrb[0].mxu0
    %v793 = vadd.f32 0.0, %v792
    %v794 = vpop.f32.mrb[0].mxu0
    %795 = vmatprep.mubr.f32.mxu0 %v164
    %796 = vmatmul.mubr.f32.gmra.mrb[0].mxu0 %v163
    %v797 = vpop.f32.mrb[0].mxu0
    %v798 = vadd.f32 0.0, %v797
    %v799 = vpop.f32.mrb[0].mxu0
    %800 = vmatprep.mubr.f32.mxu0 %v167
    %801 = vmatmul.mubr.f32.gmra.mrb[0].mxu0 %v166
    %v802 = vpop.f32.mrb[0].mxu0
    %v803 = vadd.f32 0.0, %v802
    %v804 = vpop.f32.mrb[0].mxu0
    %805 = vmatprep.mubr.f32.mxu0 %v170
    %806 = vmatmul.mubr.f32.gmra.mrb[0].mxu0 %v169
    %v807 = vpop.f32.mrb[0].mxu0
    %v808 = vadd.f32 0.0, %v807
    %v809 = vpop.f32.mrb[0].mxu0
    %810 = vmatprep.mubr.f32.mxu0 %v173
    %811 = vmatmul.mubr.f32.gmra.mrb[0].mxu0 %v172
    %v812 = vpop.f32.mrb[0].mxu0
    %v813 = vadd.f32 0.0, %v812
    %v814 = vpop.f32.mrb[0].mxu0
    %815 = vmatprep.mubr.f32.mxu0 %v176
    %816 = vmatmul.mubr.f32.gmra.mrb[0].mxu0 %v175
    %v817 = vpop.f32.mrb[0].mxu0
    %v818 = vadd.f32 0.0, %v817
    %v819 = vpop.f32.mrb[0].mxu0
    %820 = vmatprep.mubr.f32.mxu0 %v179
    %821 = vmatmul.mubr.f32.gmra.mrb[0].mxu0 %v178
    %v822 = vpop.f32.mrb[0].mxu0
    %v823 = vadd.f32 0.0, %v822
    %v824 = vpop.f32.mrb[0].mxu0
    %825 = vmatprep.mubr.f32.mxu0 %v182
    %826 = vmatmul.mubr.f32.gmra.mrb[0].mxu0 %v181
    %v827 = vpop.f32.mrb[0].mxu0
    %v828 = vadd.f32 0.0, %v827
    %v829 = vpop.f32.mrb[0].mxu0
    %830 = vmatprep.mubr.f32.mxu0 %v185
    %831 = vmatmul.mubr.f32.gmra.mrb[0].mxu0 %v184
    %v832 = vpop.f32.mrb[0].mxu0
    %v833 = vadd.f32 0.0, %v832
    %v834 = vpop.f32.mrb[0].mxu0
    %835 = vmatprep.mubr.f32.mxu0 %v188
    %836 = vmatmul.mubr.f32.gmra.mrb[0].mxu0 %v187
    %v837 = vpop.f32.mrb[0].mxu0
    %v838 = vadd.f32 0.0, %v837
    %v839 = vpop.f32.mrb[0].mxu0
    %840 = vmatprep.mubr.f32.mxu0 %v191
    %841 = vmatmul.mubr.f32.gmra.mrb[0].mxu0 %v190
    %v842 = vpop.f32.mrb[0].mxu0
    %v843 = vadd.f32 0.0, %v842
    %v844 = vpop.f32.mrb[0].mxu0
    %845 = vmatprep.mubr.f32.mxu0 %v194
    %846 = vmatmul.mubr.f32.gmra.mrb[0].mxu0 %v193
    %v847 = vpop.f32.mrb[0].mxu0
    %v848 = vadd.f32 0.0, %v847
    %v849 = vpop.f32.mrb[0].mxu0
    %850 = vmatprep.mubr.f32.mxu0 %v197
    %851 = vmatmul.mubr.f32.gmra.mrb[0].mxu0 %v196
    %v852 = vpop.f32.mrb[0].mxu0
    %v853 = vadd.f32 0.0, %v852
    %v854 = vpop.f32.mrb[0].mxu0
    %855 = vmatprep.mubr.f32.mxu0 %v200
    %856 = vmatmul.mubr.f32.gmra.mrb[0].mxu0 %v199
    %v857 = vpop.f32.mrb[0].mxu0
    %v858 = vadd.f32 0.0, %v857
    %v859 = vpop.f32.mrb[0].mxu0
    %860 = vmatprep.mubr.f32.mxu0 %v203
    %861 = vmatmul.mubr.f32.gmra.mrb[0].mxu0 %v202
    %v862 = vpop.f32.mrb[0].mxu0
    %v863 = vadd.f32 0.0, %v862
    %v864 = vpop.f32.mrb[0].mxu0
    %865 = vmatprep.mubr.f32.mxu0 %v206
    %866 = vmatmul.mubr.f32.gmra.mrb[0].mxu0 %v205
    %v867 = vpop.f32.mrb[0].mxu0
    %v868 = vadd.f32 0.0, %v867
    %v869 = vpop.f32.mrb[0].mxu0
    %870 = vmatprep.mubr.f32.mxu0 %v209
    %871 = vmatmul.mubr.f32.gmra.mrb[0].mxu0 %v208
    %v872 = vpop.f32.mrb[0].mxu0
    %v873 = vadd.f32 0.0, %v872
    %v874 = vpop.f32.mrb[0].mxu0
    %875 = vmatprep.mubr.f32.mxu0 %v212
    %876 = vmatmul.mubr.f32.gmra.mrb[0].mxu0 %v211
    %v877 = vpop.f32.mrb[0].mxu0
    %v878 = vadd.f32 0.0, %v877
    %v879 = vpop.f32.mrb[0].mxu0
    %880 = vmatprep.mubr.f32.mxu0 %v215
    %881 = vmatmul.mubr.f32.gmra.mrb[0].mxu0 %v214
    %v882 = vpop.f32.mrb[0].mxu0
    %v883 = vadd.f32 0.0, %v882
    %v884 = vpop.f32.mrb[0].mxu0
    %885 = vmatprep.mubr.f32.mxu0 %v218
    %886 = vmatmul.mubr.f32.gmra.mrb[0].mxu0 %v217
    %v887 = vpop.f32.mrb[0].mxu0
    %v888 = vadd.f32 0.0, %v887
    %v889 = vpop.f32.mrb[0].mxu0
    %890 = vmatprep.mubr.f32.mxu0 %v221
    %891 = vmatmul.mubr.f32.gmra.mrb[0].mxu0 %v220
    %v892 = vpop.f32.mrb[0].mxu0
    %v893 = vadd.f32 0.0, %v892
    %v894 = vpop.f32.mrb[0].mxu0
    %895 = vmatprep.mubr.f32.mxu0 %v224
    %896 = vmatmul.mubr.f32.gmra.mrb[0].mxu0 %v223
    %v897 = vpop.f32.mrb[0].mxu0
    %v898 = vadd.f32 0.0, %v897
    %v899 = vpop.f32.mrb[0].mxu0
    %900 = vmatprep.mubr.f32.mxu0 %v227
    %901 = vmatmul.mubr.f32.gmra.mrb[0].mxu0 %v226
    %v902 = vpop.f32.mrb[0].mxu0
    %v903 = vadd.f32 0.0, %v902
    %v904 = vpop.f32.mrb[0].mxu0
    %905 = vmatprep.mubr.f32.mxu0 %v230
    %906 = vmatmul.mubr.f32.gmra.mrb[0].mxu0 %v229
    %v907 = vpop.f32.mrb[0].mxu0
    %v908 = vadd.f32 0.0, %v907
    %v909 = vpop.f32.mrb[0].mxu0
    %910 = vmatprep.mubr.f32.mxu0 %v233
    %911 = vmatmul.mubr.f32.gmra.mrb[0].mxu0 %v232
    %v912 = vpop.f32.mrb[0].mxu0
    %v913 = vadd.f32 0.0, %v912
    %v914 = vpop.f32.mrb[0].mxu0
    %915 = vmatprep.mubr.f32.mxu0 %v236
    %916 = vmatmul.mubr.f32.gmra.mrb[0].mxu0 %v235
    %v917 = vpop.f32.mrb[0].mxu0
    %v918 = vadd.f32 0.0, %v917
    %v919 = vpop.f32.mrb[0].mxu0
    %920 = vmatprep.mubr.f32.mxu0 %v239
    %921 = vmatmul.mubr.f32.gmra.mrb[0].mxu0 %v238
    %v922 = vpop.f32.mrb[0].mxu0
    %v923 = vadd.f32 0.0, %v922
    %v924 = vpop.f32.mrb[0].mxu0
    %925 = vmatprep.mubr.f32.mxu0 %v242
    %926 = vmatmul.mubr.f32.gmra.mrb[0].mxu0 %v241
    %v927 = vpop.f32.mrb[0].mxu0
    %v928 = vadd.f32 0.0, %v927
    %v929 = vpop.f32.mrb[0].mxu0
    %930 = vmatprep.mubr.f32.mxu0 %v245
    %931 = vmatmul.mubr.f32.gmra.mrb[0].mxu0 %v244
    %v932 = vpop.f32.mrb[0].mxu0
    %v933 = vadd.f32 0.0, %v932
    %v934 = vpop.f32.mrb[0].mxu0
    %935 = vmatprep.mubr.f32.mxu0 %v248
    %936 = vmatmul.mubr.f32.gmra.mrb[0].mxu0 %v247
    %v937 = vpop.f32.mrb[0].mxu0
    %v938 = vadd.f32 0.0, %v937
    %v939 = vpop.f32.mrb[0].mxu0
    %940 = vmatprep.mubr.f32.mxu0 %v251
    %941 = vmatmul.mubr.f32.gmra.mrb[0].mxu0 %v250
    %v942 = vpop.f32.mrb[0].mxu0
    %v943 = vadd.f32 0.0, %v942
    %v944 = vpop.f32.mrb[0].mxu0
    %945 = vmatprep.mubr.f32.mxu0 %v254
    %946 = vmatmul.mubr.f32.gmra.mrb[0].mxu0 %v253
    %v947 = vpop.f32.mrb[0].mxu0
    %v948 = vadd.f32 0.0, %v947
    %v949 = vpop.f32.mrb[0].mxu0
    %950 = vmatprep.mubr.f32.mxu0 %v257
    %951 = vmatmul.mubr.f32.gmra.mrb[0].mxu0 %v256
    %v952 = vpop.f32.mrb[0].mxu0
    %v953 = vadd.f32 0.0, %v952
    %v954 = vpop.f32.mrb[0].mxu0
    %955 = vmatprep.mubr.f32.mxu0 %v260
    %956 = vmatmul.mubr.f32.gmra.mrb[0].mxu0 %v259
    %v957 = vpop.f32.mrb[0].mxu0
    %v958 = vadd.f32 0.0, %v957
    %v959 = vpop.f32.mrb[0].mxu0
    %960 = vmatprep.mubr.f32.mxu0 %v263
    %961 = vmatmul.mubr.f32.gmra.mrb[0].mxu0 %v262
    %v962 = vpop.f32.mrb[0].mxu0
    %v963 = vadd.f32 0.0, %v962
    %v964 = vpop.f32.mrb[0].mxu0
    %965 = vmatprep.mubr.f32.mxu0 %v266
    %966 = vmatmul.mubr.f32.gmra.mrb[0].mxu0 %v265
    %v967 = vpop.f32.mrb[0].mxu0
    %v968 = vadd.f32 0.0, %v967
    %v969 = vpop.f32.mrb[0].mxu0
    %970 = vmatprep.mubr.f32.mxu0 %v269
    %971 = vmatmul.mubr.f32.gmra.mrb[0].mxu0 %v268
    %v972 = vpop.f32.mrb[0].mxu0
    %v973 = vadd.f32 0.0, %v972
    %v974 = vpop.f32.mrb[0].mxu0
    %975 = vmatprep.mubr.f32.mxu0 %v272
    %976 = vmatmul.mubr.f32.gmra.mrb[0].mxu0 %v271
    %v977 = vpop.f32.mrb[0].mxu0
    %v978 = vadd.f32 0.0, %v977
    %v979 = vpop.f32.mrb[0].mxu0
    %980 = vmatprep.mubr.f32.mxu0 %v275
    %981 = vmatmul.mubr.f32.gmra.mrb[0].mxu0 %v274
    %v982 = vpop.f32.mrb[0].mxu0
    %v983 = vadd.f32 0.0, %v982
    %v984 = vpop.f32.mrb[0].mxu0
    %985 = vmatprep.mubr.f32.mxu0 %v278
    %986 = vmatmul.mubr.f32.gmra.mrb[0].mxu0 %v277
    %v987 = vpop.f32.mrb[0].mxu0
    %v988 = vadd.f32 0.0, %v987
    %v989 = vpop.f32.mrb[0].mxu0
    %990 = vmatprep.mubr.f32.mxu0 %v281
    %991 = vmatmul.mubr.f32.gmra.mrb[0].mxu0 %v280
    %v992 = vpop.f32.mrb[0].mxu0
    %v993 = vadd.f32 0.0, %v992
    %v994 = vpop.f32.mrb[0].mxu0
    %995 = vmatprep.mubr.f32.mxu0 %v284
    %996 = vmatmul.mubr.f32.gmra.mrb[0].mxu0 %v283
    %v997 = vpop.f32.mrb[0].mxu0
    %v998 = vadd.f32 0.0, %v997
    %v999 = vpop.f32.mrb[0].mxu0
    %1000 = vmatprep.mubr.f32.mxu0 %v287
    %1001 = vmatmul.mubr.f32.gmra.mrb[0].mxu0 %v286
    %v1002 = vpop.f32.mrb[0].mxu0
    %v1003 = vadd.f32 0.0, %v1002
    %v1004 = vpop.f32.mrb[0].mxu0
    %1005 = vmatprep.mubr.f32.mxu0 %v290
    %1006 = vmatmul.mubr.f32.gmra.mrb[0].mxu0 %v289
    %v1007 = vpop.f32.mrb[0].mxu0
    %v1008 = vadd.f32 0.0, %v1007
    %v1009 = vpop.f32.mrb[0].mxu0
    %1010 = vmatprep.mubr.f32.mxu0 %v293
    %1011 = vmatmul.mubr.f32.gmra.mrb[0].mxu0 %v292
    %v1012 = vpop.f32.mrb[0].mxu0
    %v1013 = vadd.f32 0.0, %v1012
    %v1014 = vpop.f32.mrb[0].mxu0
    %1015 = vmatprep.mubr.f32.mxu0 %v296
    %1016 = vmatmul.mubr.f32.gmra.mrb[0].mxu0 %v295
    %v1017 = vpop.f32.mrb[0].mxu0
    %v1018 = vadd.f32 0.0, %v1017
    %v1019 = vpop.f32.mrb[0].mxu0
    %1020 = vmatprep.mubr.f32.mxu0 %v299
    %1021 = vmatmul.mubr.f32.gmra.mrb[0].mxu0 %v298
    %v1022 = vpop.f32.mrb[0].mxu0
    %v1023 = vadd.f32 0.0, %v1022
    %v1024 = vpop.f32.mrb[0].mxu0
    %1025 = vmatprep.mubr.f32.mxu0 %v302
    %1026 = vmatmul.mubr.f32.gmra.mrb[0].mxu0 %v301
    %v1027 = vpop.f32.mrb[0].mxu0
    %v1028 = vadd.f32 0.0, %v1027
    %v1029 = vpop.f32.mrb[0].mxu0
    %1030 = vmatprep.mubr.f32.mxu0 %v305
    %1031 = vmatmul.mubr.f32.gmra.mrb[0].mxu0 %v304
    %v1032 = vpop.f32.mrb[0].mxu0
    %v1033 = vadd.f32 0.0, %v1032
    %v1034 = vpop.f32.mrb[0].mxu0
    %1035 = vmatprep.mubr.f32.mxu0 %v308
    %1036 = vmatmul.mubr.f32.gmra.mrb[0].mxu0 %v307
    %v1037 = vpop.f32.mrb[0].mxu0
    %v1038 = vadd.f32 0.0, %v1037
    %v1039 = vpop.f32.mrb[0].mxu0
    %1040 = vmatprep.mubr.f32.mxu0 %v311
    %1041 = vmatmul.mubr.f32.gmra.mrb[0].mxu0 %v310
    %v1042 = vpop.f32.mrb[0].mxu0
    %v1043 = vadd.f32 0.0, %v1042
    %v1044 = vpop.f32.mrb[0].mxu0
    %1045 = vmatprep.mubr.f32.mxu0 %v314
    %1046 = vmatmul.mubr.f32.gmra.mrb[0].mxu0 %v313
    %v1047 = vpop.f32.mrb[0].mxu0
    %v1048 = vadd.f32 0.0, %v1047
    %v1049 = vpop.f32.mrb[0].mxu0
    %1050 = vmatprep.mubr.f32.mxu0 %v317
    %1051 = vmatmul.mubr.f32.gmra.mrb[0].mxu0 %v316
    %v1052 = vpop.f32.mrb[0].mxu0
    %v1053 = vadd.f32 0.0, %v1052
    %v1054 = vpop.f32.mrb[0].mxu0
    %1055 = vmatprep.mubr.f32.mxu0 %v320
    %1056 = vmatmul.mubr.f32.gmra.mrb[0].mxu0 %v319
    %v1057 = vpop.f32.mrb[0].mxu0
    %v1058 = vadd.f32 0.0, %v1057
    %v1059 = vpop.f32.mrb[0].mxu0
    %1060 = vmatprep.mubr.f32.mxu0 %v323
    %1061 = vmatmul.mubr.f32.gmra.mrb[0].mxu0 %v322
    %v1062 = vpop.f32.mrb[0].mxu0
    %v1063 = vadd.f32 0.0, %v1062
    %v1064 = vpop.f32.mrb[0].mxu0
    %1065 = vmatprep.mubr.f32.mxu0 %v326
    %1066 = vmatmul.mubr.f32.gmra.mrb[0].mxu0 %v325
    %v1067 = vpop.f32.mrb[0].mxu0
    %v1068 = vadd.f32 0.0, %v1067
    %v1069 = vpop.f32.mrb[0].mxu0
    %1070 = vmatprep.mubr.f32.mxu0 %v329
    %1071 = vmatmul.mubr.f32.gmra.mrb[0].mxu0 %v328
    %v1072 = vpop.f32.mrb[0].mxu0
    %v1073 = vadd.f32 0.0, %v1072
    %v1074 = vpop.f32.mrb[0].mxu0
    %1075 = vmatprep.mubr.f32.mxu0 %v332
    %1076 = vmatmul.mubr.f32.gmra.mrb[0].mxu0 %v331
    %v1077 = vpop.f32.mrb[0].mxu0
    %v1078 = vadd.f32 0.0, %v1077
    %v1079 = vpop.f32.mrb[0].mxu0
    %1080 = vmatprep.mubr.f32.mxu0 %v335
    %1081 = vmatmul.mubr.f32.gmra.mrb[0].mxu0 %v334
    %v1082 = vpop.f32.mrb[0].mxu0
    %v1083 = vadd.f32 0.0, %v1082
    %v1084 = vpop.f32.mrb[0].mxu0
    %1085 = vmatprep.mubr.f32.mxu0 %v338
    %1086 = vmatmul.mubr.f32.gmra.mrb[0].mxu0 %v337
    %v1087 = vpop.f32.mrb[0].mxu0
    %v1088 = vadd.f32 0.0, %v1087
    %v1089 = vpop.f32.mrb[0].mxu0
    %1090 = vmatprep.mubr.f32.mxu0 %v341
    %1091 = vmatmul.mubr.f32.gmra.mrb[0].mxu0 %v340
    %v1092 = vpop.f32.mrb[0].mxu0
    %v1093 = vadd.f32 0.0, %v1092
    %v1094 = vpop.f32.mrb[0].mxu0
    %1095 = vmatprep.mubr.f32.mxu0 %v344
    %1096 = vmatmul.mubr.f32.gmra.mrb[0].mxu0 %v343
    %v1097 = vpop.f32.mrb[0].mxu0
    %v1098 = vadd.f32 0.0, %v1097
    %v1099 = vpop.f32.mrb[0].mxu0
    %1100 = vmatprep.mubr.f32.mxu0 %v347
    %1101 = vmatmul.mubr.f32.gmra.mrb[0].mxu0 %v346
    %v1102 = vpop.f32.mrb[0].mxu0
    %v1103 = vadd.f32 0.0, %v1102
    %v1104 = vpop.f32.mrb[0].mxu0
    %1105 = vmatprep.mubr.f32.mxu0 %v350
    %1106 = vmatmul.mubr.f32.gmra.mrb[0].mxu0 %v349
    %v1107 = vpop.f32.mrb[0].mxu0
    %v1108 = vadd.f32 0.0, %v1107
    %v1109 = vpop.f32.mrb[0].mxu0
    %1110 = vmatprep.mubr.f32.mxu0 %v353
    %1111 = vmatmul.mubr.f32.gmra.mrb[0].mxu0 %v352
    %v1112 = vpop.f32.mrb[0].mxu0
    %v1113 = vadd.f32 0.0, %v1112
    %v1114 = vpop.f32.mrb[0].mxu0
    %1115 = vmatprep.mubr.f32.mxu0 %v356
    %1116 = vmatmul.mubr.f32.gmra.mrb[0].mxu0 %v355
    %v1117 = vpop.f32.mrb[0].mxu0
    %v1118 = vadd.f32 0.0, %v1117
    %v1119 = vpop.f32.mrb[0].mxu0
    %1120 = vmatprep.mubr.f32.mxu0 %v359
    %1121 = vmatmul.mubr.f32.gmra.mrb[0].mxu0 %v358
    %v1122 = vpop.f32.mrb[0].mxu0
    %v1123 = vadd.f32 0.0, %v1122
    %v1124 = vpop.f32.mrb[0].mxu0
    %1125 = vmatprep.mubr.f32.mxu0 %v362
    %1126 = vmatmul.mubr.f32.gmra.mrb[0].mxu0 %v361
    %v1127 = vpop.f32.mrb[0].mxu0
    %v1128 = vadd.f32 0.0, %v1127
    %v1129 = vpop.f32.mrb[0].mxu0
    %1130 = vmatprep.mubr.f32.mxu0 %v365
    %1131 = vmatmul.mubr.f32.gmra.mrb[0].mxu0 %v364
    %v1132 = vpop.f32.mrb[0].mxu0
    %v1133 = vadd.f32 0.0, %v1132
    %v1134 = vpop.f32.mrb[0].mxu0
    %1135 = vmatprep.mubr.f32.mxu0 %v368
    %1136 = vmatmul.mubr.f32.gmra.mrb[0].mxu0 %v367
    %v1137 = vpop.f32.mrb[0].mxu0
    %v1138 = vadd.f32 0.0, %v1137
    %v1139 = vpop.f32.mrb[0].mxu0
    %1140 = vmatprep.mubr.f32.mxu0 %v371
    %1141 = vmatmul.mubr.f32.gmra.mrb[0].mxu0 %v370
    %v1142 = vpop.f32.mrb[0].mxu0
    %v1143 = vadd.f32 0.0, %v1142
    %v1144 = vpop.f32.mrb[0].mxu0
    %1145 = vmatprep.mubr.f32.mxu0 %v374
    %1146 = vmatmul.mubr.f32.gmra.mrb[0].mxu0 %v373
    %v1147 = vpop.f32.mrb[0].mxu0
    %v1148 = vadd.f32 0.0, %v1147
    %v1149 = vpop.f32.mrb[0].mxu0
    %1150 = vmatprep.mubr.f32.mxu0 %v377
    %1151 = vmatmul.mubr.f32.gmra.mrb[0].mxu0 %v376
    %v1152 = vpop.f32.mrb[0].mxu0
    %v1153 = vadd.f32 0.0, %v1152
    %v1154 = vpop.f32.mrb[0].mxu0
    %1155 = vmatprep.mubr.f32.mxu0 %v380
    %1156 = vmatmul.mubr.f32.gmra.mrb[0].mxu0 %v379
    %v1157 = vpop.f32.mrb[0].mxu0
    %v1158 = vadd.f32 0.0, %v1157
    %v1159 = vpop.f32.mrb[0].mxu0
    %1160 = vmatprep.mubr.f32.mxu0 %v383
    %1161 = vmatmul.mubr.f32.gmra.mrb[0].mxu0 %v382
    %v1162 = vpop.f32.mrb[0].mxu0
    %v1163 = vadd.f32 0.0, %v1162
    %v1164 = vpop.f32.mrb[0].mxu0
    %1165 = vmatprep.mubr.f32.mxu0 %v386
    %1166 = vmatmul.mubr.f32.gmra.mrb[0].mxu0 %v385
    %v1167 = vpop.f32.mrb[0].mxu0
    %v1168 = vadd.f32 0.0, %v1167
    %v1169 = vpop.f32.mrb[0].mxu0
    %1170 = vmatprep.mubr.f32.mxu0 %v389
    %1171 = vmatmul.mubr.f32.gmra.mrb[0].mxu0 %v388
    %v1172 = vpop.f32.mrb[0].mxu0
    %v1173 = vadd.f32 0.0, %v1172
    %v1174 = vpop.f32.mrb[0].mxu0
    %1175 = vmatprep.mubr.f32.mxu0 %v392
    %1176 = vmatmul.mubr.f32.gmra.mrb[0].mxu0 %v391
    %v1177 = vpop.f32.mrb[0].mxu0
    %v1178 = vadd.f32 0.0, %v1177
    %v1179 = vpop.f32.mrb[0].mxu0
    %1180 = vmatprep.mubr.f32.mxu0 %v395
    %1181 = vmatmul.mubr.f32.gmra.mrb[0].mxu0 %v394
    %v1182 = vpop.f32.mrb[0].mxu0
    %v1183 = vadd.f32 0.0, %v1182
    %v1184 = vpop.f32.mrb[0].mxu0
    %1185 = vmatprep.mubr.f32.mxu0 %v398
    %1186 = vmatmul.mubr.f32.gmra.mrb[0].mxu0 %v397
    %v1187 = vpop.f32.mrb[0].mxu0
    %v1188 = vadd.f32 0.0, %v1187
    %v1189 = vpop.f32.mrb[0].mxu0
    %1190 = vmatprep.mubr.f32.mxu0 %v401
    %1191 = vmatmul.mubr.f32.gmra.mrb[0].mxu0 %v400
    %v1192 = vpop.f32.mrb[0].mxu0
    %v1193 = vadd.f32 0.0, %v1192
    %v1194 = vpop.f32.mrb[0].mxu0
    %1195 = vmatprep.mubr.f32.mxu0 %v404
    %1196 = vmatmul.mubr.f32.gmra.mrb[0].mxu0 %v403
    %v1197 = vpop.f32.mrb[0].mxu0
    %v1198 = vadd.f32 0.0, %v1197
    %v1199 = vpop.f32.mrb[0].mxu0
    %1200 = vmatprep.mubr.f32.mxu0 %v407
    %1201 = vmatmul.mubr.f32.gmra.mrb[0].mxu0 %v406
    %v1202 = vpop.f32.mrb[0].mxu0
    %v1203 = vadd.f32 0.0, %v1202
    %v1204 = vpop.f32.mrb[0].mxu0
    %1205 = vmatprep.mubr.f32.mxu0 %v410
    %1206 = vmatmul.mubr.f32.gmra.mrb[0].mxu0 %v409
    %v1207 = vpop.f32.mrb[0].mxu0
    %v1208 = vadd.f32 0.0, %v1207
    %v1209 = vpop.f32.mrb[0].mxu0
    %1210 = vmatprep.mubr.f32.mxu0 %v413
    %1211 = vmatmul.mubr.f32.gmra.mrb[0].mxu0 %v412
    %v1212 = vpop.f32.mrb[0].mxu0
    %v1213 = vadd.f32 0.0, %v1212
    %v1214 = vpop.f32.mrb[0].mxu0
    %1215 = vmatprep.mubr.f32.mxu0 %v416
    %1216 = vmatmul.mubr.f32.gmra.mrb[0].mxu0 %v415
    %v1217 = vpop.f32.mrb[0].mxu0
    %v1218 = vadd.f32 0.0, %v1217
    %v1219 = vpop.f32.mrb[0].mxu0
    %1220 = vmatprep.mubr.f32.mxu0 %v419
    %1221 = vmatmul.mubr.f32.gmra.mrb[0].mxu0 %v418
    %v1222 = vpop.f32.mrb[0].mxu0
    %v1223 = vadd.f32 0.0, %v1222
    %v1224 = vpop.f32.mrb[0].mxu0
    %1225 = vmatprep.mubr.f32.mxu0 %v422
    %1226 = vmatmul.mubr.f32.gmra.mrb[0].mxu0 %v421
    %v1227 = vpop.f32.mrb[0].mxu0
    %v1228 = vadd.f32 0.0, %v1227
    %v1229 = vpop.f32.mrb[0].mxu0
    %1230 = vmatprep.mubr.f32.mxu0 %v425
    %1231 = vmatmul.mubr.f32.gmra.mrb[0].mxu0 %v424
    %v1232 = vpop.f32.mrb[0].mxu0
    %v1233 = vadd.f32 0.0, %v1232
    %v1234 = vpop.f32.mrb[0].mxu0
    %1235 = vmatprep.mubr.f32.mxu0 %v428
    %1236 = vmatmul.mubr.f32.gmra.mrb[0].mxu0 %v427
    %v1237 = vpop.f32.mrb[0].mxu0
    %v1238 = vadd.f32 0.0, %v1237
    %v1239 = vpop.f32.mrb[0].mxu0
    %1240 = vmatprep.mubr.f32.mxu0 %v431
    %1241 = vmatmul.mubr.f32.gmra.mrb[0].mxu0 %v430
    %v1242 = vpop.f32.mrb[0].mxu0
    %v1243 = vadd.f32 0.0, %v1242
    %v1244 = vpop.f32.mrb[0].mxu0
    %1245 = vmatprep.mubr.f32.mxu0 %v434
    %1246 = vmatmul.mubr.f32.gmra.mrb[0].mxu0 %v433
    %v1247 = vpop.f32.mrb[0].mxu0
    %v1248 = vadd.f32 0.0, %v1247
    %v1249 = vpop.f32.mrb[0].mxu0
    %1250 = vmatprep.mubr.f32.mxu0 %v437
    %1251 = vmatmul.mubr.f32.gmra.mrb[0].mxu0 %v436
    %v1252 = vpop.f32.mrb[0].mxu0
    %v1253 = vadd.f32 0.0, %v1252
    %v1254 = vpop.f32.mrb[0].mxu0
    %1255 = vmatprep.mubr.f32.mxu0 %v440
    %1256 = vmatmul.mubr.f32.gmra.mrb[0].mxu0 %v439
    %v1257 = vpop.f32.mrb[0].mxu0
    %v1258 = vadd.f32 0.0, %v1257
    %v1259 = vpop.f32.mrb[0].mxu0
    %1260 = vmatprep.mubr.f32.mxu0 %v443
    %1261 = vmatmul.mubr.f32.gmra.mrb[0].mxu0 %v442
    %v1262 = vpop.f32.mrb[0].mxu0
    %v1263 = vadd.f32 0.0, %v1262
    %v1264 = vpop.f32.mrb[0].mxu0
    %1265 = vmatprep.mubr.f32.mxu0 %v446
    %1266 = vmatmul.mubr.f32.gmra.mrb[0].mxu0 %v445
    %v1267 = vpop.f32.mrb[0].mxu0
    %v1268 = vadd.f32 0.0, %v1267
    %v1269 = vpop.f32.mrb[0].mxu0
    %1270 = vmatprep.mubr.f32.mxu0 %v449
    %1271 = vmatmul.mubr.f32.gmra.mrb[0].mxu0 %v448
    %v1272 = vpop.f32.mrb[0].mxu0
    %v1273 = vadd.f32 0.0, %v1272
    %v1274 = vpop.f32.mrb[0].mxu0
    %1275 = vmatprep.mubr.f32.mxu0 %v452
    %1276 = vmatmul.mubr.f32.gmra.mrb[0].mxu0 %v451
    %v1277 = vpop.f32.mrb[0].mxu0
    %v1278 = vadd.f32 0.0, %v1277
    %v1279 = vpop.f32.mrb[0].mxu0
    %1280 = vmatprep.mubr.f32.mxu0 %v455
    %1281 = vmatmul.mubr.f32.gmra.mrb[0].mxu0 %v454
    %v1282 = vpop.f32.mrb[0].mxu0
    %v1283 = vadd.f32 0.0, %v1282
    %v1284 = vpop.f32.mrb[0].mxu0
    %1285 = vmatprep.mubr.f32.mxu0 %v458
    %1286 = vmatmul.mubr.f32.gmra.mrb[0].mxu0 %v457
    %v1287 = vpop.f32.mrb[0].mxu0
    %v1288 = vadd.f32 0.0, %v1287
    %v1289 = vpop.f32.mrb[0].mxu0
    %1290 = vmatprep.mubr.f32.mxu0 %v461
    %1291 = vmatmul.mubr.f32.gmra.mrb[0].mxu0 %v460
    %v1292 = vpop.f32.mrb[0].mxu0
    %v1293 = vadd.f32 0.0, %v1292
    %v1294 = vpop.f32.mrb[0].mxu0
    %1295 = vdwg.mxu0
    %1296 = vmatprep.subr.mxu0 0.0
    %1297 = vmatpush1.msra.mxu0 %v495
    %1298 = vmatprep.subr.mxu0 0.0
    %1299 = vmatpush1.msra.mxu0 %v496
    %1300 = vmatprep.subr.mxu0 0.0
    %1301 = vmatpush1.msra.mxu0 %v497
    %1302 = vmatprep.subr.mxu0 0.0
    %1303 = vmatpush1.msra.mxu0 %v498
    %1304 = vmatprep.subr.mxu0 0.0
    %1305 = vmatpush1.msra.mxu0 %v499
    %1306 = vmatprep.subr.mxu0 0.0
    %1307 = vmatpush1.msra.mxu0 %v500
    %1308 = vmatprep.subr.mxu0 0.0
    %1309 = vmatpush1.msra.mxu0 %v501
    %1310 = vmatprep.subr.mxu0 0.0
    %1311 = vmatpush1.msra.mxu0 %v502
    %1312 = vmatprep.subr.mxu0 0.0
    %1313 = vmatpush1.msra.mxu0 %v503
    %1314 = vmatprep.subr.mxu0 0.0
    %1315 = vmatpush1.msra.mxu0 %v504
    %1316 = vmatprep.subr.mxu0 0.0
    %1317 = vmatpush1.msra.mxu0 %v505
    %1318 = vmatprep.subr.mxu0 0.0
    %1319 = vmatpush1.msra.mxu0 %v506
    %1320 = vmatprep.subr.mxu0 0.0
    %1321 = vmatpush1.msra.mxu0 %v507
    %1322 = vmatprep.subr.mxu0 0.0
    %1323 = vmatpush1.msra.mxu0 %v508
    %1324 = vmatprep.subr.mxu0 0.0
    %1325 = vmatpush1.msra.mxu0 %v509
    %1326 = vmatprep.subr.mxu0 0.0
    %1327 = vmatpush1.msra.mxu0 %v510
    %1328 = vmatprep.subr.mxu0 0.0
    %1329 = vmatpush1.msra.mxu0 0.0
    %1330 = vmatprep.subr.mxu0 0.0
    %1331 = vmatpush1.msra.mxu0 0.0
    %1332 = vmatprep.subr.mxu0 0.0
    %1333 = vmatpush1.msra.mxu0 0.0
    %1334 = vmatprep.subr.mxu0 0.0
    %1335 = vmatpush1.msra.mxu0 0.0
    %1336 = vmatprep.subr.mxu0 0.0
    %1337 = vmatpush1.msra.mxu0 0.0
    %1338 = vmatprep.subr.mxu0 0.0
    %1339 = vmatpush1.msra.mxu0 0.0
    %1340 = vmatprep.subr.mxu0 0.0
    %1341 = vmatpush1.msra.mxu0 0.0
    %1342 = vmatprep.subr.mxu0 0.0
    %1343 = vmatpush1.msra.mxu0 0.0
    %1344 = vmatprep.subr.mxu0 0.0
    %1345 = vmatpush1.msra.mxu0 0.0
    %1346 = vmatprep.subr.mxu0 0.0
    %1347 = vmatpush1.msra.mxu0 0.0
    %1348 = vmatprep.subr.mxu0 0.0
    %1349 = vmatpush1.msra.mxu0 0.0
    %1350 = vmatprep.subr.mxu0 0.0
    %1351 = vmatpush1.msra.mxu0 0.0
    %1352 = vmatprep.subr.mxu0 0.0
    %1353 = vmatpush1.msra.mxu0 0.0
    %1354 = vmatprep.subr.mxu0 0.0
    %1355 = vmatpush1.msra.mxu0 0.0
    %1356 = vmatprep.subr.mxu0 0.0
    %1357 = vmatpush1.msra.mxu0 0.0
    %1358 = vmatprep.subr.mxu0 0.0
    %1359 = vmatpush1.msra.mxu0 0.0
    %1360 = vmatprep.mubr.f32.mxu0 0.0
    %1361 = vmatmul.mubr.f32.gmra.mrb[0].mxu0 %v33
    %v1362 = vpop.f32.mrb[0].mxu0
    %v1363 = vadd.f32 %v578, %v1362
    %v1364 = vpop.f32.mrb[0].mxu0
    %1365 = vmatprep.mubr.f32.mxu0 0.0
    %1366 = vmatmul.mubr.f32.gmra.mrb[0].mxu0 %v36
    %v1367 = vpop.f32.mrb[0].mxu0
    %v1368 = vadd.f32 %v583, %v1367
    %v1369 = vpop.f32.mrb[0].mxu0
    %1370 = vmatprep.mubr.f32.mxu0 0.0
    %1371 = vmatmul.mubr.f32.gmra.mrb[0].mxu0 %v39
    %v1372 = vpop.f32.mrb[0].mxu0
    %v1373 = vadd.f32 %v588, %v1372
    %v1374 = vpop.f32.mrb[0].mxu0
    %1375 = vmatprep.mubr.f32.mxu0 0.0
    %1376 = vmatmul.mubr.f32.gmra.mrb[0].mxu0 %v42
    %v1377 = vpop.f32.mrb[0].mxu0
    %v1378 = vadd.f32 %v593, %v1377
    %v1379 = vpop.f32.mrb[0].mxu0
    %1380 = vmatprep.mubr.f32.mxu0 0.0
    %1381 = vmatmul.mubr.f32.gmra.mrb[0].mxu0 %v45
    %v1382 = vpop.f32.mrb[0].mxu0
    %v1383 = vadd.f32 %v598, %v1382
    %v1384 = vpop.f32.mrb[0].mxu0
    %1385 = vmatprep.mubr.f32.mxu0 0.0
    %1386 = vmatmul.mubr.f32.gmra.mrb[0].mxu0 %v48
    %v1387 = vpop.f32.mrb[0].mxu0
    %v1388 = vadd.f32 %v603, %v1387
    %v1389 = vpop.f32.mrb[0].mxu0
    %1390 = vmatprep.mubr.f32.mxu0 0.0
    %1391 = vmatmul.mubr.f32.gmra.mrb[0].mxu0 %v51
    %v1392 = vpop.f32.mrb[0].mxu0
    %v1393 = vadd.f32 %v608, %v1392
    %v1394 = vpop.f32.mrb[0].mxu0
    %1395 = vmatprep.mubr.f32.mxu0 0.0
    %1396 = vmatmul.mubr.f32.gmra.mrb[0].mxu0 %v54
    %v1397 = vpop.f32.mrb[0].mxu0
    %v1398 = vadd.f32 %v613, %v1397
    %v1399 = vpop.f32.mrb[0].mxu0
    %1400 = vmatprep.mubr.f32.mxu0 0.0
    %1401 = vmatmul.mubr.f32.gmra.mrb[0].mxu0 %v57
    %v1402 = vpop.f32.mrb[0].mxu0
    %v1403 = vadd.f32 %v618, %v1402
    %v1404 = vpop.f32.mrb[0].mxu0
    %1405 = vmatprep.mubr.f32.mxu0 0.0
    %1406 = vmatmul.mubr.f32.gmra.mrb[0].mxu0 %v60
    %v1407 = vpop.f32.mrb[0].mxu0
    %v1408 = vadd.f32 %v623, %v1407
    %v1409 = vpop.f32.mrb[0].mxu0
    %1410 = vmatprep.mubr.f32.mxu0 0.0
    %1411 = vmatmul.mubr.f32.gmra.mrb[0].mxu0 %v63
    %v1412 = vpop.f32.mrb[0].mxu0
    %v1413 = vadd.f32 %v628, %v1412
    %v1414 = vpop.f32.mrb[0].mxu0
    %1415 = vmatprep.mubr.f32.mxu0 0.0
    %1416 = vmatmul.mubr.f32.gmra.mrb[0].mxu0 %v66
    %v1417 = vpop.f32.mrb[0].mxu0
    %v1418 = vadd.f32 %v633, %v1417
    %v1419 = vpop.f32.mrb[0].mxu0
    %1420 = vmatprep.mubr.f32.mxu0 0.0
    %1421 = vmatmul.mubr.f32.gmra.mrb[0].mxu0 %v69
    %v1422 = vpop.f32.mrb[0].mxu0
    %v1423 = vadd.f32 %v638, %v1422
    %v1424 = vpop.f32.mrb[0].mxu0
    %1425 = vmatprep.mubr.f32.mxu0 0.0
    %1426 = vmatmul.mubr.f32.gmra.mrb[0].mxu0 %v72
    %v1427 = vpop.f32.mrb[0].mxu0
    %v1428 = vadd.f32 %v643, %v1427
    %v1429 = vpop.f32.mrb[0].mxu0
    %1430 = vmatprep.mubr.f32.mxu0 0.0
    %1431 = vmatmul.mubr.f32.gmra.mrb[0].mxu0 %v75
    %v1432 = vpop.f32.mrb[0].mxu0
    %v1433 = vadd.f32 %v648, %v1432
    %v1434 = vpop.f32.mrb[0].mxu0
    %1435 = vmatprep.mubr.f32.mxu0 0.0
    %1436 = vmatmul.mubr.f32.gmra.mrb[0].mxu0 %v78
    %v1437 = vpop.f32.mrb[0].mxu0
    %v1438 = vadd.f32 %v653, %v1437
    %v1439 = vpop.f32.mrb[0].mxu0
    %1440 = vmatprep.mubr.f32.mxu0 0.0
    %1441 = vmatmul.mubr.f32.gmra.mrb[0].mxu0 %v81
    %v1442 = vpop.f32.mrb[0].mxu0
    %v1443 = vadd.f32 %v658, %v1442
    %v1444 = vpop.f32.mrb[0].mxu0
    %1445 = vmatprep.mubr.f32.mxu0 0.0
    %1446 = vmatmul.mubr.f32.gmra.mrb[0].mxu0 %v84
    %v1447 = vpop.f32.mrb[0].mxu0
    %v1448 = vadd.f32 %v663, %v1447
    %v1449 = vpop.f32.mrb[0].mxu0
    %1450 = vmatprep.mubr.f32.mxu0 0.0
    %1451 = vmatmul.mubr.f32.gmra.mrb[0].mxu0 %v87
    %v1452 = vpop.f32.mrb[0].mxu0
    %v1453 = vadd.f32 %v668, %v1452
    %v1454 = vpop.f32.mrb[0].mxu0
    %1455 = vmatprep.mubr.f32.mxu0 0.0
    %1456 = vmatmul.mubr.f32.gmra.mrb[0].mxu0 %v90
    %v1457 = vpop.f32.mrb[0].mxu0
    %v1458 = vadd.f32 %v673, %v1457
    %v1459 = vpop.f32.mrb[0].mxu0
    %1460 = vmatprep.mubr.f32.mxu0 0.0
    %1461 = vmatmul.mubr.f32.gmra.mrb[0].mxu0 %v93
    %v1462 = vpop.f32.mrb[0].mxu0
    %v1463 = vadd.f32 %v678, %v1462
    %v1464 = vpop.f32.mrb[0].mxu0
    %1465 = vmatprep.mubr.f32.mxu0 0.0
    %1466 = vmatmul.mubr.f32.gmra.mrb[0].mxu0 %v96
    %v1467 = vpop.f32.mrb[0].mxu0
    %v1468 = vadd.f32 %v683, %v1467
    %v1469 = vpop.f32.mrb[0].mxu0
    %1470 = vmatprep.mubr.f32.mxu0 0.0
    %1471 = vmatmul.mubr.f32.gmra.mrb[0].mxu0 %v99
    %v1472 = vpop.f32.mrb[0].mxu0
    %v1473 = vadd.f32 %v688, %v1472
    %v1474 = vpop.f32.mrb[0].mxu0
    %1475 = vmatprep.mubr.f32.mxu0 0.0
    %1476 = vmatmul.mubr.f32.gmra.mrb[0].mxu0 %v102
    %v1477 = vpop.f32.mrb[0].mxu0
    %v1478 = vadd.f32 %v693, %v1477
    %v1479 = vpop.f32.mrb[0].mxu0
    %1480 = vmatprep.mubr.f32.mxu0 0.0
    %1481 = vmatmul.mubr.f32.gmra.mrb[0].mxu0 %v105
    %v1482 = vpop.f32.mrb[0].mxu0
    %v1483 = vadd.f32 %v698, %v1482
    %v1484 = vpop.f32.mrb[0].mxu0
    %1485 = vmatprep.mubr.f32.mxu0 0.0
    %1486 = vmatmul.mubr.f32.gmra.mrb[0].mxu0 %v108
    %v1487 = vpop.f32.mrb[0].mxu0
    %v1488 = vadd.f32 %v703, %v1487
    %v1489 = vpop.f32.mrb[0].mxu0
    %1490 = vmatprep.mubr.f32.mxu0 0.0
    %1491 = vmatmul.mubr.f32.gmra.mrb[0].mxu0 %v111
    %v1492 = vpop.f32.mrb[0].mxu0
    %v1493 = vadd.f32 %v708, %v1492
    %v1494 = vpop.f32.mrb[0].mxu0
    %1495 = vmatprep.mubr.f32.mxu0 0.0
    %1496 = vmatmul.mubr.f32.gmra.mrb[0].mxu0 %v114
    %v1497 = vpop.f32.mrb[0].mxu0
    %v1498 = vadd.f32 %v713, %v1497
    %v1499 = vpop.f32.mrb[0].mxu0
    %1500 = vmatprep.mubr.f32.mxu0 0.0
    %1501 = vmatmul.mubr.f32.gmra.mrb[0].mxu0 %v117
    %v1502 = vpop.f32.mrb[0].mxu0
    %v1503 = vadd.f32 %v718, %v1502
    %v1504 = vpop.f32.mrb[0].mxu0
    %1505 = vmatprep.mubr.f32.mxu0 0.0
    %1506 = vmatmul.mubr.f32.gmra.mrb[0].mxu0 %v120
    %v1507 = vpop.f32.mrb[0].mxu0
    %v1508 = vadd.f32 %v723, %v1507
    %v1509 = vpop.f32.mrb[0].mxu0
    %1510 = vmatprep.mubr.f32.mxu0 0.0
    %1511 = vmatmul.mubr.f32.gmra.mrb[0].mxu0 %v123
    %v1512 = vpop.f32.mrb[0].mxu0
    %v1513 = vadd.f32 %v728, %v1512
    %v1514 = vpop.f32.mrb[0].mxu0
    %1515 = vmatprep.mubr.f32.mxu0 0.0
    %1516 = vmatmul.mubr.f32.gmra.mrb[0].mxu0 %v126
    %v1517 = vpop.f32.mrb[0].mxu0
    %v1518 = vadd.f32 %v733, %v1517
    %v1519 = vpop.f32.mrb[0].mxu0
    %1520 = vmatprep.mubr.f32.mxu0 0.0
    %1521 = vmatmul.mubr.f32.gmra.mrb[0].mxu0 %v129
    %v1522 = vpop.f32.mrb[0].mxu0
    %v1523 = vadd.f32 %v738, %v1522
    %v1524 = vpop.f32.mrb[0].mxu0
    %1525 = vmatprep.mubr.f32.mxu0 0.0
    %1526 = vmatmul.mubr.f32.gmra.mrb[0].mxu0 %v132
    %v1527 = vpop.f32.mrb[0].mxu0
    %v1528 = vadd.f32 %v743, %v1527
    %v1529 = vpop.f32.mrb[0].mxu0
    %1530 = vmatprep.mubr.f32.mxu0 0.0
    %1531 = vmatmul.mubr.f32.gmra.mrb[0].mxu0 %v135
    %v1532 = vpop.f32.mrb[0].mxu0
    %v1533 = vadd.f32 %v748, %v1532
    %v1534 = vpop.f32.mrb[0].mxu0
    %1535 = vmatprep.mubr.f32.mxu0 0.0
    %1536 = vmatmul.mubr.f32.gmra.mrb[0].mxu0 %v138
    %v1537 = vpop.f32.mrb[0].mxu0
    %v1538 = vadd.f32 %v753, %v1537
    %v1539 = vpop.f32.mrb[0].mxu0
    %1540 = vmatprep.mubr.f32.mxu0 0.0
    %1541 = vmatmul.mubr.f32.gmra.mrb[0].mxu0 %v141
    %v1542 = vpop.f32.mrb[0].mxu0
    %v1543 = vadd.f32 %v758, %v1542
    %v1544 = vpop.f32.mrb[0].mxu0
    %1545 = vmatprep.mubr.f32.mxu0 0.0
    %1546 = vmatmul.mubr.f32.gmra.mrb[0].mxu0 %v144
    %v1547 = vpop.f32.mrb[0].mxu0
    %v1548 = vadd.f32 %v763, %v1547
    %v1549 = vpop.f32.mrb[0].mxu0
    %1550 = vmatprep.mubr.f32.mxu0 0.0
    %1551 = vmatmul.mubr.f32.gmra.mrb[0].mxu0 %v147
    %v1552 = vpop.f32.mrb[0].mxu0
    %v1553 = vadd.f32 %v768, %v1552
    %v1554 = vpop.f32.mrb[0].mxu0
    %1555 = vmatprep.mubr.f32.mxu0 0.0
    %1556 = vmatmul.mubr.f32.gmra.mrb[0].mxu0 %v150
    %v1557 = vpop.f32.mrb[0].mxu0
    %v1558 = vadd.f32 %v773, %v1557
    %v1559 = vpop.f32.mrb[0].mxu0
    %1560 = vmatprep.mubr.f32.mxu0 0.0
    %1561 = vmatmul.mubr.f32.gmra.mrb[0].mxu0 %v153
    %v1562 = vpop.f32.mrb[0].mxu0
    %v1563 = vadd.f32 %v778, %v1562
    %v1564 = vpop.f32.mrb[0].mxu0
    %1565 = vmatprep.mubr.f32.mxu0 0.0
    %1566 = vmatmul.mubr.f32.gmra.mrb[0].mxu0 %v156
    %v1567 = vpop.f32.mrb[0].mxu0
    %v1568 = vadd.f32 %v783, %v1567
    %v1569 = vpop.f32.mrb[0].mxu0
    %1570 = vmatprep.mubr.f32.mxu0 0.0
    %1571 = vmatmul.mubr.f32.gmra.mrb[0].mxu0 %v159
    %v1572 = vpop.f32.mrb[0].mxu0
    %v1573 = vadd.f32 %v788, %v1572
    %v1574 = vpop.f32.mrb[0].mxu0
    %1575 = vmatprep.mubr.f32.mxu0 0.0
    %1576 = vmatmul.mubr.f32.gmra.mrb[0].mxu0 %v162
    %v1577 = vpop.f32.mrb[0].mxu0
    %v1578 = vadd.f32 %v793, %v1577
    %v1579 = vpop.f32.mrb[0].mxu0
    %1580 = vmatprep.mubr.f32.mxu0 0.0
    %1581 = vmatmul.mubr.f32.gmra.mrb[0].mxu0 %v165
    %v1582 = vpop.f32.mrb[0].mxu0
    %v1583 = vadd.f32 %v798, %v1582
    %v1584 = vpop.f32.mrb[0].mxu0
    %1585 = vmatprep.mubr.f32.mxu0 0.0
    %1586 = vmatmul.mubr.f32.gmra.mrb[0].mxu0 %v168
    %v1587 = vpop.f32.mrb[0].mxu0
    %v1588 = vadd.f32 %v803, %v1587
    %v1589 = vpop.f32.mrb[0].mxu0
    %1590 = vmatprep.mubr.f32.mxu0 0.0
    %1591 = vmatmul.mubr.f32.gmra.mrb[0].mxu0 %v171
    %v1592 = vpop.f32.mrb[0].mxu0
    %v1593 = vadd.f32 %v808, %v1592
    %v1594 = vpop.f32.mrb[0].mxu0
    %1595 = vmatprep.mubr.f32.mxu0 0.0
    %1596 = vmatmul.mubr.f32.gmra.mrb[0].mxu0 %v174
    %v1597 = vpop.f32.mrb[0].mxu0
    %v1598 = vadd.f32 %v813, %v1597
    %v1599 = vpop.f32.mrb[0].mxu0
    %1600 = vmatprep.mubr.f32.mxu0 0.0
    %1601 = vmatmul.mubr.f32.gmra.mrb[0].mxu0 %v177
    %v1602 = vpop.f32.mrb[0].mxu0
    %v1603 = vadd.f32 %v818, %v1602
    %v1604 = vpop.f32.mrb[0].mxu0
    %1605 = vmatprep.mubr.f32.mxu0 0.0
    %1606 = vmatmul.mubr.f32.gmra.mrb[0].mxu0 %v180
    %v1607 = vpop.f32.mrb[0].mxu0
    %v1608 = vadd.f32 %v823, %v1607
    %v1609 = vpop.f32.mrb[0].mxu0
    %1610 = vmatprep.mubr.f32.mxu0 0.0
    %1611 = vmatmul.mubr.f32.gmra.mrb[0].mxu0 %v183
    %v1612 = vpop.f32.mrb[0].mxu0
    %v1613 = vadd.f32 %v828, %v1612
    %v1614 = vpop.f32.mrb[0].mxu0
    %1615 = vmatprep.mubr.f32.mxu0 0.0
    %1616 = vmatmul.mubr.f32.gmra.mrb[0].mxu0 %v186
    %v1617 = vpop.f32.mrb[0].mxu0
    %v1618 = vadd.f32 %v833, %v1617
    %v1619 = vpop.f32.mrb[0].mxu0
    %1620 = vmatprep.mubr.f32.mxu0 0.0
    %1621 = vmatmul.mubr.f32.gmra.mrb[0].mxu0 %v189
    %v1622 = vpop.f32.mrb[0].mxu0
    %v1623 = vadd.f32 %v838, %v1622
    %v1624 = vpop.f32.mrb[0].mxu0
    %1625 = vmatprep.mubr.f32.mxu0 0.0
    %1626 = vmatmul.mubr.f32.gmra.mrb[0].mxu0 %v192
    %v1627 = vpop.f32.mrb[0].mxu0
    %v1628 = vadd.f32 %v843, %v1627
    %v1629 = vpop.f32.mrb[0].mxu0
    %1630 = vmatprep.mubr.f32.mxu0 0.0
    %1631 = vmatmul.mubr.f32.gmra.mrb[0].mxu0 %v195
    %v1632 = vpop.f32.mrb[0].mxu0
    %v1633 = vadd.f32 %v848, %v1632
    %v1634 = vpop.f32.mrb[0].mxu0
    %1635 = vmatprep.mubr.f32.mxu0 0.0
    %1636 = vmatmul.mubr.f32.gmra.mrb[0].mxu0 %v198
    %v1637 = vpop.f32.mrb[0].mxu0
    %v1638 = vadd.f32 %v853, %v1637
    %v1639 = vpop.f32.mrb[0].mxu0
    %1640 = vmatprep.mubr.f32.mxu0 0.0
    %1641 = vmatmul.mubr.f32.gmra.mrb[0].mxu0 %v201
    %v1642 = vpop.f32.mrb[0].mxu0
    %v1643 = vadd.f32 %v858, %v1642
    %v1644 = vpop.f32.mrb[0].mxu0
    %1645 = vmatprep.mubr.f32.mxu0 0.0
    %1646 = vmatmul.mubr.f32.gmra.mrb[0].mxu0 %v204
    %v1647 = vpop.f32.mrb[0].mxu0
    %v1648 = vadd.f32 %v863, %v1647
    %v1649 = vpop.f32.mrb[0].mxu0
    %1650 = vmatprep.mubr.f32.mxu0 0.0
    %1651 = vmatmul.mubr.f32.gmra.mrb[0].mxu0 %v207
    %v1652 = vpop.f32.mrb[0].mxu0
    %v1653 = vadd.f32 %v868, %v1652
    %v1654 = vpop.f32.mrb[0].mxu0
    %1655 = vmatprep.mubr.f32.mxu0 0.0
    %1656 = vmatmul.mubr.f32.gmra.mrb[0].mxu0 %v210
    %v1657 = vpop.f32.mrb[0].mxu0
    %v1658 = vadd.f32 %v873, %v1657
    %v1659 = vpop.f32.mrb[0].mxu0
    %1660 = vmatprep.mubr.f32.mxu0 0.0
    %1661 = vmatmul.mubr.f32.gmra.mrb[0].mxu0 %v213
    %v1662 = vpop.f32.mrb[0].mxu0
    %v1663 = vadd.f32 %v878, %v1662
    %v1664 = vpop.f32.mrb[0].mxu0
    %1665 = vmatprep.mubr.f32.mxu0 0.0
    %1666 = vmatmul.mubr.f32.gmra.mrb[0].mxu0 %v216
    %v1667 = vpop.f32.mrb[0].mxu0
    %v1668 = vadd.f32 %v883, %v1667
    %v1669 = vpop.f32.mrb[0].mxu0
    %1670 = vmatprep.mubr.f32.mxu0 0.0
    %1671 = vmatmul.mubr.f32.gmra.mrb[0].mxu0 %v219
    %v1672 = vpop.f32.mrb[0].mxu0
    %v1673 = vadd.f32 %v888, %v1672
    %v1674 = vpop.f32.mrb[0].mxu0
    %1675 = vmatprep.mubr.f32.mxu0 0.0
    %1676 = vmatmul.mubr.f32.gmra.mrb[0].mxu0 %v222
    %v1677 = vpop.f32.mrb[0].mxu0
    %v1678 = vadd.f32 %v893, %v1677
    %v1679 = vpop.f32.mrb[0].mxu0
    %1680 = vmatprep.mubr.f32.mxu0 0.0
    %1681 = vmatmul.mubr.f32.gmra.mrb[0].mxu0 %v225
    %v1682 = vpop.f32.mrb[0].mxu0
    %v1683 = vadd.f32 %v898, %v1682
    %v1684 = vpop.f32.mrb[0].mxu0
    %1685 = vmatprep.mubr.f32.mxu0 0.0
    %1686 = vmatmul.mubr.f32.gmra.mrb[0].mxu0 %v228
    %v1687 = vpop.f32.mrb[0].mxu0
    %v1688 = vadd.f32 %v903, %v1687
    %v1689 = vpop.f32.mrb[0].mxu0
    %1690 = vmatprep.mubr.f32.mxu0 0.0
    %1691 = vmatmul.mubr.f32.gmra.mrb[0].mxu0 %v231
    %v1692 = vpop.f32.mrb[0].mxu0
    %v1693 = vadd.f32 %v908, %v1692
    %v1694 = vpop.f32.mrb[0].mxu0
    %1695 = vmatprep.mubr.f32.mxu0 0.0
    %1696 = vmatmul.mubr.f32.gmra.mrb[0].mxu0 %v234
    %v1697 = vpop.f32.mrb[0].mxu0
    %v1698 = vadd.f32 %v913, %v1697
    %v1699 = vpop.f32.mrb[0].mxu0
    %1700 = vmatprep.mubr.f32.mxu0 0.0
    %1701 = vmatmul.mubr.f32.gmra.mrb[0].mxu0 %v237
    %v1702 = vpop.f32.mrb[0].mxu0
    %v1703 = vadd.f32 %v918, %v1702
    %v1704 = vpop.f32.mrb[0].mxu0
    %1705 = vmatprep.mubr.f32.mxu0 0.0
    %1706 = vmatmul.mubr.f32.gmra.mrb[0].mxu0 %v240
    %v1707 = vpop.f32.mrb[0].mxu0
    %v1708 = vadd.f32 %v923, %v1707
    %v1709 = vpop.f32.mrb[0].mxu0
    %1710 = vmatprep.mubr.f32.mxu0 0.0
    %1711 = vmatmul.mubr.f32.gmra.mrb[0].mxu0 %v243
    %v1712 = vpop.f32.mrb[0].mxu0
    %v1713 = vadd.f32 %v928, %v1712
    %v1714 = vpop.f32.mrb[0].mxu0
    %1715 = vmatprep.mubr.f32.mxu0 0.0
    %1716 = vmatmul.mubr.f32.gmra.mrb[0].mxu0 %v246
    %v1717 = vpop.f32.mrb[0].mxu0
    %v1718 = vadd.f32 %v933, %v1717
    %v1719 = vpop.f32.mrb[0].mxu0
    %1720 = vmatprep.mubr.f32.mxu0 0.0
    %1721 = vmatmul.mubr.f32.gmra.mrb[0].mxu0 %v249
    %v1722 = vpop.f32.mrb[0].mxu0
    %v1723 = vadd.f32 %v938, %v1722
    %v1724 = vpop.f32.mrb[0].mxu0
    %1725 = vmatprep.mubr.f32.mxu0 0.0
    %1726 = vmatmul.mubr.f32.gmra.mrb[0].mxu0 %v252
    %v1727 = vpop.f32.mrb[0].mxu0
    %v1728 = vadd.f32 %v943, %v1727
    %v1729 = vpop.f32.mrb[0].mxu0
    %1730 = vmatprep.mubr.f32.mxu0 0.0
    %1731 = vmatmul.mubr.f32.gmra.mrb[0].mxu0 %v255
    %v1732 = vpop.f32.mrb[0].mxu0
    %v1733 = vadd.f32 %v948, %v1732
    %v1734 = vpop.f32.mrb[0].mxu0
    %1735 = vmatprep.mubr.f32.mxu0 0.0
    %1736 = vmatmul.mubr.f32.gmra.mrb[0].mxu0 %v258
    %v1737 = vpop.f32.mrb[0].mxu0
    %v1738 = vadd.f32 %v953, %v1737
    %v1739 = vpop.f32.mrb[0].mxu0
    %1740 = vmatprep.mubr.f32.mxu0 0.0
    %1741 = vmatmul.mubr.f32.gmra.mrb[0].mxu0 %v261
    %v1742 = vpop.f32.mrb[0].mxu0
    %v1743 = vadd.f32 %v958, %v1742
    %v1744 = vpop.f32.mrb[0].mxu0
    %1745 = vmatprep.mubr.f32.mxu0 0.0
    %1746 = vmatmul.mubr.f32.gmra.mrb[0].mxu0 %v264
    %v1747 = vpop.f32.mrb[0].mxu0
    %v1748 = vadd.f32 %v963, %v1747
    %v1749 = vpop.f32.mrb[0].mxu0
    %1750 = vmatprep.mubr.f32.mxu0 0.0
    %1751 = vmatmul.mubr.f32.gmra.mrb[0].mxu0 %v267
    %v1752 = vpop.f32.mrb[0].mxu0
    %v1753 = vadd.f32 %v968, %v1752
    %v1754 = vpop.f32.mrb[0].mxu0
    %1755 = vmatprep.mubr.f32.mxu0 0.0
    %1756 = vmatmul.mubr.f32.gmra.mrb[0].mxu0 %v270
    %v1757 = vpop.f32.mrb[0].mxu0
    %v1758 = vadd.f32 %v973, %v1757
    %v1759 = vpop.f32.mrb[0].mxu0
    %1760 = vmatprep.mubr.f32.mxu0 0.0
    %1761 = vmatmul.mubr.f32.gmra.mrb[0].mxu0 %v273
    %v1762 = vpop.f32.mrb[0].mxu0
    %v1763 = vadd.f32 %v978, %v1762
    %v1764 = vpop.f32.mrb[0].mxu0
    %1765 = vmatprep.mubr.f32.mxu0 0.0
    %1766 = vmatmul.mubr.f32.gmra.mrb[0].mxu0 %v276
    %v1767 = vpop.f32.mrb[0].mxu0
    %v1768 = vadd.f32 %v983, %v1767
    %v1769 = vpop.f32.mrb[0].mxu0
    %1770 = vmatprep.mubr.f32.mxu0 0.0
    %1771 = vmatmul.mubr.f32.gmra.mrb[0].mxu0 %v279
    %v1772 = vpop.f32.mrb[0].mxu0
    %v1773 = vadd.f32 %v988, %v1772
    %v1774 = vpop.f32.mrb[0].mxu0
    %1775 = vmatprep.mubr.f32.mxu0 0.0
    %1776 = vmatmul.mubr.f32.gmra.mrb[0].mxu0 %v282
    %v1777 = vpop.f32.mrb[0].mxu0
    %v1778 = vadd.f32 %v993, %v1777
    %v1779 = vpop.f32.mrb[0].mxu0
    %1780 = vmatprep.mubr.f32.mxu0 0.0
    %1781 = vmatmul.mubr.f32.gmra.mrb[0].mxu0 %v285
    %v1782 = vpop.f32.mrb[0].mxu0
    %v1783 = vadd.f32 %v998, %v1782
    %v1784 = vpop.f32.mrb[0].mxu0
    %1785 = vmatprep.mubr.f32.mxu0 0.0
    %1786 = vmatmul.mubr.f32.gmra.mrb[0].mxu0 %v288
    %v1787 = vpop.f32.mrb[0].mxu0
    %v1788 = vadd.f32 %v1003, %v1787
    %v1789 = vpop.f32.mrb[0].mxu0
    %1790 = vmatprep.mubr.f32.mxu0 0.0
    %1791 = vmatmul.mubr.f32.gmra.mrb[0].mxu0 %v291
    %v1792 = vpop.f32.mrb[0].mxu0
    %v1793 = vadd.f32 %v1008, %v1792
    %v1794 = vpop.f32.mrb[0].mxu0
    %1795 = vmatprep.mubr.f32.mxu0 0.0
    %1796 = vmatmul.mubr.f32.gmra.mrb[0].mxu0 %v294
    %v1797 = vpop.f32.mrb[0].mxu0
    %v1798 = vadd.f32 %v1013, %v1797
    %v1799 = vpop.f32.mrb[0].mxu0
    %1800 = vmatprep.mubr.f32.mxu0 0.0
    %1801 = vmatmul.mubr.f32.gmra.mrb[0].mxu0 %v297
    %v1802 = vpop.f32.mrb[0].mxu0
    %v1803 = vadd.f32 %v1018, %v1802
    %v1804 = vpop.f32.mrb[0].mxu0
    %1805 = vmatprep.mubr.f32.mxu0 0.0
    %1806 = vmatmul.mubr.f32.gmra.mrb[0].mxu0 %v300
    %v1807 = vpop.f32.mrb[0].mxu0
    %v1808 = vadd.f32 %v1023, %v1807
    %v1809 = vpop.f32.mrb[0].mxu0
    %1810 = vmatprep.mubr.f32.mxu0 0.0
    %1811 = vmatmul.mubr.f32.gmra.mrb[0].mxu0 %v303
    %v1812 = vpop.f32.mrb[0].mxu0
    %v1813 = vadd.f32 %v1028, %v1812
    %v1814 = vpop.f32.mrb[0].mxu0
    %1815 = vmatprep.mubr.f32.mxu0 0.0
    %1816 = vmatmul.mubr.f32.gmra.mrb[0].mxu0 %v306
    %v1817 = vpop.f32.mrb[0].mxu0
    %v1818 = vadd.f32 %v1033, %v1817
    %v1819 = vpop.f32.mrb[0].mxu0
    %1820 = vmatprep.mubr.f32.mxu0 0.0
    %1821 = vmatmul.mubr.f32.gmra.mrb[0].mxu0 %v309
    %v1822 = vpop.f32.mrb[0].mxu0
    %v1823 = vadd.f32 %v1038, %v1822
    %v1824 = vpop.f32.mrb[0].mxu0
    %1825 = vmatprep.mubr.f32.mxu0 0.0
    %1826 = vmatmul.mubr.f32.gmra.mrb[0].mxu0 %v312
    %v1827 = vpop.f32.mrb[0].mxu0
    %v1828 = vadd.f32 %v1043, %v1827
    %v1829 = vpop.f32.mrb[0].mxu0
    %1830 = vmatprep.mubr.f32.mxu0 0.0
    %1831 = vmatmul.mubr.f32.gmra.mrb[0].mxu0 %v315
    %v1832 = vpop.f32.mrb[0].mxu0
    %v1833 = vadd.f32 %v1048, %v1832
    %v1834 = vpop.f32.mrb[0].mxu0
    %1835 = vmatprep.mubr.f32.mxu0 0.0
    %1836 = vmatmul.mubr.f32.gmra.mrb[0].mxu0 %v318
    %v1837 = vpop.f32.mrb[0].mxu0
    %v1838 = vadd.f32 %v1053, %v1837
    %v1839 = vpop.f32.mrb[0].mxu0
    %1840 = vmatprep.mubr.f32.mxu0 0.0
    %1841 = vmatmul.mubr.f32.gmra.mrb[0].mxu0 %v321
    %v1842 = vpop.f32.mrb[0].mxu0
    %v1843 = vadd.f32 %v1058, %v1842
    %v1844 = vpop.f32.mrb[0].mxu0
    %1845 = vmatprep.mubr.f32.mxu0 0.0
    %1846 = vmatmul.mubr.f32.gmra.mrb[0].mxu0 %v324
    %v1847 = vpop.f32.mrb[0].mxu0
    %v1848 = vadd.f32 %v1063, %v1847
    %v1849 = vpop.f32.mrb[0].mxu0
    %1850 = vmatprep.mubr.f32.mxu0 0.0
    %1851 = vmatmul.mubr.f32.gmra.mrb[0].mxu0 %v327
    %v1852 = vpop.f32.mrb[0].mxu0
    %v1853 = vadd.f32 %v1068, %v1852
    %v1854 = vpop.f32.mrb[0].mxu0
    %1855 = vmatprep.mubr.f32.mxu0 0.0
    %1856 = vmatmul.mubr.f32.gmra.mrb[0].mxu0 %v330
    %v1857 = vpop.f32.mrb[0].mxu0
    %v1858 = vadd.f32 %v1073, %v1857
    %v1859 = vpop.f32.mrb[0].mxu0
    %1860 = vmatprep.mubr.f32.mxu0 0.0
    %1861 = vmatmul.mubr.f32.gmra.mrb[0].mxu0 %v333
    %v1862 = vpop.f32.mrb[0].mxu0
    %v1863 = vadd.f32 %v1078, %v1862
    %v1864 = vpop.f32.mrb[0].mxu0
    %1865 = vmatprep.mubr.f32.mxu0 0.0
    %1866 = vmatmul.mubr.f32.gmra.mrb[0].mxu0 %v336
    %v1867 = vpop.f32.mrb[0].mxu0
    %v1868 = vadd.f32 %v1083, %v1867
    %v1869 = vpop.f32.mrb[0].mxu0
    %1870 = vmatprep.mubr.f32.mxu0 0.0
    %1871 = vmatmul.mubr.f32.gmra.mrb[0].mxu0 %v339
    %v1872 = vpop.f32.mrb[0].mxu0
    %v1873 = vadd.f32 %v1088, %v1872
    %v1874 = vpop.f32.mrb[0].mxu0
    %1875 = vmatprep.mubr.f32.mxu0 0.0
    %1876 = vmatmul.mubr.f32.gmra.mrb[0].mxu0 %v342
    %v1877 = vpop.f32.mrb[0].mxu0
    %v1878 = vadd.f32 %v1093, %v1877
    %v1879 = vpop.f32.mrb[0].mxu0
    %1880 = vmatprep.mubr.f32.mxu0 0.0
    %1881 = vmatmul.mubr.f32.gmra.mrb[0].mxu0 %v345
    %v1882 = vpop.f32.mrb[0].mxu0
    %v1883 = vadd.f32 %v1098, %v1882
    %v1884 = vpop.f32.mrb[0].mxu0
    %1885 = vmatprep.mubr.f32.mxu0 0.0
    %1886 = vmatmul.mubr.f32.gmra.mrb[0].mxu0 %v348
    %v1887 = vpop.f32.mrb[0].mxu0
    %v1888 = vadd.f32 %v1103, %v1887
    %v1889 = vpop.f32.mrb[0].mxu0
    %1890 = vmatprep.mubr.f32.mxu0 0.0
    %1891 = vmatmul.mubr.f32.gmra.mrb[0].mxu0 %v351
    %v1892 = vpop.f32.mrb[0].mxu0
    %v1893 = vadd.f32 %v1108, %v1892
    %v1894 = vpop.f32.mrb[0].mxu0
    %1895 = vmatprep.mubr.f32.mxu0 0.0
    %1896 = vmatmul.mubr.f32.gmra.mrb[0].mxu0 %v354
    %v1897 = vpop.f32.mrb[0].mxu0
    %v1898 = vadd.f32 %v1113, %v1897
    %v1899 = vpop.f32.mrb[0].mxu0
    %1900 = vmatprep.mubr.f32.mxu0 0.0
    %1901 = vmatmul.mubr.f32.gmra.mrb[0].mxu0 %v357
    %v1902 = vpop.f32.mrb[0].mxu0
    %v1903 = vadd.f32 %v1118, %v1902
    %v1904 = vpop.f32.mrb[0].mxu0
    %1905 = vmatprep.mubr.f32.mxu0 0.0
    %1906 = vmatmul.mubr.f32.gmra.mrb[0].mxu0 %v360
    %v1907 = vpop.f32.mrb[0].mxu0
    %v1908 = vadd.f32 %v1123, %v1907
    %v1909 = vpop.f32.mrb[0].mxu0
    %1910 = vmatprep.mubr.f32.mxu0 0.0
    %1911 = vmatmul.mubr.f32.gmra.mrb[0].mxu0 %v363
    %v1912 = vpop.f32.mrb[0].mxu0
    %v1913 = vadd.f32 %v1128, %v1912
    %v1914 = vpop.f32.mrb[0].mxu0
    %1915 = vmatprep.mubr.f32.mxu0 0.0
    %1916 = vmatmul.mubr.f32.gmra.mrb[0].mxu0 %v366
    %v1917 = vpop.f32.mrb[0].mxu0
    %v1918 = vadd.f32 %v1133, %v1917
    %v1919 = vpop.f32.mrb[0].mxu0
    %1920 = vmatprep.mubr.f32.mxu0 0.0
    %1921 = vmatmul.mubr.f32.gmra.mrb[0].mxu0 %v369
    %v1922 = vpop.f32.mrb[0].mxu0
    %v1923 = vadd.f32 %v1138, %v1922
    %v1924 = vpop.f32.mrb[0].mxu0
    %1925 = vmatprep.mubr.f32.mxu0 0.0
    %1926 = vmatmul.mubr.f32.gmra.mrb[0].mxu0 %v372
    %v1927 = vpop.f32.mrb[0].mxu0
    %v1928 = vadd.f32 %v1143, %v1927
    %v1929 = vpop.f32.mrb[0].mxu0
    %1930 = vmatprep.mubr.f32.mxu0 0.0
    %1931 = vmatmul.mubr.f32.gmra.mrb[0].mxu0 %v375
    %v1932 = vpop.f32.mrb[0].mxu0
    %v1933 = vadd.f32 %v1148, %v1932
    %v1934 = vpop.f32.mrb[0].mxu0
    %1935 = vmatprep.mubr.f32.mxu0 0.0
    %1936 = vmatmul.mubr.f32.gmra.mrb[0].mxu0 %v378
    %v1937 = vpop.f32.mrb[0].mxu0
    %v1938 = vadd.f32 %v1153, %v1937
    %v1939 = vpop.f32.mrb[0].mxu0
    %1940 = vmatprep.mubr.f32.mxu0 0.0
    %1941 = vmatmul.mubr.f32.gmra.mrb[0].mxu0 %v381
    %v1942 = vpop.f32.mrb[0].mxu0
    %v1943 = vadd.f32 %v1158, %v1942
    %v1944 = vpop.f32.mrb[0].mxu0
    %1945 = vmatprep.mubr.f32.mxu0 0.0
    %1946 = vmatmul.mubr.f32.gmra.mrb[0].mxu0 %v384
    %v1947 = vpop.f32.mrb[0].mxu0
    %v1948 = vadd.f32 %v1163, %v1947
    %v1949 = vpop.f32.mrb[0].mxu0
    %1950 = vmatprep.mubr.f32.mxu0 0.0
    %1951 = vmatmul.mubr.f32.gmra.mrb[0].mxu0 %v387
    %v1952 = vpop.f32.mrb[0].mxu0
    %v1953 = vadd.f32 %v1168, %v1952
    %v1954 = vpop.f32.mrb[0].mxu0
    %1955 = vmatprep.mubr.f32.mxu0 0.0
    %1956 = vmatmul.mubr.f32.gmra.mrb[0].mxu0 %v390
    %v1957 = vpop.f32.mrb[0].mxu0
    %v1958 = vadd.f32 %v1173, %v1957
    %v1959 = vpop.f32.mrb[0].mxu0
    %1960 = vmatprep.mubr.f32.mxu0 0.0
    %1961 = vmatmul.mubr.f32.gmra.mrb[0].mxu0 %v393
    %v1962 = vpop.f32.mrb[0].mxu0
    %v1963 = vadd.f32 %v1178, %v1962
    %v1964 = vpop.f32.mrb[0].mxu0
    %1965 = vmatprep.mubr.f32.mxu0 0.0
    %1966 = vmatmul.mubr.f32.gmra.mrb[0].mxu0 %v396
    %v1967 = vpop.f32.mrb[0].mxu0
    %v1968 = vadd.f32 %v1183, %v1967
    %v1969 = vpop.f32.mrb[0].mxu0
    %1970 = vmatprep.mubr.f32.mxu0 0.0
    %1971 = vmatmul.mubr.f32.gmra.mrb[0].mxu0 %v399
    %v1972 = vpop.f32.mrb[0].mxu0
    %v1973 = vadd.f32 %v1188, %v1972
    %v1974 = vpop.f32.mrb[0].mxu0
    %1975 = vmatprep.mubr.f32.mxu0 0.0
    %1976 = vmatmul.mubr.f32.gmra.mrb[0].mxu0 %v402
    %v1977 = vpop.f32.mrb[0].mxu0
    %v1978 = vadd.f32 %v1193, %v1977
    %v1979 = vpop.f32.mrb[0].mxu0
    %1980 = vmatprep.mubr.f32.mxu0 0.0
    %1981 = vmatmul.mubr.f32.gmra.mrb[0].mxu0 %v405
    %v1982 = vpop.f32.mrb[0].mxu0
    %v1983 = vadd.f32 %v1198, %v1982
    %v1984 = vpop.f32.mrb[0].mxu0
    %1985 = vmatprep.mubr.f32.mxu0 0.0
    %1986 = vmatmul.mubr.f32.gmra.mrb[0].mxu0 %v408
    %v1987 = vpop.f32.mrb[0].mxu0
    %v1988 = vadd.f32 %v1203, %v1987
    %v1989 = vpop.f32.mrb[0].mxu0
    %1990 = vmatprep.mubr.f32.mxu0 0.0
    %1991 = vmatmul.mubr.f32.gmra.mrb[0].mxu0 %v411
    %v1992 = vpop.f32.mrb[0].mxu0
    %v1993 = vadd.f32 %v1208, %v1992
    %v1994 = vpop.f32.mrb[0].mxu0
    %1995 = vmatprep.mubr.f32.mxu0 0.0
    %1996 = vmatmul.mubr.f32.gmra.mrb[0].mxu0 %v414
    %v1997 = vpop.f32.mrb[0].mxu0
    %v1998 = vadd.f32 %v1213, %v1997
    %v1999 = vpop.f32.mrb[0].mxu0
    %2000 = vmatprep.mubr.f32.mxu0 0.0
    %2001 = vmatmul.mubr.f32.gmra.mrb[0].mxu0 %v417
    %v2002 = vpop.f32.mrb[0].mxu0
    %v2003 = vadd.f32 %v1218, %v2002
    %v2004 = vpop.f32.mrb[0].mxu0
    %2005 = vmatprep.mubr.f32.mxu0 0.0
    %2006 = vmatmul.mubr.f32.gmra.mrb[0].mxu0 %v420
    %v2007 = vpop.f32.mrb[0].mxu0
    %v2008 = vadd.f32 %v1223, %v2007
    %v2009 = vpop.f32.mrb[0].mxu0
    %2010 = vmatprep.mubr.f32.mxu0 0.0
    %2011 = vmatmul.mubr.f32.gmra.mrb[0].mxu0 %v423
    %v2012 = vpop.f32.mrb[0].mxu0
    %v2013 = vadd.f32 %v1228, %v2012
    %v2014 = vpop.f32.mrb[0].mxu0
    %2015 = vmatprep.mubr.f32.mxu0 0.0
    %2016 = vmatmul.mubr.f32.gmra.mrb[0].mxu0 %v426
    %v2017 = vpop.f32.mrb[0].mxu0
    %v2018 = vadd.f32 %v1233, %v2017
    %v2019 = vpop.f32.mrb[0].mxu0
    %2020 = vmatprep.mubr.f32.mxu0 0.0
    %2021 = vmatmul.mubr.f32.gmra.mrb[0].mxu0 %v429
    %v2022 = vpop.f32.mrb[0].mxu0
    %v2023 = vadd.f32 %v1238, %v2022
    %v2024 = vpop.f32.mrb[0].mxu0
    %2025 = vmatprep.mubr.f32.mxu0 0.0
    %2026 = vmatmul.mubr.f32.gmra.mrb[0].mxu0 %v432
    %v2027 = vpop.f32.mrb[0].mxu0
    %v2028 = vadd.f32 %v1243, %v2027
    %v2029 = vpop.f32.mrb[0].mxu0
    %2030 = vmatprep.mubr.f32.mxu0 0.0
    %2031 = vmatmul.mubr.f32.gmra.mrb[0].mxu0 %v435
    %v2032 = vpop.f32.mrb[0].mxu0
    %v2033 = vadd.f32 %v1248, %v2032
    %v2034 = vpop.f32.mrb[0].mxu0
    %2035 = vmatprep.mubr.f32.mxu0 0.0
    %2036 = vmatmul.mubr.f32.gmra.mrb[0].mxu0 %v438
    %v2037 = vpop.f32.mrb[0].mxu0
    %v2038 = vadd.f32 %v1253, %v2037
    %v2039 = vpop.f32.mrb[0].mxu0
    %2040 = vmatprep.mubr.f32.mxu0 0.0
    %2041 = vmatmul.mubr.f32.gmra.mrb[0].mxu0 %v441
    %v2042 = vpop.f32.mrb[0].mxu0
    %v2043 = vadd.f32 %v1258, %v2042
    %v2044 = vpop.f32.mrb[0].mxu0
    %2045 = vmatprep.mubr.f32.mxu0 0.0
    %2046 = vmatmul.mubr.f32.gmra.mrb[0].mxu0 %v444
    %v2047 = vpop.f32.mrb[0].mxu0
    %v2048 = vadd.f32 %v1263, %v2047
    %v2049 = vpop.f32.mrb[0].mxu0
    %2050 = vmatprep.mubr.f32.mxu0 0.0
    %2051 = vmatmul.mubr.f32.gmra.mrb[0].mxu0 %v447
    %v2052 = vpop.f32.mrb[0].mxu0
    %v2053 = vadd.f32 %v1268, %v2052
    %v2054 = vpop.f32.mrb[0].mxu0
    %2055 = vmatprep.mubr.f32.mxu0 0.0
    %2056 = vmatmul.mubr.f32.gmra.mrb[0].mxu0 %v450
    %v2057 = vpop.f32.mrb[0].mxu0
    %v2058 = vadd.f32 %v1273, %v2057
    %v2059 = vpop.f32.mrb[0].mxu0
    %2060 = vmatprep.mubr.f32.mxu0 0.0
    %2061 = vmatmul.mubr.f32.gmra.mrb[0].mxu0 %v453
    %v2062 = vpop.f32.mrb[0].mxu0
    %v2063 = vadd.f32 %v1278, %v2062
    %v2064 = vpop.f32.mrb[0].mxu0
    %2065 = vmatprep.mubr.f32.mxu0 0.0
    %2066 = vmatmul.mubr.f32.gmra.mrb[0].mxu0 %v456
    %v2067 = vpop.f32.mrb[0].mxu0
    %v2068 = vadd.f32 %v1283, %v2067
    %v2069 = vpop.f32.mrb[0].mxu0
    %2070 = vmatprep.mubr.f32.mxu0 0.0
    %2071 = vmatmul.mubr.f32.gmra.mrb[0].mxu0 %v459
    %v2072 = vpop.f32.mrb[0].mxu0
    %v2073 = vadd.f32 %v1288, %v2072
    %v2074 = vpop.f32.mrb[0].mxu0
    %2075 = vmatprep.mubr.f32.mxu0 0.0
    %2076 = vmatmul.mubr.f32.gmra.mrb[0].mxu0 %v462
    %v2077 = vpop.f32.mrb[0].mxu0
    %v2078 = vadd.f32 %v1293, %v2077
    %v2079 = vpop.f32.mrb[0].mxu0
    %2080 = vdwg.mxu0
    %v2081 = vlaneseq
    %v2082 = vshrl.u32 %v2081, 7
    %v2083 = vadd.s32 %v2082, 8
    %v2084 = vadd.s32 %v2082, 16
    %v2085 = vadd.s32 %v2082, 24
    %v2086 = vlaneseq
    %v2087 = vand.u32 %v2086, 127
    %v2088 = vsub.s32 %v2087, 5
    %vm2089 = vcmp.eq.s32.totalorder %v2082, %v2088
    %vm2090 = vcmp.eq.s32.totalorder %v2083, %v2088
    %vm2091 = vcmp.eq.s32.totalorder %v2084, %v2088
    %vm2092 = vcmp.eq.s32.totalorder %v2085, %v2088
    %v2093 = vsel %vm2089, 1, 0
    %v2094 = vsel %vm2090, 1, 0
    %v2095 = vsel %vm2091, 1, 0
    %v2096 = vsel %vm2092, 1, 0
    %v2097 = vcvt.s32.f32 %v2093
    %v2098 = vcvt.s32.f32 %v2094
    %v2099 = vcvt.s32.f32 %v2095
    %v2100 = vcvt.s32.f32 %v2096
    %v2101 = vadd.s32 %v2087, 5
    %vm2102 = vcmp.eq.s32.totalorder %v2082, %v2101
    %vm2103 = vcmp.eq.s32.totalorder %v2083, %v2101
    %vm2104 = vcmp.eq.s32.totalorder %v2084, %v2101
    %vm2105 = vcmp.eq.s32.totalorder %v2085, %v2101
    %v2106 = vsel %vm2102, 1, 0
    %v2107 = vsel %vm2103, 1, 0
    %v2108 = vsel %vm2104, 1, 0
    %v2109 = vsel %vm2105, 1, 0
    %v2110 = vcvt.s32.f32 %v2106
    %v2111 = vcvt.s32.f32 %v2107
    %v2112 = vcvt.s32.f32 %v2108
    %v2113 = vcvt.s32.f32 %v2109
    %vm2114 = vcmask 203776
    %v2116 = vsel %vm2114, %v1363, 0
    %v2119 = vsel %vm2114, %v1368, 0
    %v2122 = vsel %vm2114, %v1373, 0
    %v2125 = vsel %vm2114, %v1378, 0
    %v2128 = vsel %vm2114, %v1383, 0
    %v2131 = vsel %vm2114, %v1388, 0
    %v2134 = vsel %vm2114, %v1393, 0
    %v2137 = vsel %vm2114, %v1398, 0
    %v2140 = vsel %vm2114, %v1403, 0
    %v2143 = vsel %vm2114, %v1408, 0
    %v2146 = vsel %vm2114, %v1413, 0
    %v2149 = vsel %vm2114, %v1418, 0
    %v2152 = vsel %vm2114, %v1423, 0
    %v2155 = vsel %vm2114, %v1428, 0
    %v2158 = vsel %vm2114, %v1433, 0
    %v2161 = vsel %vm2114, %v1438, 0
    %v2164 = vsel %vm2114, %v1443, 0
    %v2167 = vsel %vm2114, %v1448, 0
    %v2170 = vsel %vm2114, %v1453, 0
    %v2173 = vsel %vm2114, %v1458, 0
    %v2176 = vsel %vm2114, %v1463, 0
    %v2179 = vsel %vm2114, %v1468, 0
    %v2182 = vsel %vm2114, %v1473, 0
    %v2185 = vsel %vm2114, %v1478, 0
    %v2188 = vsel %vm2114, %v1483, 0
    %v2191 = vsel %vm2114, %v1488, 0
    %v2194 = vsel %vm2114, %v1493, 0
    %v2197 = vsel %vm2114, %v1498, 0
    %v2200 = vsel %vm2114, %v1503, 0
    %v2203 = vsel %vm2114, %v1508, 0
    %v2206 = vsel %vm2114, %v1513, 0
    %v2209 = vsel %vm2114, %v1518, 0
    %v2212 = vsel %vm2114, %v1523, 0
    %v2215 = vsel %vm2114, %v1528, 0
    %v2218 = vsel %vm2114, %v1533, 0
    %v2221 = vsel %vm2114, %v1538, 0
    %v2224 = vsel %vm2114, %v1543, 0
    %v2227 = vsel %vm2114, %v1548, 0
    %v2230 = vsel %vm2114, %v1553, 0
    %v2233 = vsel %vm2114, %v1558, 0
    %v2236 = vsel %vm2114, %v1563, 0
    %v2239 = vsel %vm2114, %v1568, 0
    %v2242 = vsel %vm2114, %v1573, 0
    %v2245 = vsel %vm2114, %v1578, 0
    %v2248 = vsel %vm2114, %v1583, 0
    %v2251 = vsel %vm2114, %v1588, 0
    %v2254 = vsel %vm2114, %v1593, 0
    %v2257 = vsel %vm2114, %v1598, 0
    %vm2259 = vcmask 1040384
    %v2261 = vsel %vm2259, %v2100, 0
    %2263 = vmatprep.subr.mxu0 0.0
    %2264 = vmatpush1.msra.mxu0 %v2097
    %2265 = vmatprep.subr.mxu0 0.0
    %2266 = vmatpush1.msra.mxu0 %v2098
    %2267 = vmatprep.subr.mxu0 0.0
    %2268 = vmatpush1.msra.mxu0 %v2099
    %2269 = vmatprep.subr.mxu0 0.0
    %2270 = vmatpush1.msra.mxu0 %v2261
    %2271 = vmatprep.subr.mxu0 0.0
    %2272 = vmatpush1.msra.mxu0 0.0
    %2273 = vmatprep.subr.mxu0 0.0
    %2274 = vmatpush1.msra.mxu0 0.0
    %2275 = vmatprep.subr.mxu0 0.0
    %2276 = vmatpush1.msra.mxu0 0.0
    %2277 = vmatprep.subr.mxu0 0.0
    %2278 = vmatpush1.msra.mxu0 0.0
    %2279 = vmatprep.subr.mxu0 0.0
    %2280 = vmatpush1.msra.mxu0 0.0
    %2281 = vmatprep.subr.mxu0 0.0
    %2282 = vmatpush1.msra.mxu0 0.0
    %2283 = vmatprep.subr.mxu0 0.0
    %2284 = vmatpush1.msra.mxu0 0.0
    %2285 = vmatprep.subr.mxu0 0.0
    %2286 = vmatpush1.msra.mxu0 0.0
    %2287 = vmatprep.subr.mxu0 0.0
    %2288 = vmatpush1.msra.mxu0 0.0
    %2289 = vmatprep.subr.mxu0 0.0
    %2290 = vmatpush1.msra.mxu0 0.0
    %2291 = vmatprep.subr.mxu0 0.0
    %2292 = vmatpush1.msra.mxu0 0.0
    %2293 = vmatprep.subr.mxu0 0.0
    %2294 = vmatpush1.msra.mxu0 0.0
    %2295 = vmatprep.subr.mxu0 0.0
    %2296 = vmatpush1.msra.mxu0 0.0
    %2297 = vmatprep.subr.mxu0 0.0
    %2298 = vmatpush1.msra.mxu0 0.0
    %2299 = vmatprep.subr.mxu0 0.0
    %2300 = vmatpush1.msra.mxu0 0.0
    %2301 = vmatprep.subr.mxu0 0.0
    %2302 = vmatpush1.msra.mxu0 0.0
    %2303 = vmatprep.subr.mxu0 0.0
    %2304 = vmatpush1.msra.mxu0 0.0
    %2305 = vmatprep.subr.mxu0 0.0
    %2306 = vmatpush1.msra.mxu0 0.0
    %2307 = vmatprep.subr.mxu0 0.0
    %2308 = vmatpush1.msra.mxu0 0.0
    %2309 = vmatprep.subr.mxu0 0.0
    %2310 = vmatpush1.msra.mxu0 0.0
    %2311 = vmatprep.subr.mxu0 0.0
    %2312 = vmatpush1.msra.mxu0 0.0
    %2313 = vmatprep.subr.mxu0 0.0
    %2314 = vmatpush1.msra.mxu0 0.0
    %2315 = vmatprep.subr.mxu0 0.0
    %2316 = vmatpush1.msra.mxu0 0.0
    %2317 = vmatprep.subr.mxu0 0.0
    %2318 = vmatpush1.msra.mxu0 0.0
    %2319 = vmatprep.subr.mxu0 0.0
    %2320 = vmatpush1.msra.mxu0 0.0
    %2321 = vmatprep.subr.mxu0 0.0
    %2322 = vmatpush1.msra.mxu0 0.0
    %2323 = vmatprep.subr.mxu0 0.0
    %2324 = vmatpush1.msra.mxu0 0.0
    %2325 = vmatprep.subr.mxu0 0.0
    %2326 = vmatpush1.msra.mxu0 0.0
    %2327 = vmatprep.mubr.f32.mxu0 0.0
    %2328 = vmatmul.mubr.f32.gmra.mrb[0].mxu0 %v2116
    %v2329 = vpop.f32.mrb[0].mxu0
    %v2330 = vadd.f32 0.0, %v2329
    %v2331 = vpop.f32.mrb[0].mxu0
    %2332 = vmatprep.mubr.f32.mxu0 0.0
    %2333 = vmatmul.mubr.f32.gmra.mrb[0].mxu0 %v2119
    %v2334 = vpop.f32.mrb[0].mxu0
    %v2335 = vadd.f32 0.0, %v2334
    %v2336 = vpop.f32.mrb[0].mxu0
    %2337 = vmatprep.mubr.f32.mxu0 0.0
    %2338 = vmatmul.mubr.f32.gmra.mrb[0].mxu0 %v2122
    %v2339 = vpop.f32.mrb[0].mxu0
    %v2340 = vadd.f32 0.0, %v2339
    %v2341 = vpop.f32.mrb[0].mxu0
    %2342 = vmatprep.mubr.f32.mxu0 0.0
    %2343 = vmatmul.mubr.f32.gmra.mrb[0].mxu0 %v2125
    %v2344 = vpop.f32.mrb[0].mxu0
    %v2345 = vadd.f32 0.0, %v2344
    %v2346 = vpop.f32.mrb[0].mxu0
    %2347 = vmatprep.mubr.f32.mxu0 0.0
    %2348 = vmatmul.mubr.f32.gmra.mrb[0].mxu0 %v2128
    %v2349 = vpop.f32.mrb[0].mxu0
    %v2350 = vadd.f32 0.0, %v2349
    %v2351 = vpop.f32.mrb[0].mxu0
    %2352 = vmatprep.mubr.f32.mxu0 0.0
    %2353 = vmatmul.mubr.f32.gmra.mrb[0].mxu0 %v2131
    %v2354 = vpop.f32.mrb[0].mxu0
    %v2355 = vadd.f32 0.0, %v2354
    %v2356 = vpop.f32.mrb[0].mxu0
    %2357 = vmatprep.mubr.f32.mxu0 0.0
    %2358 = vmatmul.mubr.f32.gmra.mrb[0].mxu0 %v2134
    %v2359 = vpop.f32.mrb[0].mxu0
    %v2360 = vadd.f32 0.0, %v2359
    %v2361 = vpop.f32.mrb[0].mxu0
    %2362 = vmatprep.mubr.f32.mxu0 0.0
    %2363 = vmatmul.mubr.f32.gmra.mrb[0].mxu0 %v2137
    %v2364 = vpop.f32.mrb[0].mxu0
    %v2365 = vadd.f32 0.0, %v2364
    %v2366 = vpop.f32.mrb[0].mxu0
    %2367 = vmatprep.mubr.f32.mxu0 0.0
    %2368 = vmatmul.mubr.f32.gmra.mrb[0].mxu0 %v2140
    %v2369 = vpop.f32.mrb[0].mxu0
    %v2370 = vadd.f32 0.0, %v2369
    %v2371 = vpop.f32.mrb[0].mxu0
    %2372 = vmatprep.mubr.f32.mxu0 0.0
    %2373 = vmatmul.mubr.f32.gmra.mrb[0].mxu0 %v2143
    %v2374 = vpop.f32.mrb[0].mxu0
    %v2375 = vadd.f32 0.0, %v2374
    %v2376 = vpop.f32.mrb[0].mxu0
    %2377 = vmatprep.mubr.f32.mxu0 0.0
    %2378 = vmatmul.mubr.f32.gmra.mrb[0].mxu0 %v2146
    %v2379 = vpop.f32.mrb[0].mxu0
    %v2380 = vadd.f32 0.0, %v2379
    %v2381 = vpop.f32.mrb[0].mxu0
    %2382 = vmatprep.mubr.f32.mxu0 0.0
    %2383 = vmatmul.mubr.f32.gmra.mrb[0].mxu0 %v2149
    %v2384 = vpop.f32.mrb[0].mxu0
    %v2385 = vadd.f32 0.0, %v2384
    %v2386 = vpop.f32.mrb[0].mxu0
    %2387 = vmatprep.mubr.f32.mxu0 0.0
    %2388 = vmatmul.mubr.f32.gmra.mrb[0].mxu0 %v2152
    %v2389 = vpop.f32.mrb[0].mxu0
    %v2390 = vadd.f32 0.0, %v2389
    %v2391 = vpop.f32.mrb[0].mxu0
    %2392 = vmatprep.mubr.f32.mxu0 0.0
    %2393 = vmatmul.mubr.f32.gmra.mrb[0].mxu0 %v2155
    %v2394 = vpop.f32.mrb[0].mxu0
    %v2395 = vadd.f32 0.0, %v2394
    %v2396 = vpop.f32.mrb[0].mxu0
    %2397 = vmatprep.mubr.f32.mxu0 0.0
    %2398 = vmatmul.mubr.f32.gmra.mrb[0].mxu0 %v2158
    %v2399 = vpop.f32.mrb[0].mxu0
    %v2400 = vadd.f32 0.0, %v2399
    %v2401 = vpop.f32.mrb[0].mxu0
    %2402 = vmatprep.mubr.f32.mxu0 0.0
    %2403 = vmatmul.mubr.f32.gmra.mrb[0].mxu0 %v2161
    %v2404 = vpop.f32.mrb[0].mxu0
    %v2405 = vadd.f32 0.0, %v2404
    %v2406 = vpop.f32.mrb[0].mxu0
    %2407 = vmatprep.mubr.f32.mxu0 0.0
    %2408 = vmatmul.mubr.f32.gmra.mrb[0].mxu0 %v2164
    %v2409 = vpop.f32.mrb[0].mxu0
    %v2410 = vadd.f32 0.0, %v2409
    %v2411 = vpop.f32.mrb[0].mxu0
    %2412 = vmatprep.mubr.f32.mxu0 0.0
    %2413 = vmatmul.mubr.f32.gmra.mrb[0].mxu0 %v2167
    %v2414 = vpop.f32.mrb[0].mxu0
    %v2415 = vadd.f32 0.0, %v2414
    %v2416 = vpop.f32.mrb[0].mxu0
    %2417 = vmatprep.mubr.f32.mxu0 0.0
    %2418 = vmatmul.mubr.f32.gmra.mrb[0].mxu0 %v2170
    %v2419 = vpop.f32.mrb[0].mxu0
    %v2420 = vadd.f32 0.0, %v2419
    %v2421 = vpop.f32.mrb[0].mxu0
    %2422 = vmatprep.mubr.f32.mxu0 0.0
    %2423 = vmatmul.mubr.f32.gmra.mrb[0].mxu0 %v2173
    %v2424 = vpop.f32.mrb[0].mxu0
    %v2425 = vadd.f32 0.0, %v2424
    %v2426 = vpop.f32.mrb[0].mxu0
    %2427 = vmatprep.mubr.f32.mxu0 0.0
    %2428 = vmatmul.mubr.f32.gmra.mrb[0].mxu0 %v2176
    %v2429 = vpop.f32.mrb[0].mxu0
    %v2430 = vadd.f32 0.0, %v2429
    %v2431 = vpop.f32.mrb[0].mxu0
    %2432 = vmatprep.mubr.f32.mxu0 0.0
    %2433 = vmatmul.mubr.f32.gmra.mrb[0].mxu0 %v2179
    %v2434 = vpop.f32.mrb[0].mxu0
    %v2435 = vadd.f32 0.0, %v2434
    %v2436 = vpop.f32.mrb[0].mxu0
    %2437 = vmatprep.mubr.f32.mxu0 0.0
    %2438 = vmatmul.mubr.f32.gmra.mrb[0].mxu0 %v2182
    %v2439 = vpop.f32.mrb[0].mxu0
    %v2440 = vadd.f32 0.0, %v2439
    %v2441 = vpop.f32.mrb[0].mxu0
    %2442 = vmatprep.mubr.f32.mxu0 0.0
    %2443 = vmatmul.mubr.f32.gmra.mrb[0].mxu0 %v2185
    %v2444 = vpop.f32.mrb[0].mxu0
    %v2445 = vadd.f32 0.0, %v2444
    %v2446 = vpop.f32.mrb[0].mxu0
    %2447 = vmatprep.mubr.f32.mxu0 0.0
    %2448 = vmatmul.mubr.f32.gmra.mrb[0].mxu0 %v2188
    %v2449 = vpop.f32.mrb[0].mxu0
    %v2450 = vadd.f32 0.0, %v2449
    %v2451 = vpop.f32.mrb[0].mxu0
    %2452 = vmatprep.mubr.f32.mxu0 0.0
    %2453 = vmatmul.mubr.f32.gmra.mrb[0].mxu0 %v2191
    %v2454 = vpop.f32.mrb[0].mxu0
    %v2455 = vadd.f32 0.0, %v2454
    %v2456 = vpop.f32.mrb[0].mxu0
    %2457 = vmatprep.mubr.f32.mxu0 0.0
    %2458 = vmatmul.mubr.f32.gmra.mrb[0].mxu0 %v2194
    %v2459 = vpop.f32.mrb[0].mxu0
    %v2460 = vadd.f32 0.0, %v2459
    %v2461 = vpop.f32.mrb[0].mxu0
    %2462 = vmatprep.mubr.f32.mxu0 0.0
    %2463 = vmatmul.mubr.f32.gmra.mrb[0].mxu0 %v2197
    %v2464 = vpop.f32.mrb[0].mxu0
    %v2465 = vadd.f32 0.0, %v2464
    %v2466 = vpop.f32.mrb[0].mxu0
    %2467 = vmatprep.mubr.f32.mxu0 0.0
    %2468 = vmatmul.mubr.f32.gmra.mrb[0].mxu0 %v2200
    %v2469 = vpop.f32.mrb[0].mxu0
    %v2470 = vadd.f32 0.0, %v2469
    %v2471 = vpop.f32.mrb[0].mxu0
    %2472 = vmatprep.mubr.f32.mxu0 0.0
    %2473 = vmatmul.mubr.f32.gmra.mrb[0].mxu0 %v2203
    %v2474 = vpop.f32.mrb[0].mxu0
    %v2475 = vadd.f32 0.0, %v2474
    %v2476 = vpop.f32.mrb[0].mxu0
    %2477 = vmatprep.mubr.f32.mxu0 0.0
    %2478 = vmatmul.mubr.f32.gmra.mrb[0].mxu0 %v2206
    %v2479 = vpop.f32.mrb[0].mxu0
    %v2480 = vadd.f32 0.0, %v2479
    %v2481 = vpop.f32.mrb[0].mxu0
    %2482 = vmatprep.mubr.f32.mxu0 0.0
    %2483 = vmatmul.mubr.f32.gmra.mrb[0].mxu0 %v2209
    %v2484 = vpop.f32.mrb[0].mxu0
    %v2485 = vadd.f32 0.0, %v2484
    %v2486 = vpop.f32.mrb[0].mxu0
    %2487 = vmatprep.mubr.f32.mxu0 0.0
    %2488 = vmatmul.mubr.f32.gmra.mrb[0].mxu0 %v2212
    %v2489 = vpop.f32.mrb[0].mxu0
    %v2490 = vadd.f32 0.0, %v2489
    %v2491 = vpop.f32.mrb[0].mxu0
    %2492 = vmatprep.mubr.f32.mxu0 0.0
    %2493 = vmatmul.mubr.f32.gmra.mrb[0].mxu0 %v2215
    %v2494 = vpop.f32.mrb[0].mxu0
    %v2495 = vadd.f32 0.0, %v2494
    %v2496 = vpop.f32.mrb[0].mxu0
    %2497 = vmatprep.mubr.f32.mxu0 0.0
    %2498 = vmatmul.mubr.f32.gmra.mrb[0].mxu0 %v2218
    %v2499 = vpop.f32.mrb[0].mxu0
    %v2500 = vadd.f32 0.0, %v2499
    %v2501 = vpop.f32.mrb[0].mxu0
    %2502 = vmatprep.mubr.f32.mxu0 0.0
    %2503 = vmatmul.mubr.f32.gmra.mrb[0].mxu0 %v2221
    %v2504 = vpop.f32.mrb[0].mxu0
    %v2505 = vadd.f32 0.0, %v2504
    %v2506 = vpop.f32.mrb[0].mxu0
    %2507 = vmatprep.mubr.f32.mxu0 0.0
    %2508 = vmatmul.mubr.f32.gmra.mrb[0].mxu0 %v2224
    %v2509 = vpop.f32.mrb[0].mxu0
    %v2510 = vadd.f32 0.0, %v2509
    %v2511 = vpop.f32.mrb[0].mxu0
    %2512 = vmatprep.mubr.f32.mxu0 0.0
    %2513 = vmatmul.mubr.f32.gmra.mrb[0].mxu0 %v2227
    %v2514 = vpop.f32.mrb[0].mxu0
    %v2515 = vadd.f32 0.0, %v2514
    %v2516 = vpop.f32.mrb[0].mxu0
    %2517 = vmatprep.mubr.f32.mxu0 0.0
    %2518 = vmatmul.mubr.f32.gmra.mrb[0].mxu0 %v2230
    %v2519 = vpop.f32.mrb[0].mxu0
    %v2520 = vadd.f32 0.0, %v2519
    %v2521 = vpop.f32.mrb[0].mxu0
    %2522 = vmatprep.mubr.f32.mxu0 0.0
    %2523 = vmatmul.mubr.f32.gmra.mrb[0].mxu0 %v2233
    %v2524 = vpop.f32.mrb[0].mxu0
    %v2525 = vadd.f32 0.0, %v2524
    %v2526 = vpop.f32.mrb[0].mxu0
    %2527 = vmatprep.mubr.f32.mxu0 0.0
    %2528 = vmatmul.mubr.f32.gmra.mrb[0].mxu0 %v2236
    %v2529 = vpop.f32.mrb[0].mxu0
    %v2530 = vadd.f32 0.0, %v2529
    %v2531 = vpop.f32.mrb[0].mxu0
    %2532 = vmatprep.mubr.f32.mxu0 0.0
    %2533 = vmatmul.mubr.f32.gmra.mrb[0].mxu0 %v2239
    %v2534 = vpop.f32.mrb[0].mxu0
    %v2535 = vadd.f32 0.0, %v2534
    %v2536 = vpop.f32.mrb[0].mxu0
    %2537 = vmatprep.mubr.f32.mxu0 0.0
    %2538 = vmatmul.mubr.f32.gmra.mrb[0].mxu0 %v2242
    %v2539 = vpop.f32.mrb[0].mxu0
    %v2540 = vadd.f32 0.0, %v2539
    %v2541 = vpop.f32.mrb[0].mxu0
    %2542 = vmatprep.mubr.f32.mxu0 0.0
    %2543 = vmatmul.mubr.f32.gmra.mrb[0].mxu0 %v2245
    %v2544 = vpop.f32.mrb[0].mxu0
    %v2545 = vadd.f32 0.0, %v2544
    %v2546 = vpop.f32.mrb[0].mxu0
    %2547 = vmatprep.mubr.f32.mxu0 0.0
    %2548 = vmatmul.mubr.f32.gmra.mrb[0].mxu0 %v2248
    %v2549 = vpop.f32.mrb[0].mxu0
    %v2550 = vadd.f32 0.0, %v2549
    %v2551 = vpop.f32.mrb[0].mxu0
    %2552 = vmatprep.mubr.f32.mxu0 0.0
    %2553 = vmatmul.mubr.f32.gmra.mrb[0].mxu0 %v2251
    %v2554 = vpop.f32.mrb[0].mxu0
    %v2555 = vadd.f32 0.0, %v2554
    %v2556 = vpop.f32.mrb[0].mxu0
    %2557 = vmatprep.mubr.f32.mxu0 0.0
    %2558 = vmatmul.mubr.f32.gmra.mrb[0].mxu0 %v2254
    %v2559 = vpop.f32.mrb[0].mxu0
    %v2560 = vadd.f32 0.0, %v2559
    %v2561 = vpop.f32.mrb[0].mxu0
    %2562 = vmatprep.mubr.f32.mxu0 0.0
    %2563 = vmatmul.mubr.f32.gmra.mrb[0].mxu0 %v2257
    %v2564 = vpop.f32.mrb[0].mxu0
    %v2565 = vadd.f32 0.0, %v2564
    %v2566 = vpop.f32.mrb[0].mxu0
    %2567 = vdwg.mxu0
    %v2568 = vadd.f32 %v1603, %v2330
    %v2569 = vadd.f32 %v1608, %v2335
    %v2570 = vadd.f32 %v1613, %v2340
    %v2571 = vadd.f32 %v1618, %v2345
    %v2572 = vadd.f32 %v1623, %v2350
    %v2573 = vadd.f32 %v1628, %v2355
    %v2574 = vadd.f32 %v1633, %v2360
    %v2575 = vadd.f32 %v1638, %v2365
    %v2576 = vadd.f32 %v1643, %v2370
    %v2577 = vadd.f32 %v1648, %v2375
    %v2578 = vadd.f32 %v1653, %v2380
    %v2579 = vadd.f32 %v1658, %v2385
    %v2580 = vadd.f32 %v1663, %v2390
    %v2581 = vadd.f32 %v1668, %v2395
    %v2582 = vadd.f32 %v1673, %v2400
    %v2583 = vadd.f32 %v1678, %v2405
    %v2584 = vadd.f32 %v1683, %v2410
    %v2585 = vadd.f32 %v1688, %v2415
    %v2586 = vadd.f32 %v1693, %v2420
    %v2587 = vadd.f32 %v1698, %v2425
    %v2588 = vadd.f32 %v1703, %v2430
    %v2589 = vadd.f32 %v1708, %v2435
    %v2590 = vadd.f32 %v1713, %v2440
    %v2591 = vadd.f32 %v1718, %v2445
    %v2592 = vadd.f32 %v1723, %v2450
    %v2593 = vadd.f32 %v1728, %v2455
    %v2594 = vadd.f32 %v1733, %v2460
    %v2595 = vadd.f32 %v1738, %v2465
    %v2596 = vadd.f32 %v1743, %v2470
    %v2597 = vadd.f32 %v1748, %v2475
    %v2598 = vadd.f32 %v1753, %v2480
    %v2599 = vadd.f32 %v1758, %v2485
    %v2600 = vadd.f32 %v1763, %v2490
    %v2601 = vadd.f32 %v1768, %v2495
    %v2602 = vadd.f32 %v1773, %v2500
    %v2603 = vadd.f32 %v1778, %v2505
    %v2604 = vadd.f32 %v1783, %v2510
    %v2605 = vadd.f32 %v1788, %v2515
    %v2606 = vadd.f32 %v1793, %v2520
    %v2607 = vadd.f32 %v1798, %v2525
    %v2608 = vadd.f32 %v1803, %v2530
    %v2609 = vadd.f32 %v1808, %v2535
    %v2610 = vadd.f32 %v1813, %v2540
    %v2611 = vadd.f32 %v1818, %v2545
    %v2612 = vadd.f32 %v1823, %v2550
    %v2613 = vadd.f32 %v1828, %v2555
    %v2614 = vadd.f32 %v1833, %v2560
    %v2615 = vadd.f32 %v1838, %v2565
    %v2617 = vsel %vm2114, %v1843, 0
    %v2620 = vsel %vm2114, %v1848, 0
    %v2623 = vsel %vm2114, %v1853, 0
    %v2626 = vsel %vm2114, %v1858, 0
    %v2629 = vsel %vm2114, %v1863, 0
    %v2632 = vsel %vm2114, %v1868, 0
    %v2635 = vsel %vm2114, %v1873, 0
    %v2638 = vsel %vm2114, %v1878, 0
    %v2641 = vsel %vm2114, %v1883, 0
    %v2644 = vsel %vm2114, %v1888, 0
    %v2647 = vsel %vm2114, %v1893, 0
    %v2650 = vsel %vm2114, %v1898, 0
    %v2653 = vsel %vm2114, %v1903, 0
    %v2656 = vsel %vm2114, %v1908, 0
    %v2659 = vsel %vm2114, %v1913, 0
    %v2662 = vsel %vm2114, %v1918, 0
    %v2665 = vsel %vm2114, %v1923, 0
    %v2668 = vsel %vm2114, %v1928, 0
    %v2671 = vsel %vm2114, %v1933, 0
    %v2674 = vsel %vm2114, %v1938, 0
    %v2677 = vsel %vm2114, %v1943, 0
    %v2680 = vsel %vm2114, %v1948, 0
    %v2683 = vsel %vm2114, %v1953, 0
    %v2686 = vsel %vm2114, %v1958, 0
    %v2689 = vsel %vm2114, %v1963, 0
    %v2692 = vsel %vm2114, %v1968, 0
    %v2695 = vsel %vm2114, %v1973, 0
    %v2698 = vsel %vm2114, %v1978, 0
    %v2701 = vsel %vm2114, %v1983, 0
    %v2704 = vsel %vm2114, %v1988, 0
    %v2707 = vsel %vm2114, %v1993, 0
    %v2710 = vsel %vm2114, %v1998, 0
    %v2713 = vsel %vm2114, %v2003, 0
    %v2716 = vsel %vm2114, %v2008, 0
    %v2719 = vsel %vm2114, %v2013, 0
    %v2722 = vsel %vm2114, %v2018, 0
    %v2725 = vsel %vm2114, %v2023, 0
    %v2728 = vsel %vm2114, %v2028, 0
    %v2731 = vsel %vm2114, %v2033, 0
    %v2734 = vsel %vm2114, %v2038, 0
    %v2737 = vsel %vm2114, %v2043, 0
    %v2740 = vsel %vm2114, %v2048, 0
    %v2743 = vsel %vm2114, %v2053, 0
    %v2746 = vsel %vm2114, %v2058, 0
    %v2749 = vsel %vm2114, %v2063, 0
    %v2752 = vsel %vm2114, %v2068, 0
    %v2755 = vsel %vm2114, %v2073, 0
    %v2758 = vsel %vm2114, %v2078, 0
    %v2761 = vsel %vm2259, %v2113, 0
    %2763 = vmatprep.subr.mxu0 0.0
    %2764 = vmatpush1.msra.mxu0 %v2110
    %2765 = vmatprep.subr.mxu0 0.0
    %2766 = vmatpush1.msra.mxu0 %v2111
    %2767 = vmatprep.subr.mxu0 0.0
    %2768 = vmatpush1.msra.mxu0 %v2112
    %2769 = vmatprep.subr.mxu0 0.0
    %2770 = vmatpush1.msra.mxu0 %v2761
    %2771 = vmatprep.subr.mxu0 0.0
    %2772 = vmatpush1.msra.mxu0 0.0
    %2773 = vmatprep.subr.mxu0 0.0
    %2774 = vmatpush1.msra.mxu0 0.0
    %2775 = vmatprep.subr.mxu0 0.0
    %2776 = vmatpush1.msra.mxu0 0.0
    %2777 = vmatprep.subr.mxu0 0.0
    %2778 = vmatpush1.msra.mxu0 0.0
    %2779 = vmatprep.subr.mxu0 0.0
    %2780 = vmatpush1.msra.mxu0 0.0
    %2781 = vmatprep.subr.mxu0 0.0
    %2782 = vmatpush1.msra.mxu0 0.0
    %2783 = vmatprep.subr.mxu0 0.0
    %2784 = vmatpush1.msra.mxu0 0.0
    %2785 = vmatprep.subr.mxu0 0.0
    %2786 = vmatpush1.msra.mxu0 0.0
    %2787 = vmatprep.subr.mxu0 0.0
    %2788 = vmatpush1.msra.mxu0 0.0
    %2789 = vmatprep.subr.mxu0 0.0
    %2790 = vmatpush1.msra.mxu0 0.0
    %2791 = vmatprep.subr.mxu0 0.0
    %2792 = vmatpush1.msra.mxu0 0.0
    %2793 = vmatprep.subr.mxu0 0.0
    %2794 = vmatpush1.msra.mxu0 0.0
    %2795 = vmatprep.subr.mxu0 0.0
    %2796 = vmatpush1.msra.mxu0 0.0
    %2797 = vmatprep.subr.mxu0 0.0
    %2798 = vmatpush1.msra.mxu0 0.0
    %2799 = vmatprep.subr.mxu0 0.0
    %2800 = vmatpush1.msra.mxu0 0.0
    %2801 = vmatprep.subr.mxu0 0.0
    %2802 = vmatpush1.msra.mxu0 0.0
    %2803 = vmatprep.subr.mxu0 0.0
    %2804 = vmatpush1.msra.mxu0 0.0
    %2805 = vmatprep.subr.mxu0 0.0
    %2806 = vmatpush1.msra.mxu0 0.0
    %2807 = vmatprep.subr.mxu0 0.0
    %2808 = vmatpush1.msra.mxu0 0.0
    %2809 = vmatprep.subr.mxu0 0.0
    %2810 = vmatpush1.msra.mxu0 0.0
    %2811 = vmatprep.subr.mxu0 0.0
    %2812 = vmatpush1.msra.mxu0 0.0
    %2813 = vmatprep.subr.mxu0 0.0
    %2814 = vmatpush1.msra.mxu0 0.0
    %2815 = vmatprep.subr.mxu0 0.0
    %2816 = vmatpush1.msra.mxu0 0.0
    %2817 = vmatprep.subr.mxu0 0.0
    %2818 = vmatpush1.msra.mxu0 0.0
    %2819 = vmatprep.subr.mxu0 0.0
    %2820 = vmatpush1.msra.mxu0 0.0
    %2821 = vmatprep.subr.mxu0 0.0
    %2822 = vmatpush1.msra.mxu0 0.0
    %2823 = vmatprep.subr.mxu0 0.0
    %2824 = vmatpush1.msra.mxu0 0.0
    %2825 = vmatprep.subr.mxu0 0.0
    %2826 = vmatpush1.msra.mxu0 0.0
    %2827 = vmatprep.mubr.f32.mxu0 0.0
    %2828 = vmatmul.mubr.f32.gmra.mrb[0].mxu0 %v2617
    %v2829 = vpop.f32.mrb[0].mxu0
    %v2830 = vadd.f32 0.0, %v2829
    %v2831 = vpop.f32.mrb[0].mxu0
    %2832 = vmatprep.mubr.f32.mxu0 0.0
    %2833 = vmatmul.mubr.f32.gmra.mrb[0].mxu0 %v2620
    %v2834 = vpop.f32.mrb[0].mxu0
    %v2835 = vadd.f32 0.0, %v2834
    %v2836 = vpop.f32.mrb[0].mxu0
    %2837 = vmatprep.mubr.f32.mxu0 0.0
    %2838 = vmatmul.mubr.f32.gmra.mrb[0].mxu0 %v2623
    %v2839 = vpop.f32.mrb[0].mxu0
    %v2840 = vadd.f32 0.0, %v2839
    %v2841 = vpop.f32.mrb[0].mxu0
    %2842 = vmatprep.mubr.f32.mxu0 0.0
    %2843 = vmatmul.mubr.f32.gmra.mrb[0].mxu0 %v2626
    %v2844 = vpop.f32.mrb[0].mxu0
    %v2845 = vadd.f32 0.0, %v2844
    %v2846 = vpop.f32.mrb[0].mxu0
    %2847 = vmatprep.mubr.f32.mxu0 0.0
    %2848 = vmatmul.mubr.f32.gmra.mrb[0].mxu0 %v2629
    %v2849 = vpop.f32.mrb[0].mxu0
    %v2850 = vadd.f32 0.0, %v2849
    %v2851 = vpop.f32.mrb[0].mxu0
    %2852 = vmatprep.mubr.f32.mxu0 0.0
    %2853 = vmatmul.mubr.f32.gmra.mrb[0].mxu0 %v2632
    %v2854 = vpop.f32.mrb[0].mxu0
    %v2855 = vadd.f32 0.0, %v2854
    %v2856 = vpop.f32.mrb[0].mxu0
    %2857 = vmatprep.mubr.f32.mxu0 0.0
    %2858 = vmatmul.mubr.f32.gmra.mrb[0].mxu0 %v2635
    %v2859 = vpop.f32.mrb[0].mxu0
    %v2860 = vadd.f32 0.0, %v2859
    %v2861 = vpop.f32.mrb[0].mxu0
    %2862 = vmatprep.mubr.f32.mxu0 0.0
    %2863 = vmatmul.mubr.f32.gmra.mrb[0].mxu0 %v2638
    %v2864 = vpop.f32.mrb[0].mxu0
    %v2865 = vadd.f32 0.0, %v2864
    %v2866 = vpop.f32.mrb[0].mxu0
    %2867 = vmatprep.mubr.f32.mxu0 0.0
    %2868 = vmatmul.mubr.f32.gmra.mrb[0].mxu0 %v2641
    %v2869 = vpop.f32.mrb[0].mxu0
    %v2870 = vadd.f32 0.0, %v2869
    %v2871 = vpop.f32.mrb[0].mxu0
    %2872 = vmatprep.mubr.f32.mxu0 0.0
    %2873 = vmatmul.mubr.f32.gmra.mrb[0].mxu0 %v2644
    %v2874 = vpop.f32.mrb[0].mxu0
    %v2875 = vadd.f32 0.0, %v2874
    %v2876 = vpop.f32.mrb[0].mxu0
    %2877 = vmatprep.mubr.f32.mxu0 0.0
    %2878 = vmatmul.mubr.f32.gmra.mrb[0].mxu0 %v2647
    %v2879 = vpop.f32.mrb[0].mxu0
    %v2880 = vadd.f32 0.0, %v2879
    %v2881 = vpop.f32.mrb[0].mxu0
    %2882 = vmatprep.mubr.f32.mxu0 0.0
    %2883 = vmatmul.mubr.f32.gmra.mrb[0].mxu0 %v2650
    %v2884 = vpop.f32.mrb[0].mxu0
    %v2885 = vadd.f32 0.0, %v2884
    %v2886 = vpop.f32.mrb[0].mxu0
    %2887 = vmatprep.mubr.f32.mxu0 0.0
    %2888 = vmatmul.mubr.f32.gmra.mrb[0].mxu0 %v2653
    %v2889 = vpop.f32.mrb[0].mxu0
    %v2890 = vadd.f32 0.0, %v2889
    %v2891 = vpop.f32.mrb[0].mxu0
    %2892 = vmatprep.mubr.f32.mxu0 0.0
    %2893 = vmatmul.mubr.f32.gmra.mrb[0].mxu0 %v2656
    %v2894 = vpop.f32.mrb[0].mxu0
    %v2895 = vadd.f32 0.0, %v2894
    %v2896 = vpop.f32.mrb[0].mxu0
    %2897 = vmatprep.mubr.f32.mxu0 0.0
    %2898 = vmatmul.mubr.f32.gmra.mrb[0].mxu0 %v2659
    %v2899 = vpop.f32.mrb[0].mxu0
    %v2900 = vadd.f32 0.0, %v2899
    %v2901 = vpop.f32.mrb[0].mxu0
    %2902 = vmatprep.mubr.f32.mxu0 0.0
    %2903 = vmatmul.mubr.f32.gmra.mrb[0].mxu0 %v2662
    %v2904 = vpop.f32.mrb[0].mxu0
    %v2905 = vadd.f32 0.0, %v2904
    %v2906 = vpop.f32.mrb[0].mxu0
    %2907 = vmatprep.mubr.f32.mxu0 0.0
    %2908 = vmatmul.mubr.f32.gmra.mrb[0].mxu0 %v2665
    %v2909 = vpop.f32.mrb[0].mxu0
    %v2910 = vadd.f32 0.0, %v2909
    %v2911 = vpop.f32.mrb[0].mxu0
    %2912 = vmatprep.mubr.f32.mxu0 0.0
    %2913 = vmatmul.mubr.f32.gmra.mrb[0].mxu0 %v2668
    %v2914 = vpop.f32.mrb[0].mxu0
    %v2915 = vadd.f32 0.0, %v2914
    %v2916 = vpop.f32.mrb[0].mxu0
    %2917 = vmatprep.mubr.f32.mxu0 0.0
    %2918 = vmatmul.mubr.f32.gmra.mrb[0].mxu0 %v2671
    %v2919 = vpop.f32.mrb[0].mxu0
    %v2920 = vadd.f32 0.0, %v2919
    %v2921 = vpop.f32.mrb[0].mxu0
    %2922 = vmatprep.mubr.f32.mxu0 0.0
    %2923 = vmatmul.mubr.f32.gmra.mrb[0].mxu0 %v2674
    %v2924 = vpop.f32.mrb[0].mxu0
    %v2925 = vadd.f32 0.0, %v2924
    %v2926 = vpop.f32.mrb[0].mxu0
    %2927 = vmatprep.mubr.f32.mxu0 0.0
    %2928 = vmatmul.mubr.f32.gmra.mrb[0].mxu0 %v2677
    %v2929 = vpop.f32.mrb[0].mxu0
    %v2930 = vadd.f32 0.0, %v2929
    %v2931 = vpop.f32.mrb[0].mxu0
    %2932 = vmatprep.mubr.f32.mxu0 0.0
    %2933 = vmatmul.mubr.f32.gmra.mrb[0].mxu0 %v2680
    %v2934 = vpop.f32.mrb[0].mxu0
    %v2935 = vadd.f32 0.0, %v2934
    %v2936 = vpop.f32.mrb[0].mxu0
    %2937 = vmatprep.mubr.f32.mxu0 0.0
    %2938 = vmatmul.mubr.f32.gmra.mrb[0].mxu0 %v2683
    %v2939 = vpop.f32.mrb[0].mxu0
    %v2940 = vadd.f32 0.0, %v2939
    %v2941 = vpop.f32.mrb[0].mxu0
    %2942 = vmatprep.mubr.f32.mxu0 0.0
    %2943 = vmatmul.mubr.f32.gmra.mrb[0].mxu0 %v2686
    %v2944 = vpop.f32.mrb[0].mxu0
    %v2945 = vadd.f32 0.0, %v2944
    %v2946 = vpop.f32.mrb[0].mxu0
    %2947 = vmatprep.mubr.f32.mxu0 0.0
    %2948 = vmatmul.mubr.f32.gmra.mrb[0].mxu0 %v2689
    %v2949 = vpop.f32.mrb[0].mxu0
    %v2950 = vadd.f32 0.0, %v2949
    %v2951 = vpop.f32.mrb[0].mxu0
    %2952 = vmatprep.mubr.f32.mxu0 0.0
    %2953 = vmatmul.mubr.f32.gmra.mrb[0].mxu0 %v2692
    %v2954 = vpop.f32.mrb[0].mxu0
    %v2955 = vadd.f32 0.0, %v2954
    %v2956 = vpop.f32.mrb[0].mxu0
    %2957 = vmatprep.mubr.f32.mxu0 0.0
    %2958 = vmatmul.mubr.f32.gmra.mrb[0].mxu0 %v2695
    %v2959 = vpop.f32.mrb[0].mxu0
    %v2960 = vadd.f32 0.0, %v2959
    %v2961 = vpop.f32.mrb[0].mxu0
    %2962 = vmatprep.mubr.f32.mxu0 0.0
    %2963 = vmatmul.mubr.f32.gmra.mrb[0].mxu0 %v2698
    %v2964 = vpop.f32.mrb[0].mxu0
    %v2965 = vadd.f32 0.0, %v2964
    %v2966 = vpop.f32.mrb[0].mxu0
    %2967 = vmatprep.mubr.f32.mxu0 0.0
    %2968 = vmatmul.mubr.f32.gmra.mrb[0].mxu0 %v2701
    %v2969 = vpop.f32.mrb[0].mxu0
    %v2970 = vadd.f32 0.0, %v2969
    %v2971 = vpop.f32.mrb[0].mxu0
    %2972 = vmatprep.mubr.f32.mxu0 0.0
    %2973 = vmatmul.mubr.f32.gmra.mrb[0].mxu0 %v2704
    %v2974 = vpop.f32.mrb[0].mxu0
    %v2975 = vadd.f32 0.0, %v2974
    %v2976 = vpop.f32.mrb[0].mxu0
    %2977 = vmatprep.mubr.f32.mxu0 0.0
    %2978 = vmatmul.mubr.f32.gmra.mrb[0].mxu0 %v2707
    %v2979 = vpop.f32.mrb[0].mxu0
    %v2980 = vadd.f32 0.0, %v2979
    %v2981 = vpop.f32.mrb[0].mxu0
    %2982 = vmatprep.mubr.f32.mxu0 0.0
    %2983 = vmatmul.mubr.f32.gmra.mrb[0].mxu0 %v2710
    %v2984 = vpop.f32.mrb[0].mxu0
    %v2985 = vadd.f32 0.0, %v2984
    %v2986 = vpop.f32.mrb[0].mxu0
    %2987 = vmatprep.mubr.f32.mxu0 0.0
    %2988 = vmatmul.mubr.f32.gmra.mrb[0].mxu0 %v2713
    %v2989 = vpop.f32.mrb[0].mxu0
    %v2990 = vadd.f32 0.0, %v2989
    %v2991 = vpop.f32.mrb[0].mxu0
    %2992 = vmatprep.mubr.f32.mxu0 0.0
    %2993 = vmatmul.mubr.f32.gmra.mrb[0].mxu0 %v2716
    %v2994 = vpop.f32.mrb[0].mxu0
    %v2995 = vadd.f32 0.0, %v2994
    %v2996 = vpop.f32.mrb[0].mxu0
    %2997 = vmatprep.mubr.f32.mxu0 0.0
    %2998 = vmatmul.mubr.f32.gmra.mrb[0].mxu0 %v2719
    %v2999 = vpop.f32.mrb[0].mxu0
    %v3000 = vadd.f32 0.0, %v2999
    %v3001 = vpop.f32.mrb[0].mxu0
    %3002 = vmatprep.mubr.f32.mxu0 0.0
    %3003 = vmatmul.mubr.f32.gmra.mrb[0].mxu0 %v2722
    %v3004 = vpop.f32.mrb[0].mxu0
    %v3005 = vadd.f32 0.0, %v3004
    %v3006 = vpop.f32.mrb[0].mxu0
    %3007 = vmatprep.mubr.f32.mxu0 0.0
    %3008 = vmatmul.mubr.f32.gmra.mrb[0].mxu0 %v2725
    %v3009 = vpop.f32.mrb[0].mxu0
    %v3010 = vadd.f32 0.0, %v3009
    %v3011 = vpop.f32.mrb[0].mxu0
    %3012 = vmatprep.mubr.f32.mxu0 0.0
    %3013 = vmatmul.mubr.f32.gmra.mrb[0].mxu0 %v2728
    %v3014 = vpop.f32.mrb[0].mxu0
    %v3015 = vadd.f32 0.0, %v3014
    %v3016 = vpop.f32.mrb[0].mxu0
    %3017 = vmatprep.mubr.f32.mxu0 0.0
    %3018 = vmatmul.mubr.f32.gmra.mrb[0].mxu0 %v2731
    %v3019 = vpop.f32.mrb[0].mxu0
    %v3020 = vadd.f32 0.0, %v3019
    %v3021 = vpop.f32.mrb[0].mxu0
    %3022 = vmatprep.mubr.f32.mxu0 0.0
    %3023 = vmatmul.mubr.f32.gmra.mrb[0].mxu0 %v2734
    %v3024 = vpop.f32.mrb[0].mxu0
    %v3025 = vadd.f32 0.0, %v3024
    %v3026 = vpop.f32.mrb[0].mxu0
    %3027 = vmatprep.mubr.f32.mxu0 0.0
    %3028 = vmatmul.mubr.f32.gmra.mrb[0].mxu0 %v2737
    %v3029 = vpop.f32.mrb[0].mxu0
    %v3030 = vadd.f32 0.0, %v3029
    %v3031 = vpop.f32.mrb[0].mxu0
    %3032 = vmatprep.mubr.f32.mxu0 0.0
    %3033 = vmatmul.mubr.f32.gmra.mrb[0].mxu0 %v2740
    %v3034 = vpop.f32.mrb[0].mxu0
    %v3035 = vadd.f32 0.0, %v3034
    %v3036 = vpop.f32.mrb[0].mxu0
    %3037 = vmatprep.mubr.f32.mxu0 0.0
    %3038 = vmatmul.mubr.f32.gmra.mrb[0].mxu0 %v2743
    %v3039 = vpop.f32.mrb[0].mxu0
    %v3040 = vadd.f32 0.0, %v3039
    %v3041 = vpop.f32.mrb[0].mxu0
    %3042 = vmatprep.mubr.f32.mxu0 0.0
    %3043 = vmatmul.mubr.f32.gmra.mrb[0].mxu0 %v2746
    %v3044 = vpop.f32.mrb[0].mxu0
    %v3045 = vadd.f32 0.0, %v3044
    %v3046 = vpop.f32.mrb[0].mxu0
    %3047 = vmatprep.mubr.f32.mxu0 0.0
    %3048 = vmatmul.mubr.f32.gmra.mrb[0].mxu0 %v2749
    %v3049 = vpop.f32.mrb[0].mxu0
    %v3050 = vadd.f32 0.0, %v3049
    %v3051 = vpop.f32.mrb[0].mxu0
    %3052 = vmatprep.mubr.f32.mxu0 0.0
    %3053 = vmatmul.mubr.f32.gmra.mrb[0].mxu0 %v2752
    %v3054 = vpop.f32.mrb[0].mxu0
    %v3055 = vadd.f32 0.0, %v3054
    %v3056 = vpop.f32.mrb[0].mxu0
    %3057 = vmatprep.mubr.f32.mxu0 0.0
    %3058 = vmatmul.mubr.f32.gmra.mrb[0].mxu0 %v2755
    %v3059 = vpop.f32.mrb[0].mxu0
    %v3060 = vadd.f32 0.0, %v3059
    %v3061 = vpop.f32.mrb[0].mxu0
    %3062 = vmatprep.mubr.f32.mxu0 0.0
    %3063 = vmatmul.mubr.f32.gmra.mrb[0].mxu0 %v2758
    %v3064 = vpop.f32.mrb[0].mxu0
    %v3065 = vadd.f32 0.0, %v3064
    %v3066 = vpop.f32.mrb[0].mxu0
    %3067 = vdwg.mxu0
    %v3068 = vadd.f32 %v2568, %v2830
    %v3069 = vadd.f32 %v2569, %v2835
    %v3070 = vadd.f32 %v2570, %v2840
    %v3071 = vadd.f32 %v2571, %v2845
    %v3072 = vadd.f32 %v2572, %v2850
    %v3073 = vadd.f32 %v2573, %v2855
    %v3074 = vadd.f32 %v2574, %v2860
    %v3075 = vadd.f32 %v2575, %v2865
    %v3076 = vadd.f32 %v2576, %v2870
    %v3077 = vadd.f32 %v2577, %v2875
    %v3078 = vadd.f32 %v2578, %v2880
    %v3079 = vadd.f32 %v2579, %v2885
    %v3080 = vadd.f32 %v2580, %v2890
    %v3081 = vadd.f32 %v2581, %v2895
    %v3082 = vadd.f32 %v2582, %v2900
    %v3083 = vadd.f32 %v2583, %v2905
    %v3084 = vadd.f32 %v2584, %v2910
    %v3085 = vadd.f32 %v2585, %v2915
    %v3086 = vadd.f32 %v2586, %v2920
    %v3087 = vadd.f32 %v2587, %v2925
    %v3088 = vadd.f32 %v2588, %v2930
    %v3089 = vadd.f32 %v2589, %v2935
    %v3090 = vadd.f32 %v2590, %v2940
    %v3091 = vadd.f32 %v2591, %v2945
    %v3092 = vadd.f32 %v2592, %v2950
    %v3093 = vadd.f32 %v2593, %v2955
    %v3094 = vadd.f32 %v2594, %v2960
    %v3095 = vadd.f32 %v2595, %v2965
    %v3096 = vadd.f32 %v2596, %v2970
    %v3097 = vadd.f32 %v2597, %v2975
    %v3098 = vadd.f32 %v2598, %v2980
    %v3099 = vadd.f32 %v2599, %v2985
    %v3100 = vadd.f32 %v2600, %v2990
    %v3101 = vadd.f32 %v2601, %v2995
    %v3102 = vadd.f32 %v2602, %v3000
    %v3103 = vadd.f32 %v2603, %v3005
    %v3104 = vadd.f32 %v2604, %v3010
    %v3105 = vadd.f32 %v2605, %v3015
    %v3106 = vadd.f32 %v2606, %v3020
    %v3107 = vadd.f32 %v2607, %v3025
    %v3108 = vadd.f32 %v2608, %v3030
    %v3109 = vadd.f32 %v2609, %v3035
    %v3110 = vadd.f32 %v2610, %v3040
    %v3111 = vadd.f32 %v2611, %v3045
    %v3112 = vadd.f32 %v2612, %v3050
    %v3113 = vadd.f32 %v2613, %v3055
    %v3114 = vadd.f32 %v2614, %v3060
    %v3115 = vadd.f32 %v2615, %v3065
    %v3116 = vsel %vm2114, %v3068, 0.0
    %3117 = vadd.xlane.f32.xlu0 %v3116
    %v3118 = vpop.xlane.xlu0 %3117
    %v3119 = vsel %vm2114, %v3069, 0.0
    %3120 = vadd.xlane.f32.xlu0 %v3119
    %v3121 = vpop.xlane.xlu0 %3120
    %v3122 = vsel %vm2114, %v3070, 0.0
    %3123 = vadd.xlane.f32.xlu0 %v3122
    %v3124 = vpop.xlane.xlu0 %3123
    %v3125 = vsel %vm2114, %v3071, 0.0
    %3126 = vadd.xlane.f32.xlu0 %v3125
    %v3127 = vpop.xlane.xlu0 %3126
    %v3128 = vsel %vm2114, %v3072, 0.0
    %3129 = vadd.xlane.f32.xlu0 %v3128
    %v3130 = vpop.xlane.xlu0 %3129
    %v3131 = vsel %vm2114, %v3073, 0.0
    %3132 = vadd.xlane.f32.xlu0 %v3131
    %v3133 = vpop.xlane.xlu0 %3132
    %v3134 = vsel %vm2114, %v3074, 0.0
    %3135 = vadd.xlane.f32.xlu0 %v3134
    %v3136 = vpop.xlane.xlu0 %3135
    %v3137 = vsel %vm2114, %v3075, 0.0
    %3138 = vadd.xlane.f32.xlu0 %v3137
    %v3139 = vpop.xlane.xlu0 %3138
    %v3140 = vsel %vm2114, %v3076, 0.0
    %3141 = vadd.xlane.f32.xlu0 %v3140
    %v3142 = vpop.xlane.xlu0 %3141
    %v3143 = vsel %vm2114, %v3077, 0.0
    %3144 = vadd.xlane.f32.xlu0 %v3143
    %v3145 = vpop.xlane.xlu0 %3144
    %v3146 = vsel %vm2114, %v3078, 0.0
    %3147 = vadd.xlane.f32.xlu0 %v3146
    %v3148 = vpop.xlane.xlu0 %3147
    %v3149 = vsel %vm2114, %v3079, 0.0
    %3150 = vadd.xlane.f32.xlu0 %v3149
    %v3151 = vpop.xlane.xlu0 %3150
    %v3152 = vsel %vm2114, %v3080, 0.0
    %3153 = vadd.xlane.f32.xlu0 %v3152
    %v3154 = vpop.xlane.xlu0 %3153
    %v3155 = vsel %vm2114, %v3081, 0.0
    %3156 = vadd.xlane.f32.xlu0 %v3155
    %v3157 = vpop.xlane.xlu0 %3156
    %v3158 = vsel %vm2114, %v3082, 0.0
    %3159 = vadd.xlane.f32.xlu0 %v3158
    %v3160 = vpop.xlane.xlu0 %3159
    %v3161 = vsel %vm2114, %v3083, 0.0
    %3162 = vadd.xlane.f32.xlu0 %v3161
    %v3163 = vpop.xlane.xlu0 %3162
    %v3164 = vsel %vm2114, %v3084, 0.0
    %3165 = vadd.xlane.f32.xlu0 %v3164
    %v3166 = vpop.xlane.xlu0 %3165
    %v3167 = vsel %vm2114, %v3085, 0.0
    %3168 = vadd.xlane.f32.xlu0 %v3167
    %v3169 = vpop.xlane.xlu0 %3168
    %v3170 = vsel %vm2114, %v3086, 0.0
    %3171 = vadd.xlane.f32.xlu0 %v3170
    %v3172 = vpop.xlane.xlu0 %3171
    %v3173 = vsel %vm2114, %v3087, 0.0
    %3174 = vadd.xlane.f32.xlu0 %v3173
    %v3175 = vpop.xlane.xlu0 %3174
    %v3176 = vsel %vm2114, %v3088, 0.0
    %3177 = vadd.xlane.f32.xlu0 %v3176
    %v3178 = vpop.xlane.xlu0 %3177
    %v3179 = vsel %vm2114, %v3089, 0.0
    %3180 = vadd.xlane.f32.xlu0 %v3179
    %v3181 = vpop.xlane.xlu0 %3180
    %v3182 = vsel %vm2114, %v3090, 0.0
    %3183 = vadd.xlane.f32.xlu0 %v3182
    %v3184 = vpop.xlane.xlu0 %3183
    %v3185 = vsel %vm2114, %v3091, 0.0
    %3186 = vadd.xlane.f32.xlu0 %v3185
    %v3187 = vpop.xlane.xlu0 %3186
    %v3188 = vsel %vm2114, %v3092, 0.0
    %3189 = vadd.xlane.f32.xlu0 %v3188
    %v3190 = vpop.xlane.xlu0 %3189
    %v3191 = vsel %vm2114, %v3093, 0.0
    %3192 = vadd.xlane.f32.xlu0 %v3191
    %v3193 = vpop.xlane.xlu0 %3192
    %v3194 = vsel %vm2114, %v3094, 0.0
    %3195 = vadd.xlane.f32.xlu0 %v3194
    %v3196 = vpop.xlane.xlu0 %3195
    %v3197 = vsel %vm2114, %v3095, 0.0
    %3198 = vadd.xlane.f32.xlu0 %v3197
    %v3199 = vpop.xlane.xlu0 %3198
    %v3200 = vsel %vm2114, %v3096, 0.0
    %3201 = vadd.xlane.f32.xlu0 %v3200
    %v3202 = vpop.xlane.xlu0 %3201
    %v3203 = vsel %vm2114, %v3097, 0.0
    %3204 = vadd.xlane.f32.xlu0 %v3203
    %v3205 = vpop.xlane.xlu0 %3204
    %v3206 = vsel %vm2114, %v3098, 0.0
    %3207 = vadd.xlane.f32.xlu0 %v3206
    %v3208 = vpop.xlane.xlu0 %3207
    %v3209 = vsel %vm2114, %v3099, 0.0
    %3210 = vadd.xlane.f32.xlu0 %v3209
    %v3211 = vpop.xlane.xlu0 %3210
    %v3212 = vsel %vm2114, %v3100, 0.0
    %3213 = vadd.xlane.f32.xlu0 %v3212
    %v3214 = vpop.xlane.xlu0 %3213
    %v3215 = vsel %vm2114, %v3101, 0.0
    %3216 = vadd.xlane.f32.xlu0 %v3215
    %v3217 = vpop.xlane.xlu0 %3216
    %v3218 = vsel %vm2114, %v3102, 0.0
    %3219 = vadd.xlane.f32.xlu0 %v3218
    %v3220 = vpop.xlane.xlu0 %3219
    %v3221 = vsel %vm2114, %v3103, 0.0
    %3222 = vadd.xlane.f32.xlu0 %v3221
    %v3223 = vpop.xlane.xlu0 %3222
    %v3224 = vsel %vm2114, %v3104, 0.0
    %3225 = vadd.xlane.f32.xlu0 %v3224
    %v3226 = vpop.xlane.xlu0 %3225
    %v3227 = vsel %vm2114, %v3105, 0.0
    %3228 = vadd.xlane.f32.xlu0 %v3227
    %v3229 = vpop.xlane.xlu0 %3228
    %v3230 = vsel %vm2114, %v3106, 0.0
    %3231 = vadd.xlane.f32.xlu0 %v3230
    %v3232 = vpop.xlane.xlu0 %3231
    %v3233 = vsel %vm2114, %v3107, 0.0
    %3234 = vadd.xlane.f32.xlu0 %v3233
    %v3235 = vpop.xlane.xlu0 %3234
    %v3236 = vsel %vm2114, %v3108, 0.0
    %3237 = vadd.xlane.f32.xlu0 %v3236
    %v3238 = vpop.xlane.xlu0 %3237
    %v3239 = vsel %vm2114, %v3109, 0.0
    %3240 = vadd.xlane.f32.xlu0 %v3239
    %v3241 = vpop.xlane.xlu0 %3240
    %v3242 = vsel %vm2114, %v3110, 0.0
    %3243 = vadd.xlane.f32.xlu0 %v3242
    %v3244 = vpop.xlane.xlu0 %3243
    %v3245 = vsel %vm2114, %v3111, 0.0
    %3246 = vadd.xlane.f32.xlu0 %v3245
    %v3247 = vpop.xlane.xlu0 %3246
    %v3248 = vsel %vm2114, %v3112, 0.0
    %3249 = vadd.xlane.f32.xlu0 %v3248
    %v3250 = vpop.xlane.xlu0 %3249
    %v3251 = vsel %vm2114, %v3113, 0.0
    %3252 = vadd.xlane.f32.xlu0 %v3251
    %v3253 = vpop.xlane.xlu0 %3252
    %v3254 = vsel %vm2114, %v3114, 0.0
    %3255 = vadd.xlane.f32.xlu0 %v3254
    %v3256 = vpop.xlane.xlu0 %3255
    %v3257 = vsel %vm2114, %v3115, 0.0
    %3258 = vadd.xlane.f32.xlu0 %v3257
    %v3259 = vpop.xlane.xlu0 %3258
    %v3260 = vmul.f32 %v3068, %v3068
    %v3261 = vmul.f32 %v3069, %v3069
    %v3262 = vmul.f32 %v3070, %v3070
    %v3263 = vmul.f32 %v3071, %v3071
    %v3264 = vmul.f32 %v3072, %v3072
    %v3265 = vmul.f32 %v3073, %v3073
    %v3266 = vmul.f32 %v3074, %v3074
    %v3267 = vmul.f32 %v3075, %v3075
    %v3268 = vmul.f32 %v3076, %v3076
    %v3269 = vmul.f32 %v3077, %v3077
    %v3270 = vmul.f32 %v3078, %v3078
    %v3271 = vmul.f32 %v3079, %v3079
    %v3272 = vmul.f32 %v3080, %v3080
    %v3273 = vmul.f32 %v3081, %v3081
    %v3274 = vmul.f32 %v3082, %v3082
    %v3275 = vmul.f32 %v3083, %v3083
    %v3276 = vmul.f32 %v3084, %v3084
    %v3277 = vmul.f32 %v3085, %v3085
    %v3278 = vmul.f32 %v3086, %v3086
    %v3279 = vmul.f32 %v3087, %v3087
    %v3280 = vmul.f32 %v3088, %v3088
    %v3281 = vmul.f32 %v3089, %v3089
    %v3282 = vmul.f32 %v3090, %v3090
    %v3283 = vmul.f32 %v3091, %v3091
    %v3284 = vmul.f32 %v3092, %v3092
    %v3285 = vmul.f32 %v3093, %v3093
    %v3286 = vmul.f32 %v3094, %v3094
    %v3287 = vmul.f32 %v3095, %v3095
    %v3288 = vmul.f32 %v3096, %v3096
    %v3289 = vmul.f32 %v3097, %v3097
    %v3290 = vmul.f32 %v3098, %v3098
    %v3291 = vmul.f32 %v3099, %v3099
    %v3292 = vmul.f32 %v3100, %v3100
    %v3293 = vmul.f32 %v3101, %v3101
    %v3294 = vmul.f32 %v3102, %v3102
    %v3295 = vmul.f32 %v3103, %v3103
    %v3296 = vmul.f32 %v3104, %v3104
    %v3297 = vmul.f32 %v3105, %v3105
    %v3298 = vmul.f32 %v3106, %v3106
    %v3299 = vmul.f32 %v3107, %v3107
    %v3300 = vmul.f32 %v3108, %v3108
    %v3301 = vmul.f32 %v3109, %v3109
    %v3302 = vmul.f32 %v3110, %v3110
    %v3303 = vmul.f32 %v3111, %v3111
    %v3304 = vmul.f32 %v3112, %v3112
    %v3305 = vmul.f32 %v3113, %v3113
    %v3306 = vmul.f32 %v3114, %v3114
    %v3307 = vmul.f32 %v3115, %v3115
    %v3308 = vsel %vm2114, %v3260, 0.0
    %3309 = vadd.xlane.f32.xlu0 %v3308
    %v3310 = vpop.xlane.xlu0 %3309
    %v3311 = vsel %vm2114, %v3261, 0.0
    %3312 = vadd.xlane.f32.xlu0 %v3311
    %v3313 = vpop.xlane.xlu0 %3312
    %v3314 = vsel %vm2114, %v3262, 0.0
    %3315 = vadd.xlane.f32.xlu0 %v3314
    %v3316 = vpop.xlane.xlu0 %3315
    %v3317 = vsel %vm2114, %v3263, 0.0
    %3318 = vadd.xlane.f32.xlu0 %v3317
    %v3319 = vpop.xlane.xlu0 %3318
    %v3320 = vsel %vm2114, %v3264, 0.0
    %3321 = vadd.xlane.f32.xlu0 %v3320
    %v3322 = vpop.xlane.xlu0 %3321
    %v3323 = vsel %vm2114, %v3265, 0.0
    %3324 = vadd.xlane.f32.xlu0 %v3323
    %v3325 = vpop.xlane.xlu0 %3324
    %v3326 = vsel %vm2114, %v3266, 0.0
    %3327 = vadd.xlane.f32.xlu0 %v3326
    %v3328 = vpop.xlane.xlu0 %3327
    %v3329 = vsel %vm2114, %v3267, 0.0
    %3330 = vadd.xlane.f32.xlu0 %v3329
    %v3331 = vpop.xlane.xlu0 %3330
    %v3332 = vsel %vm2114, %v3268, 0.0
    %3333 = vadd.xlane.f32.xlu0 %v3332
    %v3334 = vpop.xlane.xlu0 %3333
    %v3335 = vsel %vm2114, %v3269, 0.0
    %3336 = vadd.xlane.f32.xlu0 %v3335
    %v3337 = vpop.xlane.xlu0 %3336
    %v3338 = vsel %vm2114, %v3270, 0.0
    %3339 = vadd.xlane.f32.xlu0 %v3338
    %v3340 = vpop.xlane.xlu0 %3339
    %v3341 = vsel %vm2114, %v3271, 0.0
    %3342 = vadd.xlane.f32.xlu0 %v3341
    %v3343 = vpop.xlane.xlu0 %3342
    %v3344 = vsel %vm2114, %v3272, 0.0
    %3345 = vadd.xlane.f32.xlu0 %v3344
    %v3346 = vpop.xlane.xlu0 %3345
    %v3347 = vsel %vm2114, %v3273, 0.0
    %3348 = vadd.xlane.f32.xlu0 %v3347
    %v3349 = vpop.xlane.xlu0 %3348
    %v3350 = vsel %vm2114, %v3274, 0.0
    %3351 = vadd.xlane.f32.xlu0 %v3350
    %v3352 = vpop.xlane.xlu0 %3351
    %v3353 = vsel %vm2114, %v3275, 0.0
    %3354 = vadd.xlane.f32.xlu0 %v3353
    %v3355 = vpop.xlane.xlu0 %3354
    %v3356 = vsel %vm2114, %v3276, 0.0
    %3357 = vadd.xlane.f32.xlu0 %v3356
    %v3358 = vpop.xlane.xlu0 %3357
    %v3359 = vsel %vm2114, %v3277, 0.0
    %3360 = vadd.xlane.f32.xlu0 %v3359
    %v3361 = vpop.xlane.xlu0 %3360
    %v3362 = vsel %vm2114, %v3278, 0.0
    %3363 = vadd.xlane.f32.xlu0 %v3362
    %v3364 = vpop.xlane.xlu0 %3363
    %v3365 = vsel %vm2114, %v3279, 0.0
    %3366 = vadd.xlane.f32.xlu0 %v3365
    %v3367 = vpop.xlane.xlu0 %3366
    %v3368 = vsel %vm2114, %v3280, 0.0
    %3369 = vadd.xlane.f32.xlu0 %v3368
    %v3370 = vpop.xlane.xlu0 %3369
    %v3371 = vsel %vm2114, %v3281, 0.0
    %3372 = vadd.xlane.f32.xlu0 %v3371
    %v3373 = vpop.xlane.xlu0 %3372
    %v3374 = vsel %vm2114, %v3282, 0.0
    %3375 = vadd.xlane.f32.xlu0 %v3374
    %v3376 = vpop.xlane.xlu0 %3375
    %v3377 = vsel %vm2114, %v3283, 0.0
    %3378 = vadd.xlane.f32.xlu0 %v3377
    %v3379 = vpop.xlane.xlu0 %3378
    %v3380 = vsel %vm2114, %v3284, 0.0
    %3381 = vadd.xlane.f32.xlu0 %v3380
    %v3382 = vpop.xlane.xlu0 %3381
    %v3383 = vsel %vm2114, %v3285, 0.0
    %3384 = vadd.xlane.f32.xlu0 %v3383
    %v3385 = vpop.xlane.xlu0 %3384
    %v3386 = vsel %vm2114, %v3286, 0.0
    %3387 = vadd.xlane.f32.xlu0 %v3386
    %v3388 = vpop.xlane.xlu0 %3387
    %v3389 = vsel %vm2114, %v3287, 0.0
    %3390 = vadd.xlane.f32.xlu0 %v3389
    %v3391 = vpop.xlane.xlu0 %3390
    %v3392 = vsel %vm2114, %v3288, 0.0
    %3393 = vadd.xlane.f32.xlu0 %v3392
    %v3394 = vpop.xlane.xlu0 %3393
    %v3395 = vsel %vm2114, %v3289, 0.0
    %3396 = vadd.xlane.f32.xlu0 %v3395
    %v3397 = vpop.xlane.xlu0 %3396
    %v3398 = vsel %vm2114, %v3290, 0.0
    %3399 = vadd.xlane.f32.xlu0 %v3398
    %v3400 = vpop.xlane.xlu0 %3399
    %v3401 = vsel %vm2114, %v3291, 0.0
    %3402 = vadd.xlane.f32.xlu0 %v3401
    %v3403 = vpop.xlane.xlu0 %3402
    %v3404 = vsel %vm2114, %v3292, 0.0
    %3405 = vadd.xlane.f32.xlu0 %v3404
    %v3406 = vpop.xlane.xlu0 %3405
    %v3407 = vsel %vm2114, %v3293, 0.0
    %3408 = vadd.xlane.f32.xlu0 %v3407
    %v3409 = vpop.xlane.xlu0 %3408
    %v3410 = vsel %vm2114, %v3294, 0.0
    %3411 = vadd.xlane.f32.xlu0 %v3410
    %v3412 = vpop.xlane.xlu0 %3411
    %v3413 = vsel %vm2114, %v3295, 0.0
    %3414 = vadd.xlane.f32.xlu0 %v3413
    %v3415 = vpop.xlane.xlu0 %3414
    %v3416 = vsel %vm2114, %v3296, 0.0
    %3417 = vadd.xlane.f32.xlu0 %v3416
    %v3418 = vpop.xlane.xlu0 %3417
    %v3419 = vsel %vm2114, %v3297, 0.0
    %3420 = vadd.xlane.f32.xlu0 %v3419
    %v3421 = vpop.xlane.xlu0 %3420
    %v3422 = vsel %vm2114, %v3298, 0.0
    %3423 = vadd.xlane.f32.xlu0 %v3422
    %v3424 = vpop.xlane.xlu0 %3423
    %v3425 = vsel %vm2114, %v3299, 0.0
    %3426 = vadd.xlane.f32.xlu0 %v3425
    %v3427 = vpop.xlane.xlu0 %3426
    %v3428 = vsel %vm2114, %v3300, 0.0
    %3429 = vadd.xlane.f32.xlu0 %v3428
    %v3430 = vpop.xlane.xlu0 %3429
    %v3431 = vsel %vm2114, %v3301, 0.0
    %3432 = vadd.xlane.f32.xlu0 %v3431
    %v3433 = vpop.xlane.xlu0 %3432
    %v3434 = vsel %vm2114, %v3302, 0.0
    %3435 = vadd.xlane.f32.xlu0 %v3434
    %v3436 = vpop.xlane.xlu0 %3435
    %v3437 = vsel %vm2114, %v3303, 0.0
    %3438 = vadd.xlane.f32.xlu0 %v3437
    %v3439 = vpop.xlane.xlu0 %3438
    %v3440 = vsel %vm2114, %v3304, 0.0
    %3441 = vadd.xlane.f32.xlu0 %v3440
    %v3442 = vpop.xlane.xlu0 %3441
    %v3443 = vsel %vm2114, %v3305, 0.0
    %3444 = vadd.xlane.f32.xlu0 %v3443
    %v3445 = vpop.xlane.xlu0 %3444
    %v3446 = vsel %vm2114, %v3306, 0.0
    %3447 = vadd.xlane.f32.xlu0 %v3446
    %v3448 = vpop.xlane.xlu0 %3447
    %v3449 = vsel %vm2114, %v3307, 0.0
    %3450 = vadd.xlane.f32.xlu0 %v3449
    %v3451 = vpop.xlane.xlu0 %3450
    %v3452 = vmul.f32 %v3118, 0.04
    %v3453 = vmul.f32 %v3121, 0.04
    %v3454 = vmul.f32 %v3124, 0.04
    %v3455 = vmul.f32 %v3127, 0.04
    %v3456 = vmul.f32 %v3130, 0.04
    %v3457 = vmul.f32 %v3133, 0.04
    %v3458 = vmul.f32 %v3136, 0.04
    %v3459 = vmul.f32 %v3139, 0.04
    %v3460 = vmul.f32 %v3142, 0.04
    %v3461 = vmul.f32 %v3145, 0.04
    %v3462 = vmul.f32 %v3148, 0.04
    %v3463 = vmul.f32 %v3151, 0.04
    %v3464 = vmul.f32 %v3154, 0.04
    %v3465 = vmul.f32 %v3157, 0.04
    %v3466 = vmul.f32 %v3160, 0.04
    %v3467 = vmul.f32 %v3163, 0.04
    %v3468 = vmul.f32 %v3166, 0.04
    %v3469 = vmul.f32 %v3169, 0.04
    %v3470 = vmul.f32 %v3172, 0.04
    %v3471 = vmul.f32 %v3175, 0.04
    %v3472 = vmul.f32 %v3178, 0.04
    %v3473 = vmul.f32 %v3181, 0.04
    %v3474 = vmul.f32 %v3184, 0.04
    %v3475 = vmul.f32 %v3187, 0.04
    %v3476 = vmul.f32 %v3190, 0.04
    %v3477 = vmul.f32 %v3193, 0.04
    %v3478 = vmul.f32 %v3196, 0.04
    %v3479 = vmul.f32 %v3199, 0.04
    %v3480 = vmul.f32 %v3202, 0.04
    %v3481 = vmul.f32 %v3205, 0.04
    %v3482 = vmul.f32 %v3208, 0.04
    %v3483 = vmul.f32 %v3211, 0.04
    %v3484 = vmul.f32 %v3214, 0.04
    %v3485 = vmul.f32 %v3217, 0.04
    %v3486 = vmul.f32 %v3220, 0.04
    %v3487 = vmul.f32 %v3223, 0.04
    %v3488 = vmul.f32 %v3226, 0.04
    %v3489 = vmul.f32 %v3229, 0.04
    %v3490 = vmul.f32 %v3232, 0.04
    %v3491 = vmul.f32 %v3235, 0.04
    %v3492 = vmul.f32 %v3238, 0.04
    %v3493 = vmul.f32 %v3241, 0.04
    %v3494 = vmul.f32 %v3244, 0.04
    %v3495 = vmul.f32 %v3247, 0.04
    %v3496 = vmul.f32 %v3250, 0.04
    %v3497 = vmul.f32 %v3253, 0.04
    %v3498 = vmul.f32 %v3256, 0.04
    %v3499 = vmul.f32 %v3259, 0.04
    %v3500 = vmul.f32 %v3310, 0.04
    %v3501 = vmul.f32 %v3313, 0.04
    %v3502 = vmul.f32 %v3316, 0.04
    %v3503 = vmul.f32 %v3319, 0.04
    %v3504 = vmul.f32 %v3322, 0.04
    %v3505 = vmul.f32 %v3325, 0.04
    %v3506 = vmul.f32 %v3328, 0.04
    %v3507 = vmul.f32 %v3331, 0.04
    %v3508 = vmul.f32 %v3334, 0.04
    %v3509 = vmul.f32 %v3337, 0.04
    %v3510 = vmul.f32 %v3340, 0.04
    %v3511 = vmul.f32 %v3343, 0.04
    %v3512 = vmul.f32 %v3346, 0.04
    %v3513 = vmul.f32 %v3349, 0.04
    %v3514 = vmul.f32 %v3352, 0.04
    %v3515 = vmul.f32 %v3355, 0.04
    %v3516 = vmul.f32 %v3358, 0.04
    %v3517 = vmul.f32 %v3361, 0.04
    %v3518 = vmul.f32 %v3364, 0.04
    %v3519 = vmul.f32 %v3367, 0.04
    %v3520 = vmul.f32 %v3370, 0.04
    %v3521 = vmul.f32 %v3373, 0.04
    %v3522 = vmul.f32 %v3376, 0.04
    %v3523 = vmul.f32 %v3379, 0.04
    %v3524 = vmul.f32 %v3382, 0.04
    %v3525 = vmul.f32 %v3385, 0.04
    %v3526 = vmul.f32 %v3388, 0.04
    %v3527 = vmul.f32 %v3391, 0.04
    %v3528 = vmul.f32 %v3394, 0.04
    %v3529 = vmul.f32 %v3397, 0.04
    %v3530 = vmul.f32 %v3400, 0.04
    %v3531 = vmul.f32 %v3403, 0.04
    %v3532 = vmul.f32 %v3406, 0.04
    %v3533 = vmul.f32 %v3409, 0.04
    %v3534 = vmul.f32 %v3412, 0.04
    %v3535 = vmul.f32 %v3415, 0.04
    %v3536 = vmul.f32 %v3418, 0.04
    %v3537 = vmul.f32 %v3421, 0.04
    %v3538 = vmul.f32 %v3424, 0.04
    %v3539 = vmul.f32 %v3427, 0.04
    %v3540 = vmul.f32 %v3430, 0.04
    %v3541 = vmul.f32 %v3433, 0.04
    %v3542 = vmul.f32 %v3436, 0.04
    %v3543 = vmul.f32 %v3439, 0.04
    %v3544 = vmul.f32 %v3442, 0.04
    %v3545 = vmul.f32 %v3445, 0.04
    %v3546 = vmul.f32 %v3448, 0.04
    %v3547 = vmul.f32 %v3451, 0.04
    %v3548 = vmul.f32 %v3452, %v3452
    %v3549 = vmul.f32 %v3453, %v3453
    %v3550 = vmul.f32 %v3454, %v3454
    %v3551 = vmul.f32 %v3455, %v3455
    %v3552 = vmul.f32 %v3456, %v3456
    %v3553 = vmul.f32 %v3457, %v3457
    %v3554 = vmul.f32 %v3458, %v3458
    %v3555 = vmul.f32 %v3459, %v3459
    %v3556 = vmul.f32 %v3460, %v3460
    %v3557 = vmul.f32 %v3461, %v3461
    %v3558 = vmul.f32 %v3462, %v3462
    %v3559 = vmul.f32 %v3463, %v3463
    %v3560 = vmul.f32 %v3464, %v3464
    %v3561 = vmul.f32 %v3465, %v3465
    %v3562 = vmul.f32 %v3466, %v3466
    %v3563 = vmul.f32 %v3467, %v3467
    %v3564 = vmul.f32 %v3468, %v3468
    %v3565 = vmul.f32 %v3469, %v3469
    %v3566 = vmul.f32 %v3470, %v3470
    %v3567 = vmul.f32 %v3471, %v3471
    %v3568 = vmul.f32 %v3472, %v3472
    %v3569 = vmul.f32 %v3473, %v3473
    %v3570 = vmul.f32 %v3474, %v3474
    %v3571 = vmul.f32 %v3475, %v3475
    %v3572 = vmul.f32 %v3476, %v3476
    %v3573 = vmul.f32 %v3477, %v3477
    %v3574 = vmul.f32 %v3478, %v3478
    %v3575 = vmul.f32 %v3479, %v3479
    %v3576 = vmul.f32 %v3480, %v3480
    %v3577 = vmul.f32 %v3481, %v3481
    %v3578 = vmul.f32 %v3482, %v3482
    %v3579 = vmul.f32 %v3483, %v3483
    %v3580 = vmul.f32 %v3484, %v3484
    %v3581 = vmul.f32 %v3485, %v3485
    %v3582 = vmul.f32 %v3486, %v3486
    %v3583 = vmul.f32 %v3487, %v3487
    %v3584 = vmul.f32 %v3488, %v3488
    %v3585 = vmul.f32 %v3489, %v3489
    %v3586 = vmul.f32 %v3490, %v3490
    %v3587 = vmul.f32 %v3491, %v3491
    %v3588 = vmul.f32 %v3492, %v3492
    %v3589 = vmul.f32 %v3493, %v3493
    %v3590 = vmul.f32 %v3494, %v3494
    %v3591 = vmul.f32 %v3495, %v3495
    %v3592 = vmul.f32 %v3496, %v3496
    %v3593 = vmul.f32 %v3497, %v3497
    %v3594 = vmul.f32 %v3498, %v3498
    %v3595 = vmul.f32 %v3499, %v3499
    %v3596 = vsub.f32 %v3500, %v3548
    %v3597 = vsub.f32 %v3501, %v3549
    %v3598 = vsub.f32 %v3502, %v3550
    %v3599 = vsub.f32 %v3503, %v3551
    %v3600 = vsub.f32 %v3504, %v3552
    %v3601 = vsub.f32 %v3505, %v3553
    %v3602 = vsub.f32 %v3506, %v3554
    %v3603 = vsub.f32 %v3507, %v3555
    %v3604 = vsub.f32 %v3508, %v3556
    %v3605 = vsub.f32 %v3509, %v3557
    %v3606 = vsub.f32 %v3510, %v3558
    %v3607 = vsub.f32 %v3511, %v3559
    %v3608 = vsub.f32 %v3512, %v3560
    %v3609 = vsub.f32 %v3513, %v3561
    %v3610 = vsub.f32 %v3514, %v3562
    %v3611 = vsub.f32 %v3515, %v3563
    %v3612 = vsub.f32 %v3516, %v3564
    %v3613 = vsub.f32 %v3517, %v3565
    %v3614 = vsub.f32 %v3518, %v3566
    %v3615 = vsub.f32 %v3519, %v3567
    %v3616 = vsub.f32 %v3520, %v3568
    %v3617 = vsub.f32 %v3521, %v3569
    %v3618 = vsub.f32 %v3522, %v3570
    %v3619 = vsub.f32 %v3523, %v3571
    %v3620 = vsub.f32 %v3524, %v3572
    %v3621 = vsub.f32 %v3525, %v3573
    %v3622 = vsub.f32 %v3526, %v3574
    %v3623 = vsub.f32 %v3527, %v3575
    %v3624 = vsub.f32 %v3528, %v3576
    %v3625 = vsub.f32 %v3529, %v3577
    %v3626 = vsub.f32 %v3530, %v3578
    %v3627 = vsub.f32 %v3531, %v3579
    %v3628 = vsub.f32 %v3532, %v3580
    %v3629 = vsub.f32 %v3533, %v3581
    %v3630 = vsub.f32 %v3534, %v3582
    %v3631 = vsub.f32 %v3535, %v3583
    %v3632 = vsub.f32 %v3536, %v3584
    %v3633 = vsub.f32 %v3537, %v3585
    %v3634 = vsub.f32 %v3538, %v3586
    %v3635 = vsub.f32 %v3539, %v3587
    %v3636 = vsub.f32 %v3540, %v3588
    %v3637 = vsub.f32 %v3541, %v3589
    %v3638 = vsub.f32 %v3542, %v3590
    %v3639 = vsub.f32 %v3543, %v3591
    %v3640 = vsub.f32 %v3544, %v3592
    %v3641 = vsub.f32 %v3545, %v3593
    %v3642 = vsub.f32 %v3546, %v3594
    %v3643 = vsub.f32 %v3547, %v3595
    %v3644 = vld [vmem:[%s2] sm:$0xff]
    %v3645 = vld [vmem:[%s2 + $0x8] sm:$0xff]
    %v3646 = vld [vmem:[%s2 + $0x10] sm:$0xff]
    %v3647 = vld [vmem:[%s2 + $0x18] sm:$0xff]
    %v3648 = vld [vmem:[%s2 + $0x20] sm:$0xff]
    %v3649 = vld [vmem:[%s2 + $0x28] sm:$0xff]
    %v3650 = vld [vmem:[%s2 + $0x30] sm:$0xff]
    %v3651 = vld [vmem:[%s2 + $0x38] sm:$0xff]
    %v3652 = vld [vmem:[%s2 + $0x40] sm:$0xff]
    %v3653 = vld [vmem:[%s2 + $0x48] sm:$0xff]
    %v3654 = vld [vmem:[%s2 + $0x50] sm:$0xff]
    %v3655 = vld [vmem:[%s2 + $0x58] sm:$0xff]
    %v3656 = vld [vmem:[%s2 + $0x60] sm:$0xff]
    %v3657 = vld [vmem:[%s2 + $0x68] sm:$0xff]
    %v3658 = vld [vmem:[%s2 + $0x70] sm:$0xff]
    %v3659 = vld [vmem:[%s2 + $0x78] sm:$0xff]
    %v3660 = vld [vmem:[%s2 + $0x80] sm:$0xff]
    %v3661 = vld [vmem:[%s2 + $0x88] sm:$0xff]
    %v3662 = vld [vmem:[%s2 + $0x90] sm:$0xff]
    %v3663 = vld [vmem:[%s2 + $0x98] sm:$0xff]
    %v3664 = vld [vmem:[%s2 + $0xa0] sm:$0xff]
    %v3665 = vld [vmem:[%s2 + $0xa8] sm:$0xff]
    %v3666 = vld [vmem:[%s2 + $0xb0] sm:$0xff]
    %v3667 = vld [vmem:[%s2 + $0xb8] sm:$0xff]
    %v3668 = vld [vmem:[%s2 + $0xc0] sm:$0xff]
    %v3669 = vld [vmem:[%s2 + $0xc8] sm:$0xff]
    %v3670 = vld [vmem:[%s2 + $0xd0] sm:$0xff]
    %v3671 = vld [vmem:[%s2 + $0xd8] sm:$0xff]
    %v3672 = vld [vmem:[%s2 + $0xe0] sm:$0xff]
    %v3673 = vld [vmem:[%s2 + $0xe8] sm:$0xff]
    %v3674 = vld [vmem:[%s2 + $0xf0] sm:$0xff]
    %v3675 = vld [vmem:[%s2 + $0xf8] sm:$0xff]
    %v3676 = vld [vmem:[%s2 + $0x100] sm:$0xff]
    %v3677 = vld [vmem:[%s2 + $0x108] sm:$0xff]
    %v3678 = vld [vmem:[%s2 + $0x110] sm:$0xff]
    %v3679 = vld [vmem:[%s2 + $0x118] sm:$0xff]
    %v3680 = vld [vmem:[%s2 + $0x120] sm:$0xff]
    %v3681 = vld [vmem:[%s2 + $0x128] sm:$0xff]
    %v3682 = vld [vmem:[%s2 + $0x130] sm:$0xff]
    %v3683 = vld [vmem:[%s2 + $0x138] sm:$0xff]
    %v3684 = vld [vmem:[%s2 + $0x140] sm:$0xff]
    %v3685 = vld [vmem:[%s2 + $0x148] sm:$0xff]
    %v3686 = vld [vmem:[%s2 + $0x150] sm:$0xff]
    %v3687 = vld [vmem:[%s2 + $0x158] sm:$0xff]
    %v3688 = vld [vmem:[%s2 + $0x160] sm:$0xff]
    %v3689 = vld [vmem:[%s2 + $0x168] sm:$0xff]
    %v3690 = vld [vmem:[%s2 + $0x170] sm:$0xff]
    %v3691 = vld [vmem:[%s2 + $0x178] sm:$0xff]
    %v3692 = vadd.f32 %v3596, 0.001
    %v3693 = vadd.f32 %v3597, 0.001
    %v3694 = vadd.f32 %v3598, 0.001
    %v3695 = vadd.f32 %v3599, 0.001
    %v3696 = vadd.f32 %v3600, 0.001
    %v3697 = vadd.f32 %v3601, 0.001
    %v3698 = vadd.f32 %v3602, 0.001
    %v3699 = vadd.f32 %v3603, 0.001
    %v3700 = vadd.f32 %v3604, 0.001
    %v3701 = vadd.f32 %v3605, 0.001
    %v3702 = vadd.f32 %v3606, 0.001
    %v3703 = vadd.f32 %v3607, 0.001
    %v3704 = vadd.f32 %v3608, 0.001
    %v3705 = vadd.f32 %v3609, 0.001
    %v3706 = vadd.f32 %v3610, 0.001
    %v3707 = vadd.f32 %v3611, 0.001
    %v3708 = vadd.f32 %v3612, 0.001
    %v3709 = vadd.f32 %v3613, 0.001
    %v3710 = vadd.f32 %v3614, 0.001
    %v3711 = vadd.f32 %v3615, 0.001
    %v3712 = vadd.f32 %v3616, 0.001
    %v3713 = vadd.f32 %v3617, 0.001
    %v3714 = vadd.f32 %v3618, 0.001
    %v3715 = vadd.f32 %v3619, 0.001
    %v3716 = vadd.f32 %v3620, 0.001
    %v3717 = vadd.f32 %v3621, 0.001
    %v3718 = vadd.f32 %v3622, 0.001
    %v3719 = vadd.f32 %v3623, 0.001
    %v3720 = vadd.f32 %v3624, 0.001
    %v3721 = vadd.f32 %v3625, 0.001
    %v3722 = vadd.f32 %v3626, 0.001
    %v3723 = vadd.f32 %v3627, 0.001
    %v3724 = vadd.f32 %v3628, 0.001
    %v3725 = vadd.f32 %v3629, 0.001
    %v3726 = vadd.f32 %v3630, 0.001
    %v3727 = vadd.f32 %v3631, 0.001
    %v3728 = vadd.f32 %v3632, 0.001
    %v3729 = vadd.f32 %v3633, 0.001
    %v3730 = vadd.f32 %v3634, 0.001
    %v3731 = vadd.f32 %v3635, 0.001
    %v3732 = vadd.f32 %v3636, 0.001
    %v3733 = vadd.f32 %v3637, 0.001
    %v3734 = vadd.f32 %v3638, 0.001
    %v3735 = vadd.f32 %v3639, 0.001
    %v3736 = vadd.f32 %v3640, 0.001
    %v3737 = vadd.f32 %v3641, 0.001
    %v3738 = vadd.f32 %v3642, 0.001
    %v3739 = vadd.f32 %v3643, 0.001
    %v3740 = vrsqrt.pop %v3692
    %v3741 = vrsqrt.pop %v3693
    %v3742 = vrsqrt.pop %v3694
    %v3743 = vrsqrt.pop %v3695
    %v3744 = vrsqrt.pop %v3696
    %v3745 = vrsqrt.pop %v3697
    %v3746 = vrsqrt.pop %v3698
    %v3747 = vrsqrt.pop %v3699
    %v3748 = vrsqrt.pop %v3700
    %v3749 = vrsqrt.pop %v3701
    %v3750 = vrsqrt.pop %v3702
    %v3751 = vrsqrt.pop %v3703
    %v3752 = vrsqrt.pop %v3704
    %v3753 = vrsqrt.pop %v3705
    %v3754 = vrsqrt.pop %v3706
    %v3755 = vrsqrt.pop %v3707
    %v3756 = vrsqrt.pop %v3708
    %v3757 = vrsqrt.pop %v3709
    %v3758 = vrsqrt.pop %v3710
    %v3759 = vrsqrt.pop %v3711
    %v3760 = vrsqrt.pop %v3712
    %v3761 = vrsqrt.pop %v3713
    %v3762 = vrsqrt.pop %v3714
    %v3763 = vrsqrt.pop %v3715
    %v3764 = vrsqrt.pop %v3716
    %v3765 = vrsqrt.pop %v3717
    %v3766 = vrsqrt.pop %v3718
    %v3767 = vrsqrt.pop %v3719
    %v3768 = vrsqrt.pop %v3720
    %v3769 = vrsqrt.pop %v3721
    %v3770 = vrsqrt.pop %v3722
    %v3771 = vrsqrt.pop %v3723
    %v3772 = vrsqrt.pop %v3724
    %v3773 = vrsqrt.pop %v3725
    %v3774 = vrsqrt.pop %v3726
    %v3775 = vrsqrt.pop %v3727
    %v3776 = vrsqrt.pop %v3728
    %v3777 = vrsqrt.pop %v3729
    %v3778 = vrsqrt.pop %v3730
    %v3779 = vrsqrt.pop %v3731
    %v3780 = vrsqrt.pop %v3732
    %v3781 = vrsqrt.pop %v3733
    %v3782 = vrsqrt.pop %v3734
    %v3783 = vrsqrt.pop %v3735
    %v3784 = vrsqrt.pop %v3736
    %v3785 = vrsqrt.pop %v3737
    %v3786 = vrsqrt.pop %v3738
    %v3787 = vrsqrt.pop %v3739
    %v3788 = vmul.f32 %v3644, %v3740
    %v3789 = vmul.f32 %v3645, %v3741
    %v3790 = vmul.f32 %v3646, %v3742
    %v3791 = vmul.f32 %v3647, %v3743
    %v3792 = vmul.f32 %v3648, %v3744
    %v3793 = vmul.f32 %v3649, %v3745
    %v3794 = vmul.f32 %v3650, %v3746
    %v3795 = vmul.f32 %v3651, %v3747
    %v3796 = vmul.f32 %v3652, %v3748
    %v3797 = vmul.f32 %v3653, %v3749
    %v3798 = vmul.f32 %v3654, %v3750
    %v3799 = vmul.f32 %v3655, %v3751
    %v3800 = vmul.f32 %v3656, %v3752
    %v3801 = vmul.f32 %v3657, %v3753
    %v3802 = vmul.f32 %v3658, %v3754
    %v3803 = vmul.f32 %v3659, %v3755
    %v3804 = vmul.f32 %v3660, %v3756
    %v3805 = vmul.f32 %v3661, %v3757
    %v3806 = vmul.f32 %v3662, %v3758
    %v3807 = vmul.f32 %v3663, %v3759
    %v3808 = vmul.f32 %v3664, %v3760
    %v3809 = vmul.f32 %v3665, %v3761
    %v3810 = vmul.f32 %v3666, %v3762
    %v3811 = vmul.f32 %v3667, %v3763
    %v3812 = vmul.f32 %v3668, %v3764
    %v3813 = vmul.f32 %v3669, %v3765
    %v3814 = vmul.f32 %v3670, %v3766
    %v3815 = vmul.f32 %v3671, %v3767
    %v3816 = vmul.f32 %v3672, %v3768
    %v3817 = vmul.f32 %v3673, %v3769
    %v3818 = vmul.f32 %v3674, %v3770
    %v3819 = vmul.f32 %v3675, %v3771
    %v3820 = vmul.f32 %v3676, %v3772
    %v3821 = vmul.f32 %v3677, %v3773
    %v3822 = vmul.f32 %v3678, %v3774
    %v3823 = vmul.f32 %v3679, %v3775
    %v3824 = vmul.f32 %v3680, %v3776
    %v3825 = vmul.f32 %v3681, %v3777
    %v3826 = vmul.f32 %v3682, %v3778
    %v3827 = vmul.f32 %v3683, %v3779
    %v3828 = vmul.f32 %v3684, %v3780
    %v3829 = vmul.f32 %v3685, %v3781
    %v3830 = vmul.f32 %v3686, %v3782
    %v3831 = vmul.f32 %v3687, %v3783
    %v3832 = vmul.f32 %v3688, %v3784
    %v3833 = vmul.f32 %v3689, %v3785
    %v3834 = vmul.f32 %v3690, %v3786
    %v3835 = vmul.f32 %v3691, %v3787
    %v3836 = vld [vmem:[%s3] sm:$0xff]
    %v3837 = vld [vmem:[%s3 + $0x8] sm:$0xff]
    %v3838 = vld [vmem:[%s3 + $0x10] sm:$0xff]
    %v3839 = vld [vmem:[%s3 + $0x18] sm:$0xff]
    %v3840 = vld [vmem:[%s3 + $0x20] sm:$0xff]
    %v3841 = vld [vmem:[%s3 + $0x28] sm:$0xff]
    %v3842 = vld [vmem:[%s3 + $0x30] sm:$0xff]
    %v3843 = vld [vmem:[%s3 + $0x38] sm:$0xff]
    %v3844 = vld [vmem:[%s3 + $0x40] sm:$0xff]
    %v3845 = vld [vmem:[%s3 + $0x48] sm:$0xff]
    %v3846 = vld [vmem:[%s3 + $0x50] sm:$0xff]
    %v3847 = vld [vmem:[%s3 + $0x58] sm:$0xff]
    %v3848 = vld [vmem:[%s3 + $0x60] sm:$0xff]
    %v3849 = vld [vmem:[%s3 + $0x68] sm:$0xff]
    %v3850 = vld [vmem:[%s3 + $0x70] sm:$0xff]
    %v3851 = vld [vmem:[%s3 + $0x78] sm:$0xff]
    %v3852 = vld [vmem:[%s3 + $0x80] sm:$0xff]
    %v3853 = vld [vmem:[%s3 + $0x88] sm:$0xff]
    %v3854 = vld [vmem:[%s3 + $0x90] sm:$0xff]
    %v3855 = vld [vmem:[%s3 + $0x98] sm:$0xff]
    %v3856 = vld [vmem:[%s3 + $0xa0] sm:$0xff]
    %v3857 = vld [vmem:[%s3 + $0xa8] sm:$0xff]
    %v3858 = vld [vmem:[%s3 + $0xb0] sm:$0xff]
    %v3859 = vld [vmem:[%s3 + $0xb8] sm:$0xff]
    %v3860 = vld [vmem:[%s3 + $0xc0] sm:$0xff]
    %v3861 = vld [vmem:[%s3 + $0xc8] sm:$0xff]
    %v3862 = vld [vmem:[%s3 + $0xd0] sm:$0xff]
    %v3863 = vld [vmem:[%s3 + $0xd8] sm:$0xff]
    %v3864 = vld [vmem:[%s3 + $0xe0] sm:$0xff]
    %v3865 = vld [vmem:[%s3 + $0xe8] sm:$0xff]
    %v3866 = vld [vmem:[%s3 + $0xf0] sm:$0xff]
    %v3867 = vld [vmem:[%s3 + $0xf8] sm:$0xff]
    %v3868 = vld [vmem:[%s3 + $0x100] sm:$0xff]
    %v3869 = vld [vmem:[%s3 + $0x108] sm:$0xff]
    %v3870 = vld [vmem:[%s3 + $0x110] sm:$0xff]
    %v3871 = vld [vmem:[%s3 + $0x118] sm:$0xff]
    %v3872 = vld [vmem:[%s3 + $0x120] sm:$0xff]
    %v3873 = vld [vmem:[%s3 + $0x128] sm:$0xff]
    %v3874 = vld [vmem:[%s3 + $0x130] sm:$0xff]
    %v3875 = vld [vmem:[%s3 + $0x138] sm:$0xff]
    %v3876 = vld [vmem:[%s3 + $0x140] sm:$0xff]
    %v3877 = vld [vmem:[%s3 + $0x148] sm:$0xff]
    %v3878 = vld [vmem:[%s3 + $0x150] sm:$0xff]
    %v3879 = vld [vmem:[%s3 + $0x158] sm:$0xff]
    %v3880 = vld [vmem:[%s3 + $0x160] sm:$0xff]
    %v3881 = vld [vmem:[%s3 + $0x168] sm:$0xff]
    %v3882 = vld [vmem:[%s3 + $0x170] sm:$0xff]
    %v3883 = vld [vmem:[%s3 + $0x178] sm:$0xff]
    %v3884 = vmul.f32 %v3452, %v3788
    %v3885 = vmul.f32 %v3453, %v3789
    %v3886 = vmul.f32 %v3454, %v3790
    %v3887 = vmul.f32 %v3455, %v3791
    %v3888 = vmul.f32 %v3456, %v3792
    %v3889 = vmul.f32 %v3457, %v3793
    %v3890 = vmul.f32 %v3458, %v3794
    %v3891 = vmul.f32 %v3459, %v3795
    %v3892 = vmul.f32 %v3460, %v3796
    %v3893 = vmul.f32 %v3461, %v3797
    %v3894 = vmul.f32 %v3462, %v3798
    %v3895 = vmul.f32 %v3463, %v3799
    %v3896 = vmul.f32 %v3464, %v3800
    %v3897 = vmul.f32 %v3465, %v3801
    %v3898 = vmul.f32 %v3466, %v3802
    %v3899 = vmul.f32 %v3467, %v3803
    %v3900 = vmul.f32 %v3468, %v3804
    %v3901 = vmul.f32 %v3469, %v3805
    %v3902 = vmul.f32 %v3470, %v3806
    %v3903 = vmul.f32 %v3471, %v3807
    %v3904 = vmul.f32 %v3472, %v3808
    %v3905 = vmul.f32 %v3473, %v3809
    %v3906 = vmul.f32 %v3474, %v3810
    %v3907 = vmul.f32 %v3475, %v3811
    %v3908 = vmul.f32 %v3476, %v3812
    %v3909 = vmul.f32 %v3477, %v3813
    %v3910 = vmul.f32 %v3478, %v3814
    %v3911 = vmul.f32 %v3479, %v3815
    %v3912 = vmul.f32 %v3480, %v3816
    %v3913 = vmul.f32 %v3481, %v3817
    %v3914 = vmul.f32 %v3482, %v3818
    %v3915 = vmul.f32 %v3483, %v3819
    %v3916 = vmul.f32 %v3484, %v3820
    %v3917 = vmul.f32 %v3485, %v3821
    %v3918 = vmul.f32 %v3486, %v3822
    %v3919 = vmul.f32 %v3487, %v3823
    %v3920 = vmul.f32 %v3488, %v3824
    %v3921 = vmul.f32 %v3489, %v3825
    %v3922 = vmul.f32 %v3490, %v3826
    %v3923 = vmul.f32 %v3491, %v3827
    %v3924 = vmul.f32 %v3492, %v3828
    %v3925 = vmul.f32 %v3493, %v3829
    %v3926 = vmul.f32 %v3494, %v3830
    %v3927 = vmul.f32 %v3495, %v3831
    %v3928 = vmul.f32 %v3496, %v3832
    %v3929 = vmul.f32 %v3497, %v3833
    %v3930 = vmul.f32 %v3498, %v3834
    %v3931 = vmul.f32 %v3499, %v3835
    %v3932 = vsub.f32 %v3836, %v3884
    %v3933 = vsub.f32 %v3837, %v3885
    %v3934 = vsub.f32 %v3838, %v3886
    %v3935 = vsub.f32 %v3839, %v3887
    %v3936 = vsub.f32 %v3840, %v3888
    %v3937 = vsub.f32 %v3841, %v3889
    %v3938 = vsub.f32 %v3842, %v3890
    %v3939 = vsub.f32 %v3843, %v3891
    %v3940 = vsub.f32 %v3844, %v3892
    %v3941 = vsub.f32 %v3845, %v3893
    %v3942 = vsub.f32 %v3846, %v3894
    %v3943 = vsub.f32 %v3847, %v3895
    %v3944 = vsub.f32 %v3848, %v3896
    %v3945 = vsub.f32 %v3849, %v3897
    %v3946 = vsub.f32 %v3850, %v3898
    %v3947 = vsub.f32 %v3851, %v3899
    %v3948 = vsub.f32 %v3852, %v3900
    %v3949 = vsub.f32 %v3853, %v3901
    %v3950 = vsub.f32 %v3854, %v3902
    %v3951 = vsub.f32 %v3855, %v3903
    %v3952 = vsub.f32 %v3856, %v3904
    %v3953 = vsub.f32 %v3857, %v3905
    %v3954 = vsub.f32 %v3858, %v3906
    %v3955 = vsub.f32 %v3859, %v3907
    %v3956 = vsub.f32 %v3860, %v3908
    %v3957 = vsub.f32 %v3861, %v3909
    %v3958 = vsub.f32 %v3862, %v3910
    %v3959 = vsub.f32 %v3863, %v3911
    %v3960 = vsub.f32 %v3864, %v3912
    %v3961 = vsub.f32 %v3865, %v3913
    %v3962 = vsub.f32 %v3866, %v3914
    %v3963 = vsub.f32 %v3867, %v3915
    %v3964 = vsub.f32 %v3868, %v3916
    %v3965 = vsub.f32 %v3869, %v3917
    %v3966 = vsub.f32 %v3870, %v3918
    %v3967 = vsub.f32 %v3871, %v3919
    %v3968 = vsub.f32 %v3872, %v3920
    %v3969 = vsub.f32 %v3873, %v3921
    %v3970 = vsub.f32 %v3874, %v3922
    %v3971 = vsub.f32 %v3875, %v3923
    %v3972 = vsub.f32 %v3876, %v3924
    %v3973 = vsub.f32 %v3877, %v3925
    %v3974 = vsub.f32 %v3878, %v3926
    %v3975 = vsub.f32 %v3879, %v3927
    %v3976 = vsub.f32 %v3880, %v3928
    %v3977 = vsub.f32 %v3881, %v3929
    %v3978 = vsub.f32 %v3882, %v3930
    %v3979 = vsub.f32 %v3883, %v3931
    %3981 = vset.pattern.permute.xlu0 0
    %3982 = vperm.xlu0 %3981, %v3788
    %v3983 = vpop.permute.xlu0 %3982
    %3986 = vset.pattern.permute.xlu0 0
    %3987 = vperm.xlu0 %3986, %v3789
    %v3988 = vpop.permute.xlu0 %3987
    %3991 = vset.pattern.permute.xlu0 0
    %3992 = vperm.xlu0 %3991, %v3790
    %v3993 = vpop.permute.xlu0 %3992
    %3996 = vset.pattern.permute.xlu0 0
    %3997 = vperm.xlu0 %3996, %v3791
    %v3998 = vpop.permute.xlu0 %3997
    %4001 = vset.pattern.permute.xlu0 0
    %4002 = vperm.xlu0 %4001, %v3792
    %v4003 = vpop.permute.xlu0 %4002
    %4006 = vset.pattern.permute.xlu0 0
    %4007 = vperm.xlu0 %4006, %v3793
    %v4008 = vpop.permute.xlu0 %4007
    %4011 = vset.pattern.permute.xlu0 0
    %4012 = vperm.xlu0 %4011, %v3794
    %v4013 = vpop.permute.xlu0 %4012
    %4016 = vset.pattern.permute.xlu0 0
    %4017 = vperm.xlu0 %4016, %v3795
    %v4018 = vpop.permute.xlu0 %4017
    %4021 = vset.pattern.permute.xlu0 0
    %4022 = vperm.xlu0 %4021, %v3796
    %v4023 = vpop.permute.xlu0 %4022
    %4026 = vset.pattern.permute.xlu0 0
    %4027 = vperm.xlu0 %4026, %v3797
    %v4028 = vpop.permute.xlu0 %4027
    %4031 = vset.pattern.permute.xlu0 0
    %4032 = vperm.xlu0 %4031, %v3798
    %v4033 = vpop.permute.xlu0 %4032
    %4036 = vset.pattern.permute.xlu0 0
    %4037 = vperm.xlu0 %4036, %v3799
    %v4038 = vpop.permute.xlu0 %4037
    %4041 = vset.pattern.permute.xlu0 0
    %4042 = vperm.xlu0 %4041, %v3800
    %v4043 = vpop.permute.xlu0 %4042
    %4046 = vset.pattern.permute.xlu0 0
    %4047 = vperm.xlu0 %4046, %v3801
    %v4048 = vpop.permute.xlu0 %4047
    %4051 = vset.pattern.permute.xlu0 0
    %4052 = vperm.xlu0 %4051, %v3802
    %v4053 = vpop.permute.xlu0 %4052
    %4056 = vset.pattern.permute.xlu0 0
    %4057 = vperm.xlu0 %4056, %v3803
    %v4058 = vpop.permute.xlu0 %4057
    %4061 = vset.pattern.permute.xlu0 0
    %4062 = vperm.xlu0 %4061, %v3804
    %v4063 = vpop.permute.xlu0 %4062
    %4066 = vset.pattern.permute.xlu0 0
    %4067 = vperm.xlu0 %4066, %v3805
    %v4068 = vpop.permute.xlu0 %4067
    %4071 = vset.pattern.permute.xlu0 0
    %4072 = vperm.xlu0 %4071, %v3806
    %v4073 = vpop.permute.xlu0 %4072
    %4076 = vset.pattern.permute.xlu0 0
    %4077 = vperm.xlu0 %4076, %v3807
    %v4078 = vpop.permute.xlu0 %4077
    %4081 = vset.pattern.permute.xlu0 0
    %4082 = vperm.xlu0 %4081, %v3808
    %v4083 = vpop.permute.xlu0 %4082
    %4086 = vset.pattern.permute.xlu0 0
    %4087 = vperm.xlu0 %4086, %v3809
    %v4088 = vpop.permute.xlu0 %4087
    %4091 = vset.pattern.permute.xlu0 0
    %4092 = vperm.xlu0 %4091, %v3810
    %v4093 = vpop.permute.xlu0 %4092
    %4096 = vset.pattern.permute.xlu0 0
    %4097 = vperm.xlu0 %4096, %v3811
    %v4098 = vpop.permute.xlu0 %4097
    %4101 = vset.pattern.permute.xlu0 0
    %4102 = vperm.xlu0 %4101, %v3812
    %v4103 = vpop.permute.xlu0 %4102
    %4106 = vset.pattern.permute.xlu0 0
    %4107 = vperm.xlu0 %4106, %v3813
    %v4108 = vpop.permute.xlu0 %4107
    %4111 = vset.pattern.permute.xlu0 0
    %4112 = vperm.xlu0 %4111, %v3814
    %v4113 = vpop.permute.xlu0 %4112
    %4116 = vset.pattern.permute.xlu0 0
    %4117 = vperm.xlu0 %4116, %v3815
    %v4118 = vpop.permute.xlu0 %4117
    %4121 = vset.pattern.permute.xlu0 0
    %4122 = vperm.xlu0 %4121, %v3816
    %v4123 = vpop.permute.xlu0 %4122
    %4126 = vset.pattern.permute.xlu0 0
    %4127 = vperm.xlu0 %4126, %v3817
    %v4128 = vpop.permute.xlu0 %4127
    %4131 = vset.pattern.permute.xlu0 0
    %4132 = vperm.xlu0 %4131, %v3818
    %v4133 = vpop.permute.xlu0 %4132
    %4136 = vset.pattern.permute.xlu0 0
    %4137 = vperm.xlu0 %4136, %v3819
    %v4138 = vpop.permute.xlu0 %4137
    %4141 = vset.pattern.permute.xlu0 0
    %4142 = vperm.xlu0 %4141, %v3820
    %v4143 = vpop.permute.xlu0 %4142
    %4146 = vset.pattern.permute.xlu0 0
    %4147 = vperm.xlu0 %4146, %v3821
    %v4148 = vpop.permute.xlu0 %4147
    %4151 = vset.pattern.permute.xlu0 0
    %4152 = vperm.xlu0 %4151, %v3822
    %v4153 = vpop.permute.xlu0 %4152
    %4156 = vset.pattern.permute.xlu0 0
    %4157 = vperm.xlu0 %4156, %v3823
    %v4158 = vpop.permute.xlu0 %4157
    %4161 = vset.pattern.permute.xlu0 0
    %4162 = vperm.xlu0 %4161, %v3824
    %v4163 = vpop.permute.xlu0 %4162
    %4166 = vset.pattern.permute.xlu0 0
    %4167 = vperm.xlu0 %4166, %v3825
    %v4168 = vpop.permute.xlu0 %4167
    %4171 = vset.pattern.permute.xlu0 0
    %4172 = vperm.xlu0 %4171, %v3826
    %v4173 = vpop.permute.xlu0 %4172
    %4176 = vset.pattern.permute.xlu0 0
    %4177 = vperm.xlu0 %4176, %v3827
    %v4178 = vpop.permute.xlu0 %4177
    %4181 = vset.pattern.permute.xlu0 0
    %4182 = vperm.xlu0 %4181, %v3828
    %v4183 = vpop.permute.xlu0 %4182
    %4186 = vset.pattern.permute.xlu0 0
    %4187 = vperm.xlu0 %4186, %v3829
    %v4188 = vpop.permute.xlu0 %4187
    %4191 = vset.pattern.permute.xlu0 0
    %4192 = vperm.xlu0 %4191, %v3830
    %v4193 = vpop.permute.xlu0 %4192
    %4196 = vset.pattern.permute.xlu0 0
    %4197 = vperm.xlu0 %4196, %v3831
    %v4198 = vpop.permute.xlu0 %4197
    %4201 = vset.pattern.permute.xlu0 0
    %4202 = vperm.xlu0 %4201, %v3832
    %v4203 = vpop.permute.xlu0 %4202
    %4206 = vset.pattern.permute.xlu0 0
    %4207 = vperm.xlu0 %4206, %v3833
    %v4208 = vpop.permute.xlu0 %4207
    %4211 = vset.pattern.permute.xlu0 0
    %4212 = vperm.xlu0 %4211, %v3834
    %v4213 = vpop.permute.xlu0 %4212
    %4216 = vset.pattern.permute.xlu0 0
    %4217 = vperm.xlu0 %4216, %v3835
    %v4218 = vpop.permute.xlu0 %4217
    %v4220 = vmul.f32 %v3068, %v3983
    %v4221 = vmul.f32 %v3069, %v3988
    %v4222 = vmul.f32 %v3070, %v3993
    %v4223 = vmul.f32 %v3071, %v3998
    %v4224 = vmul.f32 %v3072, %v4003
    %v4225 = vmul.f32 %v3073, %v4008
    %v4226 = vmul.f32 %v3074, %v4013
    %v4227 = vmul.f32 %v3075, %v4018
    %v4228 = vmul.f32 %v3076, %v4023
    %v4229 = vmul.f32 %v3077, %v4028
    %v4230 = vmul.f32 %v3078, %v4033
    %v4231 = vmul.f32 %v3079, %v4038
    %v4232 = vmul.f32 %v3080, %v4043
    %v4233 = vmul.f32 %v3081, %v4048
    %v4234 = vmul.f32 %v3082, %v4053
    %v4235 = vmul.f32 %v3083, %v4058
    %v4236 = vmul.f32 %v3084, %v4063
    %v4237 = vmul.f32 %v3085, %v4068
    %v4238 = vmul.f32 %v3086, %v4073
    %v4239 = vmul.f32 %v3087, %v4078
    %v4240 = vmul.f32 %v3088, %v4083
    %v4241 = vmul.f32 %v3089, %v4088
    %v4242 = vmul.f32 %v3090, %v4093
    %v4243 = vmul.f32 %v3091, %v4098
    %v4244 = vmul.f32 %v3092, %v4103
    %v4245 = vmul.f32 %v3093, %v4108
    %v4246 = vmul.f32 %v3094, %v4113
    %v4247 = vmul.f32 %v3095, %v4118
    %v4248 = vmul.f32 %v3096, %v4123
    %v4249 = vmul.f32 %v3097, %v4128
    %v4250 = vmul.f32 %v3098, %v4133
    %v4251 = vmul.f32 %v3099, %v4138
    %v4252 = vmul.f32 %v3100, %v4143
    %v4253 = vmul.f32 %v3101, %v4148
    %v4254 = vmul.f32 %v3102, %v4153
    %v4255 = vmul.f32 %v3103, %v4158
    %v4256 = vmul.f32 %v3104, %v4163
    %v4257 = vmul.f32 %v3105, %v4168
    %v4258 = vmul.f32 %v3106, %v4173
    %v4259 = vmul.f32 %v3107, %v4178
    %v4260 = vmul.f32 %v3108, %v4183
    %v4261 = vmul.f32 %v3109, %v4188
    %v4262 = vmul.f32 %v3110, %v4193
    %v4263 = vmul.f32 %v3111, %v4198
    %v4264 = vmul.f32 %v3112, %v4203
    %v4265 = vmul.f32 %v3113, %v4208
    %v4266 = vmul.f32 %v3114, %v4213
    %v4267 = vmul.f32 %v3115, %v4218
    %4269 = vset.pattern.permute.xlu0 0
    %4270 = vperm.xlu0 %4269, %v3932
    %v4271 = vpop.permute.xlu0 %4270
    %4274 = vset.pattern.permute.xlu0 0
    %4275 = vperm.xlu0 %4274, %v3933
    %v4276 = vpop.permute.xlu0 %4275
    %4279 = vset.pattern.permute.xlu0 0
    %4280 = vperm.xlu0 %4279, %v3934
    %v4281 = vpop.permute.xlu0 %4280
    %4284 = vset.pattern.permute.xlu0 0
    %4285 = vperm.xlu0 %4284, %v3935
    %v4286 = vpop.permute.xlu0 %4285
    %4289 = vset.pattern.permute.xlu0 0
    %4290 = vperm.xlu0 %4289, %v3936
    %v4291 = vpop.permute.xlu0 %4290
    %4294 = vset.pattern.permute.xlu0 0
    %4295 = vperm.xlu0 %4294, %v3937
    %v4296 = vpop.permute.xlu0 %4295
    %4299 = vset.pattern.permute.xlu0 0
    %4300 = vperm.xlu0 %4299, %v3938
    %v4301 = vpop.permute.xlu0 %4300
    %4304 = vset.pattern.permute.xlu0 0
    %4305 = vperm.xlu0 %4304, %v3939
    %v4306 = vpop.permute.xlu0 %4305
    %4309 = vset.pattern.permute.xlu0 0
    %4310 = vperm.xlu0 %4309, %v3940
    %v4311 = vpop.permute.xlu0 %4310
    %4314 = vset.pattern.permute.xlu0 0
    %4315 = vperm.xlu0 %4314, %v3941
    %v4316 = vpop.permute.xlu0 %4315
    %4319 = vset.pattern.permute.xlu0 0
    %4320 = vperm.xlu0 %4319, %v3942
    %v4321 = vpop.permute.xlu0 %4320
    %4324 = vset.pattern.permute.xlu0 0
    %4325 = vperm.xlu0 %4324, %v3943
    %v4326 = vpop.permute.xlu0 %4325
    %4329 = vset.pattern.permute.xlu0 0
    %4330 = vperm.xlu0 %4329, %v3944
    %v4331 = vpop.permute.xlu0 %4330
    %4334 = vset.pattern.permute.xlu0 0
    %4335 = vperm.xlu0 %4334, %v3945
    %v4336 = vpop.permute.xlu0 %4335
    %4339 = vset.pattern.permute.xlu0 0
    %4340 = vperm.xlu0 %4339, %v3946
    %v4341 = vpop.permute.xlu0 %4340
    %4344 = vset.pattern.permute.xlu0 0
    %4345 = vperm.xlu0 %4344, %v3947
    %v4346 = vpop.permute.xlu0 %4345
    %4349 = vset.pattern.permute.xlu0 0
    %4350 = vperm.xlu0 %4349, %v3948
    %v4351 = vpop.permute.xlu0 %4350
    %4354 = vset.pattern.permute.xlu0 0
    %4355 = vperm.xlu0 %4354, %v3949
    %v4356 = vpop.permute.xlu0 %4355
    %4359 = vset.pattern.permute.xlu0 0
    %4360 = vperm.xlu0 %4359, %v3950
    %v4361 = vpop.permute.xlu0 %4360
    %4364 = vset.pattern.permute.xlu0 0
    %4365 = vperm.xlu0 %4364, %v3951
    %v4366 = vpop.permute.xlu0 %4365
    %4369 = vset.pattern.permute.xlu0 0
    %4370 = vperm.xlu0 %4369, %v3952
    %v4371 = vpop.permute.xlu0 %4370
    %4374 = vset.pattern.permute.xlu0 0
    %4375 = vperm.xlu0 %4374, %v3953
    %v4376 = vpop.permute.xlu0 %4375
    %4379 = vset.pattern.permute.xlu0 0
    %4380 = vperm.xlu0 %4379, %v3954
    %v4381 = vpop.permute.xlu0 %4380
    %4384 = vset.pattern.permute.xlu0 0
    %4385 = vperm.xlu0 %4384, %v3955
    %v4386 = vpop.permute.xlu0 %4385
    %4389 = vset.pattern.permute.xlu0 0
    %4390 = vperm.xlu0 %4389, %v3956
    %v4391 = vpop.permute.xlu0 %4390
    %4394 = vset.pattern.permute.xlu0 0
    %4395 = vperm.xlu0 %4394, %v3957
    %v4396 = vpop.permute.xlu0 %4395
    %4399 = vset.pattern.permute.xlu0 0
    %4400 = vperm.xlu0 %4399, %v3958
    %v4401 = vpop.permute.xlu0 %4400
    %4404 = vset.pattern.permute.xlu0 0
    %4405 = vperm.xlu0 %4404, %v3959
    %v4406 = vpop.permute.xlu0 %4405
    %4409 = vset.pattern.permute.xlu0 0
    %4410 = vperm.xlu0 %4409, %v3960
    %v4411 = vpop.permute.xlu0 %4410
    %4414 = vset.pattern.permute.xlu0 0
    %4415 = vperm.xlu0 %4414, %v3961
    %v4416 = vpop.permute.xlu0 %4415
    %4419 = vset.pattern.permute.xlu0 0
    %4420 = vperm.xlu0 %4419, %v3962
    %v4421 = vpop.permute.xlu0 %4420
    %4424 = vset.pattern.permute.xlu0 0
    %4425 = vperm.xlu0 %4424, %v3963
    %v4426 = vpop.permute.xlu0 %4425
    %4429 = vset.pattern.permute.xlu0 0
    %4430 = vperm.xlu0 %4429, %v3964
    %v4431 = vpop.permute.xlu0 %4430
    %4434 = vset.pattern.permute.xlu0 0
    %4435 = vperm.xlu0 %4434, %v3965
    %v4436 = vpop.permute.xlu0 %4435
    %4439 = vset.pattern.permute.xlu0 0
    %4440 = vperm.xlu0 %4439, %v3966
    %v4441 = vpop.permute.xlu0 %4440
    %4444 = vset.pattern.permute.xlu0 0
    %4445 = vperm.xlu0 %4444, %v3967
    %v4446 = vpop.permute.xlu0 %4445
    %4449 = vset.pattern.permute.xlu0 0
    %4450 = vperm.xlu0 %4449, %v3968
    %v4451 = vpop.permute.xlu0 %4450
    %4454 = vset.pattern.permute.xlu0 0
    %4455 = vperm.xlu0 %4454, %v3969
    %v4456 = vpop.permute.xlu0 %4455
    %4459 = vset.pattern.permute.xlu0 0
    %4460 = vperm.xlu0 %4459, %v3970
    %v4461 = vpop.permute.xlu0 %4460
    %4464 = vset.pattern.permute.xlu0 0
    %4465 = vperm.xlu0 %4464, %v3971
    %v4466 = vpop.permute.xlu0 %4465
    %4469 = vset.pattern.permute.xlu0 0
    %4470 = vperm.xlu0 %4469, %v3972
    %v4471 = vpop.permute.xlu0 %4470
    %4474 = vset.pattern.permute.xlu0 0
    %4475 = vperm.xlu0 %4474, %v3973
    %v4476 = vpop.permute.xlu0 %4475
    %4479 = vset.pattern.permute.xlu0 0
    %4480 = vperm.xlu0 %4479, %v3974
    %v4481 = vpop.permute.xlu0 %4480
    %4484 = vset.pattern.permute.xlu0 0
    %4485 = vperm.xlu0 %4484, %v3975
    %v4486 = vpop.permute.xlu0 %4485
    %4489 = vset.pattern.permute.xlu0 0
    %4490 = vperm.xlu0 %4489, %v3976
    %v4491 = vpop.permute.xlu0 %4490
    %4494 = vset.pattern.permute.xlu0 0
    %4495 = vperm.xlu0 %4494, %v3977
    %v4496 = vpop.permute.xlu0 %4495
    %4499 = vset.pattern.permute.xlu0 0
    %4500 = vperm.xlu0 %4499, %v3978
    %v4501 = vpop.permute.xlu0 %4500
    %4504 = vset.pattern.permute.xlu0 0
    %4505 = vperm.xlu0 %4504, %v3979
    %v4506 = vpop.permute.xlu0 %4505
    %v4508 = vadd.f32 %v4220, %v4271
    %v4509 = vadd.f32 %v4221, %v4276
    %v4510 = vadd.f32 %v4222, %v4281
    %v4511 = vadd.f32 %v4223, %v4286
    %v4512 = vadd.f32 %v4224, %v4291
    %v4513 = vadd.f32 %v4225, %v4296
    %v4514 = vadd.f32 %v4226, %v4301
    %v4515 = vadd.f32 %v4227, %v4306
    %v4516 = vadd.f32 %v4228, %v4311
    %v4517 = vadd.f32 %v4229, %v4316
    %v4518 = vadd.f32 %v4230, %v4321
    %v4519 = vadd.f32 %v4231, %v4326
    %v4520 = vadd.f32 %v4232, %v4331
    %v4521 = vadd.f32 %v4233, %v4336
    %v4522 = vadd.f32 %v4234, %v4341
    %v4523 = vadd.f32 %v4235, %v4346
    %v4524 = vadd.f32 %v4236, %v4351
    %v4525 = vadd.f32 %v4237, %v4356
    %v4526 = vadd.f32 %v4238, %v4361
    %v4527 = vadd.f32 %v4239, %v4366
    %v4528 = vadd.f32 %v4240, %v4371
    %v4529 = vadd.f32 %v4241, %v4376
    %v4530 = vadd.f32 %v4242, %v4381
    %v4531 = vadd.f32 %v4243, %v4386
    %v4532 = vadd.f32 %v4244, %v4391
    %v4533 = vadd.f32 %v4245, %v4396
    %v4534 = vadd.f32 %v4246, %v4401
    %v4535 = vadd.f32 %v4247, %v4406
    %v4536 = vadd.f32 %v4248, %v4411
    %v4537 = vadd.f32 %v4249, %v4416
    %v4538 = vadd.f32 %v4250, %v4421
    %v4539 = vadd.f32 %v4251, %v4426
    %v4540 = vadd.f32 %v4252, %v4431
    %v4541 = vadd.f32 %v4253, %v4436
    %v4542 = vadd.f32 %v4254, %v4441
    %v4543 = vadd.f32 %v4255, %v4446
    %v4544 = vadd.f32 %v4256, %v4451
    %v4545 = vadd.f32 %v4257, %v4456
    %v4546 = vadd.f32 %v4258, %v4461
    %v4547 = vadd.f32 %v4259, %v4466
    %v4548 = vadd.f32 %v4260, %v4471
    %v4549 = vadd.f32 %v4261, %v4476
    %v4550 = vadd.f32 %v4262, %v4481
    %v4551 = vadd.f32 %v4263, %v4486
    %v4552 = vadd.f32 %v4264, %v4491
    %v4553 = vadd.f32 %v4265, %v4496
    %v4554 = vadd.f32 %v4266, %v4501
    %v4555 = vadd.f32 %v4267, %v4506
    %4556 = vst.msk [vmem:[%s4] sm:$0xff] %vm2114, %v4508
    %4557 = vst.msk [vmem:[%s4 + $0x8] sm:$0xff] %vm2114, %v4509
    %4558 = vst.msk [vmem:[%s4 + $0x10] sm:$0xff] %vm2114, %v4510
    %4559 = vst.msk [vmem:[%s4 + $0x18] sm:$0xff] %vm2114, %v4511
    %4560 = vst.msk [vmem:[%s4 + $0x20] sm:$0xff] %vm2114, %v4512
    %4561 = vst.msk [vmem:[%s4 + $0x28] sm:$0xff] %vm2114, %v4513
    %4562 = vst.msk [vmem:[%s4 + $0x30] sm:$0xff] %vm2114, %v4514
    %4563 = vst.msk [vmem:[%s4 + $0x38] sm:$0xff] %vm2114, %v4515
    %4564 = vst.msk [vmem:[%s4 + $0x40] sm:$0xff] %vm2114, %v4516
    %4565 = vst.msk [vmem:[%s4 + $0x48] sm:$0xff] %vm2114, %v4517
    %4566 = vst.msk [vmem:[%s4 + $0x50] sm:$0xff] %vm2114, %v4518
    %4567 = vst.msk [vmem:[%s4 + $0x58] sm:$0xff] %vm2114, %v4519
    %4568 = vst.msk [vmem:[%s4 + $0x60] sm:$0xff] %vm2114, %v4520
    %4569 = vst.msk [vmem:[%s4 + $0x68] sm:$0xff] %vm2114, %v4521
    %4570 = vst.msk [vmem:[%s4 + $0x70] sm:$0xff] %vm2114, %v4522
    %4571 = vst.msk [vmem:[%s4 + $0x78] sm:$0xff] %vm2114, %v4523
    %4572 = vst.msk [vmem:[%s4 + $0x80] sm:$0xff] %vm2114, %v4524
    %4573 = vst.msk [vmem:[%s4 + $0x88] sm:$0xff] %vm2114, %v4525
    %4574 = vst.msk [vmem:[%s4 + $0x90] sm:$0xff] %vm2114, %v4526
    %4575 = vst.msk [vmem:[%s4 + $0x98] sm:$0xff] %vm2114, %v4527
    %4576 = vst.msk [vmem:[%s4 + $0xa0] sm:$0xff] %vm2114, %v4528
    %4577 = vst.msk [vmem:[%s4 + $0xa8] sm:$0xff] %vm2114, %v4529
    %4578 = vst.msk [vmem:[%s4 + $0xb0] sm:$0xff] %vm2114, %v4530
    %4579 = vst.msk [vmem:[%s4 + $0xb8] sm:$0xff] %vm2114, %v4531
    %4580 = vst.msk [vmem:[%s4 + $0xc0] sm:$0xff] %vm2114, %v4532
    %4581 = vst.msk [vmem:[%s4 + $0xc8] sm:$0xff] %vm2114, %v4533
    %4582 = vst.msk [vmem:[%s4 + $0xd0] sm:$0xff] %vm2114, %v4534
    %4583 = vst.msk [vmem:[%s4 + $0xd8] sm:$0xff] %vm2114, %v4535
    %4584 = vst.msk [vmem:[%s4 + $0xe0] sm:$0xff] %vm2114, %v4536
    %4585 = vst.msk [vmem:[%s4 + $0xe8] sm:$0xff] %vm2114, %v4537
    %4586 = vst.msk [vmem:[%s4 + $0xf0] sm:$0xff] %vm2114, %v4538
    %4587 = vst.msk [vmem:[%s4 + $0xf8] sm:$0xff] %vm2114, %v4539
    %4588 = vst.msk [vmem:[%s4 + $0x100] sm:$0xff] %vm2114, %v4540
    %4589 = vst.msk [vmem:[%s4 + $0x108] sm:$0xff] %vm2114, %v4541
    %4590 = vst.msk [vmem:[%s4 + $0x110] sm:$0xff] %vm2114, %v4542
    %4591 = vst.msk [vmem:[%s4 + $0x118] sm:$0xff] %vm2114, %v4543
    %4592 = vst.msk [vmem:[%s4 + $0x120] sm:$0xff] %vm2114, %v4544
    %4593 = vst.msk [vmem:[%s4 + $0x128] sm:$0xff] %vm2114, %v4545
    %4594 = vst.msk [vmem:[%s4 + $0x130] sm:$0xff] %vm2114, %v4546
    %4595 = vst.msk [vmem:[%s4 + $0x138] sm:$0xff] %vm2114, %v4547
    %4596 = vst.msk [vmem:[%s4 + $0x140] sm:$0xff] %vm2114, %v4548
    %4597 = vst.msk [vmem:[%s4 + $0x148] sm:$0xff] %vm2114, %v4549
    %4598 = vst.msk [vmem:[%s4 + $0x150] sm:$0xff] %vm2114, %v4550
    %4599 = vst.msk [vmem:[%s4 + $0x158] sm:$0xff] %vm2114, %v4551
    %4600 = vst.msk [vmem:[%s4 + $0x160] sm:$0xff] %vm2114, %v4552
    %4601 = vst.msk [vmem:[%s4 + $0x168] sm:$0xff] %vm2114, %v4553
    %4602 = vst.msk [vmem:[%s4 + $0x170] sm:$0xff] %vm2114, %v4554
    %4603 = vst.msk [vmem:[%s4 + $0x178] sm:$0xff] %vm2114, %v4555
    // Predicated region
    $region22: #{conv2d_batchnorm.1} parent=1 // pred_check
      _
    $region23: #{conv2d_batchnorm.1} parent=1 // pred_check_branch
      %4605 = sbr.rel (0) target = $region25
    $region24: #{conv2d_batchnorm.1} parent=1 // pred_region
      _
    $region25: #{conv2d_batchnorm.1} parent=1 // pred_fallthru
      _
    // Predicated region
    $region26: #{conv2d_batchnorm.1} parent=1 // pred_check
      _
    $region27: #{conv2d_batchnorm.1} parent=1 // pred_check_branch
      %4607 = sbr.rel (0) target = $region29
    $region28: #{conv2d_batchnorm.1} parent=1 // pred_region
      _
    $region29: #{conv2d_batchnorm.1} parent=1 // pred_fallthru
      _
    %4608 = vsyncpa [#allocation3], 1

</llo_original>
